<compile_context>
chip_gen: v5e
topology: v5e:2x2
jax: 0.10.0
libtpu: 0.0.40
codegen_flags: <defaults>
</compile_context>

<pallas_src>
import jax
import jax.numpy as jnp
from jax.experimental import pallas as pl
from jax.experimental.pallas import tpu as pltpu


# ------------------------------- kernel helpers ------------------------------

def _zero_border(ref):
    """Zero the 1-pixel spatial border of a (B, H+2, W+2, C) padded scratch."""
    b, hp, wp, ch = ref.shape
    z_row = jnp.zeros((b, 1, wp, ch), jnp.float32)
    z_col = jnp.zeros((b, hp, 1, ch), jnp.float32)
    ref[:, 0:1, :, :] = z_row
    ref[:, hp - 1:hp, :, :] = z_row
    ref[:, :, 0:1, :] = z_col
    ref[:, :, wp - 1:wp, :] = z_col


def _merge_wc(x):
    """(B, H, W, C) -> (B, H, W*C) lane-dense merge via lane concatenation."""
    w = x.shape[2]
    return jnp.concatenate([x[:, :, j, :] for j in range(w)], axis=-1)


def _se_gate(xm, w1_ref, w2_ref, b1, b2):
    """SqueezeExcite FC stack on the VPU/XLU (no M=1 MXU dots).

    xm: (B, C) pooled features; w1: (C, R); w2: (R, C); b1: (1, R); b2: (1, C).
    """
    s = jnp.sum(xm[:, :, None] * w1_ref[...], axis=1) + b1        # (B, R)
    s = jnp.maximum(s, 0.0)
    g = jnp.sum(s[:, :, None] * w2_ref[...], axis=1) + b2         # (B, C)
    return jax.nn.sigmoid(g)


# --------------------------------- the kernel --------------------------------

def _fused_kernel(
    stem_in_ref,                       # (B, H2*W2, 27) bf16 pre-packed s2 patches
    stem_w_ref,                        # (27, 32)       bf16
    dw_w_ref,                          # (9, 128)       f32  [:, :32]=dw1, [:, 32:]=dw2
    bn_ref,                            # (12, 96)       f32  folded BN scale/shift (padded)
    se1_w1_ref, se1_w2_ref,            # (32, 8), (8, 32)    f32
    se2_w1_ref, se2_w2_ref,            # (96, 4), (4, 96)    f32
    se_b_ref,                          # (4, 96)        f32  packed SE biases (padded)
    pw1_w_ref, exp_w_ref, proj_w_ref,  # (32,16),(16,96),(96,24) bf16
    f0_ref, f1_ref, f2_ref,            # (B,8,256), (B,8,128), (B,1,384) f32
    xp1_ref, xp2_ref,                  # VMEM scratch (B,10,10,32), (B,10,10,96) f32
):
    f32, bf16 = jnp.float32, jnp.bfloat16
    B = stem_in_ref.shape[0]
    H2, W2 = xp1_ref.shape[1] - 2, xp1_ref.shape[2] - 2            # 8, 8
    H4, W4 = H2 // 2, W2 // 2                                      # 4, 4
    C0 = stem_w_ref.shape[1]                                       # 32
    C1 = pw1_w_ref.shape[1]                                        # 16
    C2 = exp_w_ref.shape[1]                                        # 96
    C3 = proj_w_ref.shape[1]                                       # 24
    M0 = B * H2 * W2

    # --- Stem: 3x3 s2 conv as ONE (B*64, 27) @ (27, 32) matmul + BN + ReLU ---
    h0 = jnp.dot(stem_in_ref[...].reshape(M0, 9 * 3), stem_w_ref[...],
                 preferred_element_type=f32)
    h0 = jnp.maximum(h0 * bn_ref[0:1, :C0] + bn_ref[1:2, :C0], 0.0)
    x1 = h0.reshape(B, H2, W2, C0)          # keep as a local value (feature 0)
    f0_ref[...] = _merge_wc(x1)             # single lane-dense slab store (B,8,256)

    # --- Block 1: DepthwiseSeparableConv 32->16 (dw3x3 s1, BN+ReLU, SE, pw+BN)
    _zero_border(xp1_ref)                   # interior fully overwritten each step
    xp1_ref[:, 1:H2 + 1, 1:W2 + 1, :] = x1
    acc1 = jnp.zeros((B, H2, W2, C0), f32)
    for k in range(9):                      # depthwise taps stay on the VPU
        kh, kw = k // 3, k % 3
        acc1 = acc1 + xp1_ref[:, kh:kh + H2, kw:kw + W2, :] * dw_w_ref[k:k + 1, 0:C0]
    y1 = jnp.maximum(acc1 * bn_ref[2:3, :C0] + bn_ref[3:4, :C0], 0.0)
    y1 = y1.reshape(B, H2 * W2, C0)
    g1 = _se_gate(jnp.mean(y1, axis=1), se1_w1_ref, se1_w2_ref,
                  se_b_ref[0:1, 0:8], se_b_ref[1:2, 0:C0])          # (B, 32)
    y1 = y1 * g1[:, None, :]
    # pointwise-linear 32 -> 16 + BN (no activation; 32 != 16 so no residual)
    y2 = jnp.dot(y1.reshape(M0, C0).astype(bf16), pw1_w_ref[...],
                 preferred_element_type=f32)
    y2 = y2 * bn_ref[4:5, :C1] + bn_ref[5:6, :C1]
    f1_ref[...] = _merge_wc(y2.reshape(B, H2, W2, C1))              # (B,8,128)

    # --- Block 2: MBConv 16 -> (x6) 96 -> 24, dw 3x3 s2, SE(rd=4), project ---
    z = jnp.dot(y2.astype(bf16), exp_w_ref[...], preferred_element_type=f32)
    z = jnp.maximum(z * bn_ref[6:7, :C2] + bn_ref[7:8, :C2], 0.0)   # (B*64, 96)
    _zero_border(xp2_ref)
    xp2_ref[:, 1:H2 + 1, 1:W2 + 1, :] = z.reshape(B, H2, W2, C2)
    acc2 = jnp.zeros((B, H2, W2, C2), f32)
    for k in range(9):
        kh, kw = k // 3, k % 3
        acc2 = acc2 + xp2_ref[:, kh:kh + H2, kw:kw + W2, :] * dw_w_ref[k:k + 1, C0:C0 + C2]
    # exact stride-2 subsample (even rows / even cols) via static extraction
    racc = jnp.stack([acc2[:, 2 * i] for i in range(H4)], axis=1)   # (B,4,8,96)
    d2 = jnp.stack([racc[:, :, 2 * j] for j in range(W4)], axis=2)  # (B,4,4,96)
    d2 = jnp.maximum(d2 * bn_ref[8:9, :C2] + bn_ref[9:10, :C2], 0.0)
    w4 = d2.reshape(B, H4 * W4, C2)
    g2 = _se_gate(jnp.mean(w4, axis=1), se2_w1_ref, se2_w2_ref,
                  se_b_ref[2:3, 0:4], se_b_ref[3:4, 0:C2])          # (B, 96)
    w4 = w4 * g2[:, None, :]
    # project 96 -> 24 + BN (no activation; stride-2 block so no residual)
    p = jnp.dot(w4.reshape(B * H4 * W4, C2).astype(bf16), proj_w_ref[...],
                preferred_element_type=f32)
    p = p * bn_ref[10:11, :C3] + bn_ref[11:12, :C3]
    p4 = _merge_wc(p.reshape(B, H4, W4, C3))                        # (B,4,96)
    f2_ref[...] = _merge_wc(p4[:, None, :, :])                      # (B,1,384)


# ------------------------------- host wrappers --------------------------------

def _pack_stem_patches(x_nchw, h2, w2):
    """NCHW input -> (N, h2*w2, 27) stride-2 3x3 patch rows (tap-major, then cin)."""
    n, c, h, w = x_nchw.shape
    xp = jnp.pad(x_nchw, ((0, 0), (0, 0), (1, 1), (1, 1)))
    taps = []
    for kh in range(3):
        for kw in range(3):
            taps.append(xp[:, :, kh:kh + h:2, kw:kw + w:2])          # (n, c, h2, w2)
    t = jnp.stack(taps, axis=-1)                                     # (n, c, h2, w2, 9)
    t = jnp.transpose(t, (0, 2, 3, 4, 1))                            # (n, h2, w2, 9, c)
    return t.reshape(n, h2 * w2, 9 * c)


def _bspec_full(shape):
    nd = len(shape)
    return pl.BlockSpec(shape, lambda b, _nd=nd: (0,) * _nd)


@jax.jit
def efficientnet_features_forward(x_nchw, params):
    x = x_nchw.astype(jnp.float32)
    n, c_in, h, w = x.shape
    h2, w2, h4, w4 = h // 2, w // 2, h // 4, w // 4
    c0 = params["stem_w"].shape[-1]                                  # 32
    c1 = params["pw1_w"].shape[-1]                                   # 16
    c2 = params["exp_w"].shape[-1]                                   # 96
    c3 = params["proj_w"].shape[-1]                                  # 24

    # Pre-packed stride-2 stem patches (layout plumbing only), bf16 dot LHS.
    stem_in = _pack_stem_patches(x, h2, w2).astype(jnp.bfloat16)     # (n, 64, 27)

    # Consolidate small parameters into a few lane-friendly slabs.
    def pad_c(v):
        return jnp.pad(v, ((0, 0), (0, c2 - v.shape[-1])))
    bn_all = jnp.concatenate(
        [pad_c(params[k]) for k in
         ("stem_bn", "dw1_bn", "pw1_bn", "exp_bn", "dw2_bn", "proj_bn")],
        axis=0)                                                      # (12, 96)
    dw_w = jnp.concatenate([params["dw1_w"], params["dw2_w"]], axis=1)   # (9, 128)
    se_b = jnp.concatenate(
        [pad_c(params[k]) for k in ("se1_b1", "se1_b2", "se2_b1", "se2_b2")],
        axis=0)                                                      # (4, 96)
    stem_w = params["stem_w"].reshape(9 * c_in, c0).astype(jnp.bfloat16)
    pw1_w = params["pw1_w"].astype(jnp.bfloat16)
    exp_w = params["exp_w"].astype(jnp.bfloat16)
    proj_w = params["proj_w"].astype(jnp.bfloat16)

    # Batch tiling: flatten B_TILE samples into the GEMM M dim, but keep >= 2
    # grid steps so v7x megacore can still split the batch across TensorCores.
    b_tile = 2 if (n % 2 == 0 and n >= 4) else 1

    inputs = [stem_in, stem_w, dw_w, bn_all,
              params["se1_w1"], params["se1_w2"],
              params["se2_w1"], params["se2_w2"], se_b,
              pw1_w, exp_w, proj_w]
    in_specs = [pl.BlockSpec((b_tile, h2 * w2, 9 * c_in), lambda b: (b, 0, 0))]
    in_specs += [_bspec_full(a.shape) for a in inputs[1:]]

    out_shape = (
        jax.ShapeDtypeStruct((n, h2, w2 * c0), jnp.float32),
        jax.ShapeDtypeStruct((n, h2, w2 * c1), jnp.float32),
        jax.ShapeDtypeStruct((n, 1, h4 * w4 * c3), jnp.float32),
    )
    out_specs = (
        pl.BlockSpec((b_tile, h2, w2 * c0), lambda b: (b, 0, 0)),
        pl.BlockSpec((b_tile, h2, w2 * c1), lambda b: (b, 0, 0)),
        pl.BlockSpec((b_tile, 1, h4 * w4 * c3), lambda b: (b, 0, 0)),
    )
    scratch_shapes = [
        pltpu.VMEM((b_tile, h2 + 2, w2 + 2, c0), jnp.float32),   # padded dw1 input
        pltpu.VMEM((b_tile, h2 + 2, w2 + 2, c2), jnp.float32),   # padded dw2 input
    ]

    f0, f1, f2 = pl.pallas_call(
        _fused_kernel,
        out_shape=out_shape,
        grid=(n // b_tile,),
        in_specs=in_specs,
        out_specs=out_specs,
        scratch_shapes=scratch_shapes,
        compiler_params=pltpu.CompilerParams(dimension_semantics=("parallel",)),
    )(*inputs)

    # PyTorch feature convention is NCHW; un-flatten is pure layout plumbing.
    f0 = f0.reshape(n, h2, w2, c0).transpose(0, 3, 1, 2)
    f1 = f1.reshape(n, h2, w2, c1).transpose(0, 3, 1, 2)
    f2 = f2.reshape(n, h4, w4, c3).transpose(0, 3, 1, 2)
    return [f0, f1, f2]


# --------------------------- parameter construction ---------------------------

def _fold_bn(key, c):
    kg, kb, km, kv = jax.random.split(key, 4)
    gamma = 1.0 + 0.1 * jax.random.normal(kg, (c,), jnp.float32)
    beta = 0.1 * jax.random.normal(kb, (c,), jnp.float32)
    mean = 0.1 * jax.random.normal(km, (c,), jnp.float32)
    var = 1.0 + 0.1 * jnp.abs(jax.random.normal(kv, (c,), jnp.float32))
    scale = gamma / jnp.sqrt(var + 1e-5)
    shift = beta - mean * scale
    return jnp.stack([scale, shift], axis=0)              # (2, c) scale / shift


def _conv_w(key, shape, fan_in):
    return jax.random.normal(key, shape, jnp.float32) * (2.0 / fan_in) ** 0.5


def make_params(key):
    ks = jax.random.split(key, 20)
    p = {}
    # stem: 3x3 s2, 3 -> 32 ; stored (kh, kw, cin, cout)
    p["stem_w"] = _conv_w(ks[0], (3, 3, 3, 32), 27)
    p["stem_bn"] = _fold_bn(ks[1], 32)
    # block 1: DepthwiseSeparableConv 32 -> 16, s1, SE rd=round(32*0.25)=8
    p["dw1_w"] = _conv_w(ks[2], (3, 3, 32), 9).reshape(9, 32)
    p["dw1_bn"] = _fold_bn(ks[3], 32)
    p["se1_w1"] = _conv_w(ks[4], (32, 8), 32)
    p["se1_b1"] = 0.01 * jax.random.normal(ks[5], (1, 8), jnp.float32)
    p["se1_w2"] = _conv_w(ks[6], (8, 32), 8)
    p["se1_b2"] = 0.01 * jax.random.normal(ks[7], (1, 32), jnp.float32)
    p["pw1_w"] = _conv_w(ks[8], (32, 16), 32)
    p["pw1_bn"] = _fold_bn(ks[9], 16)
    # block 2: MBConv 16 -> 24, expand 6 (mid 96), dw s2, SE rd=round(16*0.25)=4
    p["exp_w"] = _conv_w(ks[10], (16, 96), 16)
    p["exp_bn"] = _fold_bn(ks[11], 96)
    p["dw2_w"] = _conv_w(ks[12], (3, 3, 96), 9).reshape(9, 96)
    p["dw2_bn"] = _fold_bn(ks[13], 96)
    p["se2_w1"] = _conv_w(ks[14], (96, 4), 96)
    p["se2_b1"] = 0.01 * jax.random.normal(ks[15], (1, 4), jnp.float32)
    p["se2_w2"] = _conv_w(ks[16], (4, 96), 4)
    p["se2_b2"] = 0.01 * jax.random.normal(ks[17], (1, 96), jnp.float32)
    p["proj_w"] = _conv_w(ks[18], (96, 24), 96)
    p["proj_bn"] = _fold_bn(ks[19], 24)
    return p


# -------------------------------------- main ----------------------------------

if __name__ == "__main__":
    key = jax.random.PRNGKey(0)
    k_x, k_p = jax.random.split(key)
    x = jax.random.normal(k_x, (2, 3, 16, 16), jnp.float32)       # NCHW input
    params = make_params(k_p)

    feats = efficientnet_features_forward(x, params)
    feats = [jax.block_until_ready(f) for f in feats]

    expected = [(2, 32, 8, 8), (2, 16, 8, 8), (2, 24, 4, 4)]
    assert [tuple(f.shape) for f in feats] == expected
    assert all(bool(jnp.all(jnp.isfinite(f))) for f in feats)
    print("KERNEL_OK")
</pallas_src>

<mosaic_0001>
module attributes {stable_mosaic.version = 11 : i64} {
  func.func @_fused_kernel(%arg0: i32, %arg1: memref<1x64x27xbf16, #tpu.memory_space<vmem>>, %arg2: memref<27x32xbf16, #tpu.memory_space<vmem>>, %arg3: memref<9x128xf32, #tpu.memory_space<vmem>>, %arg4: memref<12x96xf32, #tpu.memory_space<vmem>>, %arg5: memref<32x8xf32, #tpu.memory_space<vmem>>, %arg6: memref<8x32xf32, #tpu.memory_space<vmem>>, %arg7: memref<96x4xf32, #tpu.memory_space<vmem>>, %arg8: memref<4x96xf32, #tpu.memory_space<vmem>>, %arg9: memref<4x96xf32, #tpu.memory_space<vmem>>, %arg10: memref<32x16xbf16, #tpu.memory_space<vmem>>, %arg11: memref<16x96xbf16, #tpu.memory_space<vmem>>, %arg12: memref<96x24xbf16, #tpu.memory_space<vmem>>, %arg13: memref<1x8x256xf32, #tpu.memory_space<vmem>>, %arg14: memref<1x8x128xf32, #tpu.memory_space<vmem>>, %arg15: memref<1x1x384xf32, #tpu.memory_space<vmem>>, %arg16: memref<1x10x10x32xf32, #tpu.memory_space<vmem>>, %arg17: memref<1x10x10x96xf32, #tpu.memory_space<vmem>>) attributes {dimension_semantics = [#tpu.dimension_semantics<parallel>], iteration_bounds = array<i64: 2>, scalar_prefetch = 0 : i64, scratch_operands = 2 : i64, tpu.core_type = #tpu.core_type<tc>, window_params = [{transform_indices = @transform_0, window_bounds = array<i64: 1, 64, 27>}, {pipeline_mode = #tpu.pipeline_mode<synchronous>, transform_indices = @transform_1, window_bounds = array<i64: 27, 32>}, {pipeline_mode = #tpu.pipeline_mode<synchronous>, transform_indices = @transform_2, window_bounds = array<i64: 9, 128>}, {pipeline_mode = #tpu.pipeline_mode<synchronous>, transform_indices = @transform_3, window_bounds = array<i64: 12, 96>}, {pipeline_mode = #tpu.pipeline_mode<synchronous>, transform_indices = @transform_4, window_bounds = array<i64: 32, 8>}, {pipeline_mode = #tpu.pipeline_mode<synchronous>, transform_indices = @transform_5, window_bounds = array<i64: 8, 32>}, {pipeline_mode = #tpu.pipeline_mode<synchronous>, transform_indices = @transform_6, window_bounds = array<i64: 96, 4>}, {pipeline_mode = #tpu.pipeline_mode<synchronous>, transform_indices = @transform_7, window_bounds = array<i64: 4, 96>}, {pipeline_mode = #tpu.pipeline_mode<synchronous>, transform_indices = @transform_8, window_bounds = array<i64: 4, 96>}, {pipeline_mode = #tpu.pipeline_mode<synchronous>, transform_indices = @transform_9, window_bounds = array<i64: 32, 16>}, {pipeline_mode = #tpu.pipeline_mode<synchronous>, transform_indices = @transform_10, window_bounds = array<i64: 16, 96>}, {pipeline_mode = #tpu.pipeline_mode<synchronous>, transform_indices = @transform_11, window_bounds = array<i64: 96, 24>}, {transform_indices = @transform_12, window_bounds = array<i64: 1, 8, 256>}, {transform_indices = @transform_13, window_bounds = array<i64: 1, 8, 128>}, {transform_indices = @transform_14, window_bounds = array<i64: 1, 1, 384>}]} {
    %c0 = arith.constant 0 : index
    %c0_0 = arith.constant 0 : index
    %c0_1 = arith.constant 0 : index
    %0 = vector.load %arg1[%c0, %c0_0, %c0_1] : memref<1x64x27xbf16, #tpu.memory_space<vmem>>, vector<1x64x27xbf16>
    %1 = vector.shape_cast %0 : vector<1x64x27xbf16> to vector<64x27xbf16>
    %c0_2 = arith.constant 0 : index
    %c0_3 = arith.constant 0 : index
    %2 = vector.load %arg2[%c0_2, %c0_3] : memref<27x32xbf16, #tpu.memory_space<vmem>>, vector<27x32xbf16>
    %cst = arith.constant dense<0.000000e+00> : vector<64x32xf32>
    %3 = tpu.matmul %1, %2, %cst {dimension_numbers = #tpu.dot_dimension_numbers<[1], [0], [0], [1], [0, 0, 1, 1], [], []>} : vector<64x27xbf16>, vector<27x32xbf16>, vector<64x32xf32> -> vector<64x32xf32>
    %c0_4 = arith.constant 0 : index
    %c0_5 = arith.constant 0 : index
    %4 = vector.load %arg4[%c0_4, %c0_5] : memref<12x96xf32, #tpu.memory_space<vmem>>, vector<1x32xf32>
    %5 = vector.broadcast %4 : vector<1x32xf32> to vector<64x32xf32>
    %6 = arith.mulf %3, %5 : vector<64x32xf32>
    %c1 = arith.constant 1 : index
    %c0_6 = arith.constant 0 : index
    %7 = vector.load %arg4[%c1, %c0_6] : memref<12x96xf32, #tpu.memory_space<vmem>>, vector<1x32xf32>
    %8 = vector.broadcast %7 : vector<1x32xf32> to vector<64x32xf32>
    %9 = arith.addf %6, %8 : vector<64x32xf32>
    %cst_7 = arith.constant 0.000000e+00 : f32
    %10 = vector.broadcast %cst_7 : f32 to vector<64x32xf32>
    %11 = arith.maximumf %9, %10 : vector<64x32xf32>
    %12 = vector.shape_cast %11 : vector<64x32xf32> to vector<1x8x8x32xf32>
    %13 = vector.extract_strided_slice %12 {offsets = [0, 0, 0, 0], sizes = [1, 8, 1, 32], strides = [1, 1, 1, 1]} : vector<1x8x8x32xf32> to vector<1x8x1x32xf32>
    %14 = vector.shape_cast %13 : vector<1x8x1x32xf32> to vector<1x8x32xf32>
    %15 = vector.extract_strided_slice %12 {offsets = [0, 0, 1, 0], sizes = [1, 8, 1, 32], strides = [1, 1, 1, 1]} : vector<1x8x8x32xf32> to vector<1x8x1x32xf32>
    %16 = vector.shape_cast %15 : vector<1x8x1x32xf32> to vector<1x8x32xf32>
    %17 = vector.extract_strided_slice %12 {offsets = [0, 0, 2, 0], sizes = [1, 8, 1, 32], strides = [1, 1, 1, 1]} : vector<1x8x8x32xf32> to vector<1x8x1x32xf32>
    %18 = vector.shape_cast %17 : vector<1x8x1x32xf32> to vector<1x8x32xf32>
    %19 = vector.extract_strided_slice %12 {offsets = [0, 0, 3, 0], sizes = [1, 8, 1, 32], strides = [1, 1, 1, 1]} : vector<1x8x8x32xf32> to vector<1x8x1x32xf32>
    %20 = vector.shape_cast %19 : vector<1x8x1x32xf32> to vector<1x8x32xf32>
    %21 = vector.extract_strided_slice %12 {offsets = [0, 0, 4, 0], sizes = [1, 8, 1, 32], strides = [1, 1, 1, 1]} : vector<1x8x8x32xf32> to vector<1x8x1x32xf32>
    %22 = vector.shape_cast %21 : vector<1x8x1x32xf32> to vector<1x8x32xf32>
    %23 = vector.extract_strided_slice %12 {offsets = [0, 0, 5, 0], sizes = [1, 8, 1, 32], strides = [1, 1, 1, 1]} : vector<1x8x8x32xf32> to vector<1x8x1x32xf32>
    %24 = vector.shape_cast %23 : vector<1x8x1x32xf32> to vector<1x8x32xf32>
    %25 = vector.extract_strided_slice %12 {offsets = [0, 0, 6, 0], sizes = [1, 8, 1, 32], strides = [1, 1, 1, 1]} : vector<1x8x8x32xf32> to vector<1x8x1x32xf32>
    %26 = vector.shape_cast %25 : vector<1x8x1x32xf32> to vector<1x8x32xf32>
    %27 = vector.extract_strided_slice %12 {offsets = [0, 0, 7, 0], sizes = [1, 8, 1, 32], strides = [1, 1, 1, 1]} : vector<1x8x8x32xf32> to vector<1x8x1x32xf32>
    %28 = vector.shape_cast %27 : vector<1x8x1x32xf32> to vector<1x8x32xf32>
    %29 = tpu.concatenate %14, %16, %18, %20, %22, %24, %26, %28 in 2 : vector<1x8x32xf32>, vector<1x8x32xf32>, vector<1x8x32xf32>, vector<1x8x32xf32>, vector<1x8x32xf32>, vector<1x8x32xf32>, vector<1x8x32xf32>, vector<1x8x32xf32> -> vector<1x8x256xf32>
    %c0_8 = arith.constant 0 : index
    %c0_9 = arith.constant 0 : index
    %c0_10 = arith.constant 0 : index
    %30 = vector.load %arg13[%c0_8, %c0_9, %c0_10] : memref<1x8x256xf32, #tpu.memory_space<vmem>>, vector<1x8x256xf32>
    tpu.vector_store %arg13[%c0_8, %c0_9, %c0_10], %29 {strides = array<i32>} : memref<1x8x256xf32, #tpu.memory_space<vmem>>, vector<1x8x256xf32>,
    %cst_11 = arith.constant 0.000000e+00 : f32
    %31 = vector.broadcast %cst_11 : f32 to vector<1x1x10x32xf32>
    %cst_12 = arith.constant 0.000000e+00 : f32
    %32 = vector.broadcast %cst_12 : f32 to vector<1x10x1x32xf32>
    %c0_13 = arith.constant 0 : index
    %c0_14 = arith.constant 0 : index
    %c0_15 = arith.constant 0 : index
    %c0_16 = arith.constant 0 : index
    %33 = vector.load %arg16[%c0_13, %c0_14, %c0_15, %c0_16] : memref<1x10x10x32xf32, #tpu.memory_space<vmem>>, vector<1x1x10x32xf32>
    tpu.vector_store %arg16[%c0_13, %c0_14, %c0_15, %c0_16], %31 {strides = array<i32>} : memref<1x10x10x32xf32, #tpu.memory_space<vmem>>, vector<1x1x10x32xf32>,
    %c0_17 = arith.constant 0 : index
    %c9 = arith.constant 9 : index
    %c0_18 = arith.constant 0 : index
    %c0_19 = arith.constant 0 : index
    %34 = vector.load %arg16[%c0_17, %c9, %c0_18, %c0_19] : memref<1x10x10x32xf32, #tpu.memory_space<vmem>>, vector<1x1x10x32xf32>
    tpu.vector_store %arg16[%c0_17, %c9, %c0_18, %c0_19], %31 {strides = array<i32>} : memref<1x10x10x32xf32, #tpu.memory_space<vmem>>, vector<1x1x10x32xf32>,
    %c0_20 = arith.constant 0 : index
    %c0_21 = arith.constant 0 : index
    %c0_22 = arith.constant 0 : index
    %c0_23 = arith.constant 0 : index
    %35 = vector.load %arg16[%c0_20, %c0_21, %c0_22, %c0_23] : memref<1x10x10x32xf32, #tpu.memory_space<vmem>>, vector<1x10x1x32xf32>
    tpu.vector_store %arg16[%c0_20, %c0_21, %c0_22, %c0_23], %32 {strides = array<i32>} : memref<1x10x10x32xf32, #tpu.memory_space<vmem>>, vector<1x10x1x32xf32>,
    %c0_24 = arith.constant 0 : index
    %c0_25 = arith.constant 0 : index
    %c9_26 = arith.constant 9 : index
    %c0_27 = arith.constant 0 : index
    %36 = vector.load %arg16[%c0_24, %c0_25, %c9_26, %c0_27] : memref<1x10x10x32xf32, #tpu.memory_space<vmem>>, vector<1x10x1x32xf32>
    tpu.vector_store %arg16[%c0_24, %c0_25, %c9_26, %c0_27], %32 {strides = array<i32>} : memref<1x10x10x32xf32, #tpu.memory_space<vmem>>, vector<1x10x1x32xf32>,
    %c0_28 = arith.constant 0 : index
    %c1_29 = arith.constant 1 : index
    %c1_30 = arith.constant 1 : index
    %c0_31 = arith.constant 0 : index
    %37 = vector.load %arg16[%c0_28, %c1_29, %c1_30, %c0_31] : memref<1x10x10x32xf32, #tpu.memory_space<vmem>>, vector<1x8x8x32xf32>
    tpu.vector_store %arg16[%c0_28, %c1_29, %c1_30, %c0_31], %12 {strides = array<i32>} : memref<1x10x10x32xf32, #tpu.memory_space<vmem>>, vector<1x8x8x32xf32>,
    %cst_32 = arith.constant 0.000000e+00 : f32
    %38 = vector.broadcast %cst_32 : f32 to vector<1x8x8x32xf32>
    %c0_33 = arith.constant 0 : index
    %c0_34 = arith.constant 0 : index
    %c0_35 = arith.constant 0 : index
    %c0_36 = arith.constant 0 : index
    %39 = vector.load %arg16[%c0_33, %c0_34, %c0_35, %c0_36] : memref<1x10x10x32xf32, #tpu.memory_space<vmem>>, vector<1x8x8x32xf32>
    %c0_37 = arith.constant 0 : index
    %c0_38 = arith.constant 0 : index
    %40 = vector.load %arg3[%c0_37, %c0_38] : memref<9x128xf32, #tpu.memory_space<vmem>>, vector<1x32xf32>
    %41 = vector.shape_cast %40 : vector<1x32xf32> to vector<1x1x1x32xf32>
    %42 = vector.broadcast %41 : vector<1x1x1x32xf32> to vector<1x8x8x32xf32>
    %43 = arith.mulf %39, %42 : vector<1x8x8x32xf32>
    %44 = arith.addf %38, %43 : vector<1x8x8x32xf32>
    %c0_39 = arith.constant 0 : index
    %c0_40 = arith.constant 0 : index
    %c1_41 = arith.constant 1 : index
    %c0_42 = arith.constant 0 : index
    %45 = vector.load %arg16[%c0_39, %c0_40, %c1_41, %c0_42] : memref<1x10x10x32xf32, #tpu.memory_space<vmem>>, vector<1x8x8x32xf32>
    %c1_43 = arith.constant 1 : index
    %c0_44 = arith.constant 0 : index
    %46 = vector.load %arg3[%c1_43, %c0_44] : memref<9x128xf32, #tpu.memory_space<vmem>>, vector<1x32xf32>
    %47 = vector.shape_cast %46 : vector<1x32xf32> to vector<1x1x1x32xf32>
    %48 = vector.broadcast %47 : vector<1x1x1x32xf32> to vector<1x8x8x32xf32>
    %49 = arith.mulf %45, %48 : vector<1x8x8x32xf32>
    %50 = arith.addf %44, %49 : vector<1x8x8x32xf32>
    %c0_45 = arith.constant 0 : index
    %c0_46 = arith.constant 0 : index
    %c2 = arith.constant 2 : index
    %c0_47 = arith.constant 0 : index
    %51 = vector.load %arg16[%c0_45, %c0_46, %c2, %c0_47] : memref<1x10x10x32xf32, #tpu.memory_space<vmem>>, vector<1x8x8x32xf32>
    %c2_48 = arith.constant 2 : index
    %c0_49 = arith.constant 0 : index
    %52 = vector.load %arg3[%c2_48, %c0_49] : memref<9x128xf32, #tpu.memory_space<vmem>>, vector<1x32xf32>
    %53 = vector.shape_cast %52 : vector<1x32xf32> to vector<1x1x1x32xf32>
    %54 = vector.broadcast %53 : vector<1x1x1x32xf32> to vector<1x8x8x32xf32>
    %55 = arith.mulf %51, %54 : vector<1x8x8x32xf32>
    %56 = arith.addf %50, %55 : vector<1x8x8x32xf32>
    %c0_50 = arith.constant 0 : index
    %c1_51 = arith.constant 1 : index
    %c0_52 = arith.constant 0 : index
    %c0_53 = arith.constant 0 : index
    %57 = vector.load %arg16[%c0_50, %c1_51, %c0_52, %c0_53] : memref<1x10x10x32xf32, #tpu.memory_space<vmem>>, vector<1x8x8x32xf32>
    %c3 = arith.constant 3 : index
    %c0_54 = arith.constant 0 : index
    %58 = vector.load %arg3[%c3, %c0_54] : memref<9x128xf32, #tpu.memory_space<vmem>>, vector<1x32xf32>
    %59 = vector.shape_cast %58 : vector<1x32xf32> to vector<1x1x1x32xf32>
    %60 = vector.broadcast %59 : vector<1x1x1x32xf32> to vector<1x8x8x32xf32>
    %61 = arith.mulf %57, %60 : vector<1x8x8x32xf32>
    %62 = arith.addf %56, %61 : vector<1x8x8x32xf32>
    %c0_55 = arith.constant 0 : index
    %c1_56 = arith.constant 1 : index
    %c1_57 = arith.constant 1 : index
    %c0_58 = arith.constant 0 : index
    %63 = vector.load %arg16[%c0_55, %c1_56, %c1_57, %c0_58] : memref<1x10x10x32xf32, #tpu.memory_space<vmem>>, vector<1x8x8x32xf32>
    %c4 = arith.constant 4 : index
    %c0_59 = arith.constant 0 : index
    %64 = vector.load %arg3[%c4, %c0_59] : memref<9x128xf32, #tpu.memory_space<vmem>>, vector<1x32xf32>
    %65 = vector.shape_cast %64 : vector<1x32xf32> to vector<1x1x1x32xf32>
    %66 = vector.broadcast %65 : vector<1x1x1x32xf32> to vector<1x8x8x32xf32>
    %67 = arith.mulf %63, %66 : vector<1x8x8x32xf32>
    %68 = arith.addf %62, %67 : vector<1x8x8x32xf32>
    %c0_60 = arith.constant 0 : index
    %c1_61 = arith.constant 1 : index
    %c2_62 = arith.constant 2 : index
    %c0_63 = arith.constant 0 : index
    %69 = vector.load %arg16[%c0_60, %c1_61, %c2_62, %c0_63] : memref<1x10x10x32xf32, #tpu.memory_space<vmem>>, vector<1x8x8x32xf32>
    %c5 = arith.constant 5 : index
    %c0_64 = arith.constant 0 : index
    %70 = vector.load %arg3[%c5, %c0_64] : memref<9x128xf32, #tpu.memory_space<vmem>>, vector<1x32xf32>
    %71 = vector.shape_cast %70 : vector<1x32xf32> to vector<1x1x1x32xf32>
    %72 = vector.broadcast %71 : vector<1x1x1x32xf32> to vector<1x8x8x32xf32>
    %73 = arith.mulf %69, %72 : vector<1x8x8x32xf32>
    %74 = arith.addf %68, %73 : vector<1x8x8x32xf32>
    %c0_65 = arith.constant 0 : index
    %c2_66 = arith.constant 2 : index
    %c0_67 = arith.constant 0 : index
    %c0_68 = arith.constant 0 : index
    %75 = vector.load %arg16[%c0_65, %c2_66, %c0_67, %c0_68] : memref<1x10x10x32xf32, #tpu.memory_space<vmem>>, vector<1x8x8x32xf32>
    %c6 = arith.constant 6 : index
    %c0_69 = arith.constant 0 : index
    %76 = vector.load %arg3[%c6, %c0_69] : memref<9x128xf32, #tpu.memory_space<vmem>>, vector<1x32xf32>
    %77 = vector.shape_cast %76 : vector<1x32xf32> to vector<1x1x1x32xf32>
    %78 = vector.broadcast %77 : vector<1x1x1x32xf32> to vector<1x8x8x32xf32>
    %79 = arith.mulf %75, %78 : vector<1x8x8x32xf32>
    %80 = arith.addf %74, %79 : vector<1x8x8x32xf32>
    %c0_70 = arith.constant 0 : index
    %c2_71 = arith.constant 2 : index
    %c1_72 = arith.constant 1 : index
    %c0_73 = arith.constant 0 : index
    %81 = vector.load %arg16[%c0_70, %c2_71, %c1_72, %c0_73] : memref<1x10x10x32xf32, #tpu.memory_space<vmem>>, vector<1x8x8x32xf32>
    %c7 = arith.constant 7 : index
    %c0_74 = arith.constant 0 : index
    %82 = vector.load %arg3[%c7, %c0_74] : memref<9x128xf32, #tpu.memory_space<vmem>>, vector<1x32xf32>
    %83 = vector.shape_cast %82 : vector<1x32xf32> to vector<1x1x1x32xf32>
    %84 = vector.broadcast %83 : vector<1x1x1x32xf32> to vector<1x8x8x32xf32>
    %85 = arith.mulf %81, %84 : vector<1x8x8x32xf32>
    %86 = arith.addf %80, %85 : vector<1x8x8x32xf32>
    %c0_75 = arith.constant 0 : index
    %c2_76 = arith.constant 2 : index
    %c2_77 = arith.constant 2 : index
    %c0_78 = arith.constant 0 : index
    %87 = vector.load %arg16[%c0_75, %c2_76, %c2_77, %c0_78] : memref<1x10x10x32xf32, #tpu.memory_space<vmem>>, vector<1x8x8x32xf32>
    %c8 = arith.constant 8 : index
    %c0_79 = arith.constant 0 : index
    %88 = vector.load %arg3[%c8, %c0_79] : memref<9x128xf32, #tpu.memory_space<vmem>>, vector<1x32xf32>
    %89 = vector.shape_cast %88 : vector<1x32xf32> to vector<1x1x1x32xf32>
    %90 = vector.broadcast %89 : vector<1x1x1x32xf32> to vector<1x8x8x32xf32>
    %91 = arith.mulf %87, %90 : vector<1x8x8x32xf32>
    %92 = arith.addf %86, %91 : vector<1x8x8x32xf32>
    %c2_80 = arith.constant 2 : index
    %c0_81 = arith.constant 0 : index
    %93 = vector.load %arg4[%c2_80, %c0_81] : memref<12x96xf32, #tpu.memory_space<vmem>>, vector<1x32xf32>
    %94 = vector.shape_cast %93 : vector<1x32xf32> to vector<1x1x1x32xf32>
    %95 = vector.broadcast %94 : vector<1x1x1x32xf32> to vector<1x8x8x32xf32>
    %96 = arith.mulf %92, %95 : vector<1x8x8x32xf32>
    %c3_82 = arith.constant 3 : index
    %c0_83 = arith.constant 0 : index
    %97 = vector.load %arg4[%c3_82, %c0_83] : memref<12x96xf32, #tpu.memory_space<vmem>>, vector<1x32xf32>
    %98 = vector.shape_cast %97 : vector<1x32xf32> to vector<1x1x1x32xf32>
    %99 = vector.broadcast %98 : vector<1x1x1x32xf32> to vector<1x8x8x32xf32>
    %100 = arith.addf %96, %99 : vector<1x8x8x32xf32>
    %cst_84 = arith.constant 0.000000e+00 : f32
    %101 = vector.broadcast %cst_84 : f32 to vector<1x8x8x32xf32>
    %102 = arith.maximumf %100, %101 : vector<1x8x8x32xf32>
    %103 = vector.shape_cast %102 : vector<1x8x8x32xf32> to vector<1x64x32xf32>
    %cst_85 = arith.constant dense<0.000000e+00> : vector<1x32xf32>
    %104 = vector.multi_reduction <add>, %103, %cst_85 [1] : vector<1x64x32xf32> to vector<1x32xf32>
    %cst_86 = arith.constant 6.400000e+01 : f32
    %105 = vector.broadcast %cst_86 : f32 to vector<1x32xf32>
    %106 = arith.divf %104, %105 : vector<1x32xf32>
    %c0_87 = arith.constant 0 : index
    %c0_88 = arith.constant 0 : index
    %107 = vector.load %arg9[%c0_87, %c0_88] : memref<4x96xf32, #tpu.memory_space<vmem>>, vector<1x8xf32>
    %c1_89 = arith.constant 1 : index
    %c0_90 = arith.constant 0 : index
    %108 = vector.load %arg9[%c1_89, %c0_90] : memref<4x96xf32, #tpu.memory_space<vmem>>, vector<1x32xf32>
    %109 = vector.shape_cast %106 : vector<1x32xf32> to vector<1x32x1xf32>
    %c0_91 = arith.constant 0 : index
    %c0_92 = arith.constant 0 : index
    %110 = vector.load %arg5[%c0_91, %c0_92] : memref<32x8xf32, #tpu.memory_space<vmem>>, vector<32x8xf32>
    %111 = vector.shape_cast %110 : vector<32x8xf32> to vector<1x32x8xf32>
    %112 = vector.broadcast %109 : vector<1x32x1xf32> to vector<1x32x8xf32>
    %113 = arith.mulf %112, %111 : vector<1x32x8xf32>
    %cst_93 = arith.constant dense<0.000000e+00> : vector<1x8xf32>
    %114 = vector.multi_reduction <add>, %113, %cst_93 [1] : vector<1x32x8xf32> to vector<1x8xf32>
    %115 = arith.addf %114, %107 : vector<1x8xf32>
    %cst_94 = arith.constant 0.000000e+00 : f32
    %116 = vector.broadcast %cst_94 : f32 to vector<1x8xf32>
    %117 = arith.maximumf %115, %116 : vector<1x8xf32>
    %118 = vector.shape_cast %117 : vector<1x8xf32> to vector<1x8x1xf32>
    %c0_95 = arith.constant 0 : index
    %c0_96 = arith.constant 0 : index
    %119 = vector.load %arg6[%c0_95, %c0_96] : memref<8x32xf32, #tpu.memory_space<vmem>>, vector<8x32xf32>
    %120 = vector.shape_cast %119 : vector<8x32xf32> to vector<1x8x32xf32>
    %121 = vector.broadcast %118 : vector<1x8x1xf32> to vector<1x8x32xf32>
    %122 = arith.mulf %121, %120 : vector<1x8x32xf32>
    %cst_97 = arith.constant dense<0.000000e+00> : vector<1x32xf32>
    %123 = vector.multi_reduction <add>, %122, %cst_97 [1] : vector<1x8x32xf32> to vector<1x32xf32>
    %124 = arith.addf %123, %108 : vector<1x32xf32>
    %125 = arith.negf %124 : vector<1x32xf32>
    %126 = math.exp %125 : vector<1x32xf32>
    %cst_98 = arith.constant 1.000000e+00 : f32
    %127 = vector.broadcast %cst_98 : f32 to vector<1x32xf32>
    %128 = arith.addf %127, %126 : vector<1x32xf32>
    %129 = arith.divf %127, %128 : vector<1x32xf32>
    %130 = vector.shape_cast %129 : vector<1x32xf32> to vector<1x1x32xf32>
    %131 = vector.broadcast %130 : vector<1x1x32xf32> to vector<1x64x32xf32>
    %132 = arith.mulf %103, %131 : vector<1x64x32xf32>
    %133 = vector.shape_cast %132 : vector<1x64x32xf32> to vector<64x32xf32>
    %134 = arith.truncf %133 : vector<64x32xf32> to vector<64x32xbf16>
    %c0_99 = arith.constant 0 : index
    %c0_100 = arith.constant 0 : index
    %135 = vector.load %arg10[%c0_99, %c0_100] : memref<32x16xbf16, #tpu.memory_space<vmem>>, vector<32x16xbf16>
    %cst_101 = arith.constant dense<0.000000e+00> : vector<64x16xf32>
    %136 = tpu.matmul %134, %135, %cst_101 {dimension_numbers = #tpu.dot_dimension_numbers<[1], [0], [0], [1], [0, 0, 1, 1], [], []>} : vector<64x32xbf16>, vector<32x16xbf16>, vector<64x16xf32> -> vector<64x16xf32>
    %c4_102 = arith.constant 4 : index
    %c0_103 = arith.constant 0 : index
    %137 = vector.load %arg4[%c4_102, %c0_103] : memref<12x96xf32, #tpu.memory_space<vmem>>, vector<1x16xf32>
    %138 = vector.broadcast %137 : vector<1x16xf32> to vector<64x16xf32>
    %139 = arith.mulf %136, %138 : vector<64x16xf32>
    %c5_104 = arith.constant 5 : index
    %c0_105 = arith.constant 0 : index
    %140 = vector.load %arg4[%c5_104, %c0_105] : memref<12x96xf32, #tpu.memory_space<vmem>>, vector<1x16xf32>
    %141 = vector.broadcast %140 : vector<1x16xf32> to vector<64x16xf32>
    %142 = arith.addf %139, %141 : vector<64x16xf32>
    %143 = vector.shape_cast %142 : vector<64x16xf32> to vector<1x8x8x16xf32>
    %144 = vector.extract_strided_slice %143 {offsets = [0, 0, 0, 0], sizes = [1, 8, 1, 16], strides = [1, 1, 1, 1]} : vector<1x8x8x16xf32> to vector<1x8x1x16xf32>
    %145 = vector.shape_cast %144 : vector<1x8x1x16xf32> to vector<1x8x16xf32>
    %146 = vector.extract_strided_slice %143 {offsets = [0, 0, 1, 0], sizes = [1, 8, 1, 16], strides = [1, 1, 1, 1]} : vector<1x8x8x16xf32> to vector<1x8x1x16xf32>
    %147 = vector.shape_cast %146 : vector<1x8x1x16xf32> to vector<1x8x16xf32>
    %148 = vector.extract_strided_slice %143 {offsets = [0, 0, 2, 0], sizes = [1, 8, 1, 16], strides = [1, 1, 1, 1]} : vector<1x8x8x16xf32> to vector<1x8x1x16xf32>
    %149 = vector.shape_cast %148 : vector<1x8x1x16xf32> to vector<1x8x16xf32>
    %150 = vector.extract_strided_slice %143 {offsets = [0, 0, 3, 0], sizes = [1, 8, 1, 16], strides = [1, 1, 1, 1]} : vector<1x8x8x16xf32> to vector<1x8x1x16xf32>
    %151 = vector.shape_cast %150 : vector<1x8x1x16xf32> to vector<1x8x16xf32>
    %152 = vector.extract_strided_slice %143 {offsets = [0, 0, 4, 0], sizes = [1, 8, 1, 16], strides = [1, 1, 1, 1]} : vector<1x8x8x16xf32> to vector<1x8x1x16xf32>
    %153 = vector.shape_cast %152 : vector<1x8x1x16xf32> to vector<1x8x16xf32>
    %154 = vector.extract_strided_slice %143 {offsets = [0, 0, 5, 0], sizes = [1, 8, 1, 16], strides = [1, 1, 1, 1]} : vector<1x8x8x16xf32> to vector<1x8x1x16xf32>
    %155 = vector.shape_cast %154 : vector<1x8x1x16xf32> to vector<1x8x16xf32>
    %156 = vector.extract_strided_slice %143 {offsets = [0, 0, 6, 0], sizes = [1, 8, 1, 16], strides = [1, 1, 1, 1]} : vector<1x8x8x16xf32> to vector<1x8x1x16xf32>
    %157 = vector.shape_cast %156 : vector<1x8x1x16xf32> to vector<1x8x16xf32>
    %158 = vector.extract_strided_slice %143 {offsets = [0, 0, 7, 0], sizes = [1, 8, 1, 16], strides = [1, 1, 1, 1]} : vector<1x8x8x16xf32> to vector<1x8x1x16xf32>
    %159 = vector.shape_cast %158 : vector<1x8x1x16xf32> to vector<1x8x16xf32>
    %160 = tpu.concatenate %145, %147, %149, %151, %153, %155, %157, %159 in 2 : vector<1x8x16xf32>, vector<1x8x16xf32>, vector<1x8x16xf32>, vector<1x8x16xf32>, vector<1x8x16xf32>, vector<1x8x16xf32>, vector<1x8x16xf32>, vector<1x8x16xf32> -> vector<1x8x128xf32>
    %c0_106 = arith.constant 0 : index
    %c0_107 = arith.constant 0 : index
    %c0_108 = arith.constant 0 : index
    %161 = vector.load %arg14[%c0_106, %c0_107, %c0_108] : memref<1x8x128xf32, #tpu.memory_space<vmem>>, vector<1x8x128xf32>
    tpu.vector_store %arg14[%c0_106, %c0_107, %c0_108], %160 {strides = array<i32>} : memref<1x8x128xf32, #tpu.memory_space<vmem>>, vector<1x8x128xf32>,
    %162 = arith.truncf %142 : vector<64x16xf32> to vector<64x16xbf16>
    %c0_109 = arith.constant 0 : index
    %c0_110 = arith.constant 0 : index
    %163 = vector.load %arg11[%c0_109, %c0_110] : memref<16x96xbf16, #tpu.memory_space<vmem>>, vector<16x96xbf16>
    %cst_111 = arith.constant dense<0.000000e+00> : vector<64x96xf32>
    %164 = tpu.matmul %162, %163, %cst_111 {dimension_numbers = #tpu.dot_dimension_numbers<[1], [0], [0], [1], [0, 0, 1, 1], [], []>} : vector<64x16xbf16>, vector<16x96xbf16>, vector<64x96xf32> -> vector<64x96xf32>
    %c6_112 = arith.constant 6 : index
    %c0_113 = arith.constant 0 : index
    %165 = vector.load %arg4[%c6_112, %c0_113] : memref<12x96xf32, #tpu.memory_space<vmem>>, vector<1x96xf32>
    %166 = vector.broadcast %165 : vector<1x96xf32> to vector<64x96xf32>
    %167 = arith.mulf %164, %166 : vector<64x96xf32>
    %c7_114 = arith.constant 7 : index
    %c0_115 = arith.constant 0 : index
    %168 = vector.load %arg4[%c7_114, %c0_115] : memref<12x96xf32, #tpu.memory_space<vmem>>, vector<1x96xf32>
    %169 = vector.broadcast %168 : vector<1x96xf32> to vector<64x96xf32>
    %170 = arith.addf %167, %169 : vector<64x96xf32>
    %cst_116 = arith.constant 0.000000e+00 : f32
    %171 = vector.broadcast %cst_116 : f32 to vector<64x96xf32>
    %172 = arith.maximumf %170, %171 : vector<64x96xf32>
    %cst_117 = arith.constant 0.000000e+00 : f32
    %173 = vector.broadcast %cst_117 : f32 to vector<1x1x10x96xf32>
    %cst_118 = arith.constant 0.000000e+00 : f32
    %174 = vector.broadcast %cst_118 : f32 to vector<1x10x1x96xf32>
    %c0_119 = arith.constant 0 : index
    %c0_120 = arith.constant 0 : index
    %c0_121 = arith.constant 0 : index
    %c0_122 = arith.constant 0 : index
    %175 = vector.load %arg17[%c0_119, %c0_120, %c0_121, %c0_122] : memref<1x10x10x96xf32, #tpu.memory_space<vmem>>, vector<1x1x10x96xf32>
    tpu.vector_store %arg17[%c0_119, %c0_120, %c0_121, %c0_122], %173 {strides = array<i32>} : memref<1x10x10x96xf32, #tpu.memory_space<vmem>>, vector<1x1x10x96xf32>,
    %c0_123 = arith.constant 0 : index
    %c9_124 = arith.constant 9 : index
    %c0_125 = arith.constant 0 : index
    %c0_126 = arith.constant 0 : index
    %176 = vector.load %arg17[%c0_123, %c9_124, %c0_125, %c0_126] : memref<1x10x10x96xf32, #tpu.memory_space<vmem>>, vector<1x1x10x96xf32>
    tpu.vector_store %arg17[%c0_123, %c9_124, %c0_125, %c0_126], %173 {strides = array<i32>} : memref<1x10x10x96xf32, #tpu.memory_space<vmem>>, vector<1x1x10x96xf32>,
    %c0_127 = arith.constant 0 : index
    %c0_128 = arith.constant 0 : index
    %c0_129 = arith.constant 0 : index
    %c0_130 = arith.constant 0 : index
    %177 = vector.load %arg17[%c0_127, %c0_128, %c0_129, %c0_130] : memref<1x10x10x96xf32, #tpu.memory_space<vmem>>, vector<1x10x1x96xf32>
    tpu.vector_store %arg17[%c0_127, %c0_128, %c0_129, %c0_130], %174 {strides = array<i32>} : memref<1x10x10x96xf32, #tpu.memory_space<vmem>>, vector<1x10x1x96xf32>,
    %c0_131 = arith.constant 0 : index
    %c0_132 = arith.constant 0 : index
    %c9_133 = arith.constant 9 : index
    %c0_134 = arith.constant 0 : index
    %178 = vector.load %arg17[%c0_131, %c0_132, %c9_133, %c0_134] : memref<1x10x10x96xf32, #tpu.memory_space<vmem>>, vector<1x10x1x96xf32>
    tpu.vector_store %arg17[%c0_131, %c0_132, %c9_133, %c0_134], %174 {strides = array<i32>} : memref<1x10x10x96xf32, #tpu.memory_space<vmem>>, vector<1x10x1x96xf32>,
    %179 = vector.shape_cast %172 : vector<64x96xf32> to vector<1x8x8x96xf32>
    %c0_135 = arith.constant 0 : index
    %c1_136 = arith.constant 1 : index
    %c1_137 = arith.constant 1 : index
    %c0_138 = arith.constant 0 : index
    %180 = vector.load %arg17[%c0_135, %c1_136, %c1_137, %c0_138] : memref<1x10x10x96xf32, #tpu.memory_space<vmem>>, vector<1x8x8x96xf32>
    tpu.vector_store %arg17[%c0_135, %c1_136, %c1_137, %c0_138], %179 {strides = array<i32>} : memref<1x10x10x96xf32, #tpu.memory_space<vmem>>, vector<1x8x8x96xf32>,
    %cst_139 = arith.constant 0.000000e+00 : f32
    %181 = vector.broadcast %cst_139 : f32 to vector<1x8x8x96xf32>
    %c0_140 = arith.constant 0 : index
    %c0_141 = arith.constant 0 : index
    %c0_142 = arith.constant 0 : index
    %c0_143 = arith.constant 0 : index
    %182 = vector.load %arg17[%c0_140, %c0_141, %c0_142, %c0_143] : memref<1x10x10x96xf32, #tpu.memory_space<vmem>>, vector<1x8x8x96xf32>
    %c0_144 = arith.constant 0 : index
    %c32 = arith.constant 32 : index
    %183 = vector.load %arg3[%c0_144, %c32] : memref<9x128xf32, #tpu.memory_space<vmem>>, vector<1x96xf32>
    %184 = vector.shape_cast %183 : vector<1x96xf32> to vector<1x1x1x96xf32>
    %185 = vector.broadcast %184 : vector<1x1x1x96xf32> to vector<1x8x8x96xf32>
    %186 = arith.mulf %182, %185 : vector<1x8x8x96xf32>
    %187 = arith.addf %181, %186 : vector<1x8x8x96xf32>
    %c0_145 = arith.constant 0 : index
    %c0_146 = arith.constant 0 : index
    %c1_147 = arith.constant 1 : index
    %c0_148 = arith.constant 0 : index
    %188 = vector.load %arg17[%c0_145, %c0_146, %c1_147, %c0_148] : memref<1x10x10x96xf32, #tpu.memory_space<vmem>>, vector<1x8x8x96xf32>
    %c1_149 = arith.constant 1 : index
    %c32_150 = arith.constant 32 : index
    %189 = vector.load %arg3[%c1_149, %c32_150] : memref<9x128xf32, #tpu.memory_space<vmem>>, vector<1x96xf32>
    %190 = vector.shape_cast %189 : vector<1x96xf32> to vector<1x1x1x96xf32>
    %191 = vector.broadcast %190 : vector<1x1x1x96xf32> to vector<1x8x8x96xf32>
    %192 = arith.mulf %188, %191 : vector<1x8x8x96xf32>
    %193 = arith.addf %187, %192 : vector<1x8x8x96xf32>
    %c0_151 = arith.constant 0 : index
    %c0_152 = arith.constant 0 : index
    %c2_153 = arith.constant 2 : index
    %c0_154 = arith.constant 0 : index
    %194 = vector.load %arg17[%c0_151, %c0_152, %c2_153, %c0_154] : memref<1x10x10x96xf32, #tpu.memory_space<vmem>>, vector<1x8x8x96xf32>
    %c2_155 = arith.constant 2 : index
    %c32_156 = arith.constant 32 : index
    %195 = vector.load %arg3[%c2_155, %c32_156] : memref<9x128xf32, #tpu.memory_space<vmem>>, vector<1x96xf32>
    %196 = vector.shape_cast %195 : vector<1x96xf32> to vector<1x1x1x96xf32>
    %197 = vector.broadcast %196 : vector<1x1x1x96xf32> to vector<1x8x8x96xf32>
    %198 = arith.mulf %194, %197 : vector<1x8x8x96xf32>
    %199 = arith.addf %193, %198 : vector<1x8x8x96xf32>
    %c0_157 = arith.constant 0 : index
    %c1_158 = arith.constant 1 : index
    %c0_159 = arith.constant 0 : index
    %c0_160 = arith.constant 0 : index
    %200 = vector.load %arg17[%c0_157, %c1_158, %c0_159, %c0_160] : memref<1x10x10x96xf32, #tpu.memory_space<vmem>>, vector<1x8x8x96xf32>
    %c3_161 = arith.constant 3 : index
    %c32_162 = arith.constant 32 : index
    %201 = vector.load %arg3[%c3_161, %c32_162] : memref<9x128xf32, #tpu.memory_space<vmem>>, vector<1x96xf32>
    %202 = vector.shape_cast %201 : vector<1x96xf32> to vector<1x1x1x96xf32>
    %203 = vector.broadcast %202 : vector<1x1x1x96xf32> to vector<1x8x8x96xf32>
    %204 = arith.mulf %200, %203 : vector<1x8x8x96xf32>
    %205 = arith.addf %199, %204 : vector<1x8x8x96xf32>
    %c0_163 = arith.constant 0 : index
    %c1_164 = arith.constant 1 : index
    %c1_165 = arith.constant 1 : index
    %c0_166 = arith.constant 0 : index
    %206 = vector.load %arg17[%c0_163, %c1_164, %c1_165, %c0_166] : memref<1x10x10x96xf32, #tpu.memory_space<vmem>>, vector<1x8x8x96xf32>
    %c4_167 = arith.constant 4 : index
    %c32_168 = arith.constant 32 : index
    %207 = vector.load %arg3[%c4_167, %c32_168] : memref<9x128xf32, #tpu.memory_space<vmem>>, vector<1x96xf32>
    %208 = vector.shape_cast %207 : vector<1x96xf32> to vector<1x1x1x96xf32>
    %209 = vector.broadcast %208 : vector<1x1x1x96xf32> to vector<1x8x8x96xf32>
    %210 = arith.mulf %206, %209 : vector<1x8x8x96xf32>
    %211 = arith.addf %205, %210 : vector<1x8x8x96xf32>
    %c0_169 = arith.constant 0 : index
    %c1_170 = arith.constant 1 : index
    %c2_171 = arith.constant 2 : index
    %c0_172 = arith.constant 0 : index
    %212 = vector.load %arg17[%c0_169, %c1_170, %c2_171, %c0_172] : memref<1x10x10x96xf32, #tpu.memory_space<vmem>>, vector<1x8x8x96xf32>
    %c5_173 = arith.constant 5 : index
    %c32_174 = arith.constant 32 : index
    %213 = vector.load %arg3[%c5_173, %c32_174] : memref<9x128xf32, #tpu.memory_space<vmem>>, vector<1x96xf32>
    %214 = vector.shape_cast %213 : vector<1x96xf32> to vector<1x1x1x96xf32>
    %215 = vector.broadcast %214 : vector<1x1x1x96xf32> to vector<1x8x8x96xf32>
    %216 = arith.mulf %212, %215 : vector<1x8x8x96xf32>
    %217 = arith.addf %211, %216 : vector<1x8x8x96xf32>
    %c0_175 = arith.constant 0 : index
    %c2_176 = arith.constant 2 : index
    %c0_177 = arith.constant 0 : index
    %c0_178 = arith.constant 0 : index
    %218 = vector.load %arg17[%c0_175, %c2_176, %c0_177, %c0_178] : memref<1x10x10x96xf32, #tpu.memory_space<vmem>>, vector<1x8x8x96xf32>
    %c6_179 = arith.constant 6 : index
    %c32_180 = arith.constant 32 : index
    %219 = vector.load %arg3[%c6_179, %c32_180] : memref<9x128xf32, #tpu.memory_space<vmem>>, vector<1x96xf32>
    %220 = vector.shape_cast %219 : vector<1x96xf32> to vector<1x1x1x96xf32>
    %221 = vector.broadcast %220 : vector<1x1x1x96xf32> to vector<1x8x8x96xf32>
    %222 = arith.mulf %218, %221 : vector<1x8x8x96xf32>
    %223 = arith.addf %217, %222 : vector<1x8x8x96xf32>
    %c0_181 = arith.constant 0 : index
    %c2_182 = arith.constant 2 : index
    %c1_183 = arith.constant 1 : index
    %c0_184 = arith.constant 0 : index
    %224 = vector.load %arg17[%c0_181, %c2_182, %c1_183, %c0_184] : memref<1x10x10x96xf32, #tpu.memory_space<vmem>>, vector<1x8x8x96xf32>
    %c7_185 = arith.constant 7 : index
    %c32_186 = arith.constant 32 : index
    %225 = vector.load %arg3[%c7_185, %c32_186] : memref<9x128xf32, #tpu.memory_space<vmem>>, vector<1x96xf32>
    %226 = vector.shape_cast %225 : vector<1x96xf32> to vector<1x1x1x96xf32>
    %227 = vector.broadcast %226 : vector<1x1x1x96xf32> to vector<1x8x8x96xf32>
    %228 = arith.mulf %224, %227 : vector<1x8x8x96xf32>
    %229 = arith.addf %223, %228 : vector<1x8x8x96xf32>
    %c0_187 = arith.constant 0 : index
    %c2_188 = arith.constant 2 : index
    %c2_189 = arith.constant 2 : index
    %c0_190 = arith.constant 0 : index
    %230 = vector.load %arg17[%c0_187, %c2_188, %c2_189, %c0_190] : memref<1x10x10x96xf32, #tpu.memory_space<vmem>>, vector<1x8x8x96xf32>
    %c8_191 = arith.constant 8 : index
    %c32_192 = arith.constant 32 : index
    %231 = vector.load %arg3[%c8_191, %c32_192] : memref<9x128xf32, #tpu.memory_space<vmem>>, vector<1x96xf32>
    %232 = vector.shape_cast %231 : vector<1x96xf32> to vector<1x1x1x96xf32>
    %233 = vector.broadcast %232 : vector<1x1x1x96xf32> to vector<1x8x8x96xf32>
    %234 = arith.mulf %230, %233 : vector<1x8x8x96xf32>
    %235 = arith.addf %229, %234 : vector<1x8x8x96xf32>
    %236 = vector.extract_strided_slice %235 {offsets = [0, 0, 0, 0], sizes = [1, 1, 8, 96], strides = [1, 1, 1, 1]} : vector<1x8x8x96xf32> to vector<1x1x8x96xf32>
    %237 = vector.shape_cast %236 : vector<1x1x8x96xf32> to vector<1x8x96xf32>
    %238 = vector.extract_strided_slice %235 {offsets = [0, 2, 0, 0], sizes = [1, 1, 8, 96], strides = [1, 1, 1, 1]} : vector<1x8x8x96xf32> to vector<1x1x8x96xf32>
    %239 = vector.shape_cast %238 : vector<1x1x8x96xf32> to vector<1x8x96xf32>
    %240 = vector.extract_strided_slice %235 {offsets = [0, 4, 0, 0], sizes = [1, 1, 8, 96], strides = [1, 1, 1, 1]} : vector<1x8x8x96xf32> to vector<1x1x8x96xf32>
    %241 = vector.shape_cast %240 : vector<1x1x8x96xf32> to vector<1x8x96xf32>
    %242 = vector.extract_strided_slice %235 {offsets = [0, 6, 0, 0], sizes = [1, 1, 8, 96], strides = [1, 1, 1, 1]} : vector<1x8x8x96xf32> to vector<1x1x8x96xf32>
    %243 = vector.shape_cast %242 : vector<1x1x8x96xf32> to vector<1x8x96xf32>
    %244 = vector.shape_cast %237 : vector<1x8x96xf32> to vector<1x1x8x96xf32>
    %245 = vector.shape_cast %239 : vector<1x8x96xf32> to vector<1x1x8x96xf32>
    %246 = vector.shape_cast %241 : vector<1x8x96xf32> to vector<1x1x8x96xf32>
    %247 = vector.shape_cast %243 : vector<1x8x96xf32> to vector<1x1x8x96xf32>
    %248 = tpu.concatenate %244, %245, %246, %247 in 1 : vector<1x1x8x96xf32>, vector<1x1x8x96xf32>, vector<1x1x8x96xf32>, vector<1x1x8x96xf32> -> vector<1x4x8x96xf32>
    %249 = vector.extract_strided_slice %248 {offsets = [0, 0, 0, 0], sizes = [1, 4, 1, 96], strides = [1, 1, 1, 1]} : vector<1x4x8x96xf32> to vector<1x4x1x96xf32>
    %250 = vector.shape_cast %249 : vector<1x4x1x96xf32> to vector<1x4x96xf32>
    %251 = vector.extract_strided_slice %248 {offsets = [0, 0, 2, 0], sizes = [1, 4, 1, 96], strides = [1, 1, 1, 1]} : vector<1x4x8x96xf32> to vector<1x4x1x96xf32>
    %252 = vector.shape_cast %251 : vector<1x4x1x96xf32> to vector<1x4x96xf32>
    %253 = vector.extract_strided_slice %248 {offsets = [0, 0, 4, 0], sizes = [1, 4, 1, 96], strides = [1, 1, 1, 1]} : vector<1x4x8x96xf32> to vector<1x4x1x96xf32>
    %254 = vector.shape_cast %253 : vector<1x4x1x96xf32> to vector<1x4x96xf32>
    %255 = vector.extract_strided_slice %248 {offsets = [0, 0, 6, 0], sizes = [1, 4, 1, 96], strides = [1, 1, 1, 1]} : vector<1x4x8x96xf32> to vector<1x4x1x96xf32>
    %256 = vector.shape_cast %255 : vector<1x4x1x96xf32> to vector<1x4x96xf32>
    %257 = vector.shape_cast %250 : vector<1x4x96xf32> to vector<1x4x1x96xf32>
    %258 = vector.shape_cast %252 : vector<1x4x96xf32> to vector<1x4x1x96xf32>
    %259 = vector.shape_cast %254 : vector<1x4x96xf32> to vector<1x4x1x96xf32>
    %260 = vector.shape_cast %256 : vector<1x4x96xf32> to vector<1x4x1x96xf32>
    %261 = tpu.concatenate %257, %258, %259, %260 in 2 : vector<1x4x1x96xf32>, vector<1x4x1x96xf32>, vector<1x4x1x96xf32>, vector<1x4x1x96xf32> -> vector<1x4x4x96xf32>
    %c8_193 = arith.constant 8 : index
    %c0_194 = arith.constant 0 : index
    %262 = vector.load %arg4[%c8_193, %c0_194] : memref<12x96xf32, #tpu.memory_space<vmem>>, vector<1x96xf32>
    %263 = vector.shape_cast %262 : vector<1x96xf32> to vector<1x1x1x96xf32>
    %264 = vector.broadcast %263 : vector<1x1x1x96xf32> to vector<1x4x4x96xf32>
    %265 = arith.mulf %261, %264 : vector<1x4x4x96xf32>
    %c9_195 = arith.constant 9 : index
    %c0_196 = arith.constant 0 : index
    %266 = vector.load %arg4[%c9_195, %c0_196] : memref<12x96xf32, #tpu.memory_space<vmem>>, vector<1x96xf32>
    %267 = vector.shape_cast %266 : vector<1x96xf32> to vector<1x1x1x96xf32>
    %268 = vector.broadcast %267 : vector<1x1x1x96xf32> to vector<1x4x4x96xf32>
    %269 = arith.addf %265, %268 : vector<1x4x4x96xf32>
    %cst_197 = arith.constant 0.000000e+00 : f32
    %270 = vector.broadcast %cst_197 : f32 to vector<1x4x4x96xf32>
    %271 = arith.maximumf %269, %270 : vector<1x4x4x96xf32>
    %272 = vector.shape_cast %271 : vector<1x4x4x96xf32> to vector<1x16x96xf32>
    %cst_198 = arith.constant dense<0.000000e+00> : vector<1x96xf32>
    %273 = vector.multi_reduction <add>, %272, %cst_198 [1] : vector<1x16x96xf32> to vector<1x96xf32>
    %cst_199 = arith.constant 1.600000e+01 : f32
    %274 = vector.broadcast %cst_199 : f32 to vector<1x96xf32>
    %275 = arith.divf %273, %274 : vector<1x96xf32>
    %c2_200 = arith.constant 2 : index
    %c0_201 = arith.constant 0 : index
    %276 = vector.load %arg9[%c2_200, %c0_201] : memref<4x96xf32, #tpu.memory_space<vmem>>, vector<1x4xf32>
    %c3_202 = arith.constant 3 : index
    %c0_203 = arith.constant 0 : index
    %277 = vector.load %arg9[%c3_202, %c0_203] : memref<4x96xf32, #tpu.memory_space<vmem>>, vector<1x96xf32>
    %278 = vector.shape_cast %275 : vector<1x96xf32> to vector<1x96x1xf32>
    %c0_204 = arith.constant 0 : index
    %c0_205 = arith.constant 0 : index
    %279 = vector.load %arg7[%c0_204, %c0_205] : memref<96x4xf32, #tpu.memory_space<vmem>>, vector<96x4xf32>
    %280 = vector.shape_cast %279 : vector<96x4xf32> to vector<1x96x4xf32>
    %281 = vector.broadcast %278 : vector<1x96x1xf32> to vector<1x96x4xf32>
    %282 = arith.mulf %281, %280 : vector<1x96x4xf32>
    %cst_206 = arith.constant dense<0.000000e+00> : vector<1x4xf32>
    %283 = vector.multi_reduction <add>, %282, %cst_206 [1] : vector<1x96x4xf32> to vector<1x4xf32>
    %284 = arith.addf %283, %276 : vector<1x4xf32>
    %cst_207 = arith.constant 0.000000e+00 : f32
    %285 = vector.broadcast %cst_207 : f32 to vector<1x4xf32>
    %286 = arith.maximumf %284, %285 : vector<1x4xf32>
    %287 = vector.shape_cast %286 : vector<1x4xf32> to vector<1x4x1xf32>
    %c0_208 = arith.constant 0 : index
    %c0_209 = arith.constant 0 : index
    %288 = vector.load %arg8[%c0_208, %c0_209] : memref<4x96xf32, #tpu.memory_space<vmem>>, vector<4x96xf32>
    %289 = vector.shape_cast %288 : vector<4x96xf32> to vector<1x4x96xf32>
    %290 = vector.broadcast %287 : vector<1x4x1xf32> to vector<1x4x96xf32>
    %291 = arith.mulf %290, %289 : vector<1x4x96xf32>
    %cst_210 = arith.constant dense<0.000000e+00> : vector<1x96xf32>
    %292 = vector.multi_reduction <add>, %291, %cst_210 [1] : vector<1x4x96xf32> to vector<1x96xf32>
    %293 = arith.addf %292, %277 : vector<1x96xf32>
    %294 = arith.negf %293 : vector<1x96xf32>
    %295 = math.exp %294 : vector<1x96xf32>
    %cst_211 = arith.constant 1.000000e+00 : f32
    %296 = vector.broadcast %cst_211 : f32 to vector<1x96xf32>
    %297 = arith.addf %296, %295 : vector<1x96xf32>
    %298 = arith.divf %296, %297 : vector<1x96xf32>
    %299 = vector.shape_cast %298 : vector<1x96xf32> to vector<1x1x96xf32>
    %300 = vector.broadcast %299 : vector<1x1x96xf32> to vector<1x16x96xf32>
    %301 = arith.mulf %272, %300 : vector<1x16x96xf32>
    %302 = vector.shape_cast %301 : vector<1x16x96xf32> to vector<16x96xf32>
    %303 = arith.truncf %302 : vector<16x96xf32> to vector<16x96xbf16>
    %c0_212 = arith.constant 0 : index
    %c0_213 = arith.constant 0 : index
    %304 = vector.load %arg12[%c0_212, %c0_213] : memref<96x24xbf16, #tpu.memory_space<vmem>>, vector<96x24xbf16>
    %cst_214 = arith.constant dense<0.000000e+00> : vector<16x24xf32>
    %305 = tpu.matmul %303, %304, %cst_214 {dimension_numbers = #tpu.dot_dimension_numbers<[1], [0], [0], [1], [0, 0, 1, 1], [], []>} : vector<16x96xbf16>, vector<96x24xbf16>, vector<16x24xf32> -> vector<16x24xf32>
    %c10 = arith.constant 10 : index
    %c0_215 = arith.constant 0 : index
    %306 = vector.load %arg4[%c10, %c0_215] : memref<12x96xf32, #tpu.memory_space<vmem>>, vector<1x24xf32>
    %307 = vector.broadcast %306 : vector<1x24xf32> to vector<16x24xf32>
    %308 = arith.mulf %305, %307 : vector<16x24xf32>
    %c11 = arith.constant 11 : index
    %c0_216 = arith.constant 0 : index
    %309 = vector.load %arg4[%c11, %c0_216] : memref<12x96xf32, #tpu.memory_space<vmem>>, vector<1x24xf32>
    %310 = vector.broadcast %309 : vector<1x24xf32> to vector<16x24xf32>
    %311 = arith.addf %308, %310 : vector<16x24xf32>
    %312 = vector.shape_cast %311 : vector<16x24xf32> to vector<1x4x4x24xf32>
    %313 = vector.extract_strided_slice %312 {offsets = [0, 0, 0, 0], sizes = [1, 4, 1, 24], strides = [1, 1, 1, 1]} : vector<1x4x4x24xf32> to vector<1x4x1x24xf32>
    %314 = vector.shape_cast %313 : vector<1x4x1x24xf32> to vector<1x4x24xf32>
    %315 = vector.extract_strided_slice %312 {offsets = [0, 0, 1, 0], sizes = [1, 4, 1, 24], strides = [1, 1, 1, 1]} : vector<1x4x4x24xf32> to vector<1x4x1x24xf32>
    %316 = vector.shape_cast %315 : vector<1x4x1x24xf32> to vector<1x4x24xf32>
    %317 = vector.extract_strided_slice %312 {offsets = [0, 0, 2, 0], sizes = [1, 4, 1, 24], strides = [1, 1, 1, 1]} : vector<1x4x4x24xf32> to vector<1x4x1x24xf32>
    %318 = vector.shape_cast %317 : vector<1x4x1x24xf32> to vector<1x4x24xf32>
    %319 = vector.extract_strided_slice %312 {offsets = [0, 0, 3, 0], sizes = [1, 4, 1, 24], strides = [1, 1, 1, 1]} : vector<1x4x4x24xf32> to vector<1x4x1x24xf32>
    %320 = vector.shape_cast %319 : vector<1x4x1x24xf32> to vector<1x4x24xf32>
    %321 = tpu.concatenate %314, %316, %318, %320 in 2 : vector<1x4x24xf32>, vector<1x4x24xf32>, vector<1x4x24xf32>, vector<1x4x24xf32> -> vector<1x4x96xf32>
    %322 = vector.shape_cast %321 : vector<1x4x96xf32> to vector<1x1x4x96xf32>
    %323 = vector.extract_strided_slice %322 {offsets = [0, 0, 0, 0], sizes = [1, 1, 1, 96], strides = [1, 1, 1, 1]} : vector<1x1x4x96xf32> to vector<1x1x1x96xf32>
    %324 = vector.shape_cast %323 : vector<1x1x1x96xf32> to vector<1x1x96xf32>
    %325 = vector.extract_strided_slice %322 {offsets = [0, 0, 1, 0], sizes = [1, 1, 1, 96], strides = [1, 1, 1, 1]} : vector<1x1x4x96xf32> to vector<1x1x1x96xf32>
    %326 = vector.shape_cast %325 : vector<1x1x1x96xf32> to vector<1x1x96xf32>
    %327 = vector.extract_strided_slice %322 {offsets = [0, 0, 2, 0], sizes = [1, 1, 1, 96], strides = [1, 1, 1, 1]} : vector<1x1x4x96xf32> to vector<1x1x1x96xf32>
    %328 = vector.shape_cast %327 : vector<1x1x1x96xf32> to vector<1x1x96xf32>
    %329 = vector.extract_strided_slice %322 {offsets = [0, 0, 3, 0], sizes = [1, 1, 1, 96], strides = [1, 1, 1, 1]} : vector<1x1x4x96xf32> to vector<1x1x1x96xf32>
    %330 = vector.shape_cast %329 : vector<1x1x1x96xf32> to vector<1x1x96xf32>
    %331 = tpu.concatenate %324, %326, %328, %330 in 2 : vector<1x1x96xf32>, vector<1x1x96xf32>, vector<1x1x96xf32>, vector<1x1x96xf32> -> vector<1x1x384xf32>
    %c0_217 = arith.constant 0 : index
    %c0_218 = arith.constant 0 : index
    %c0_219 = arith.constant 0 : index
    %332 = vector.load %arg15[%c0_217, %c0_218, %c0_219] : memref<1x1x384xf32, #tpu.memory_space<vmem>>, vector<1x1x384xf32>
    tpu.vector_store %arg15[%c0_217, %c0_218, %c0_219], %331 {strides = array<i32>} : memref<1x1x384xf32, #tpu.memory_space<vmem>>, vector<1x1x384xf32>,
    return
  }
  func.func @transform_0(%arg0: i32) -> (i32, i32, i32) {
    %c0_i32 = arith.constant 0 : i32
    %c0_i32_0 = arith.constant 0 : i32
    %c0_i32_1 = arith.constant 0 : i32
    return %arg0, %c0_i32, %c0_i32_0 : i32, i32, i32
  }
  func.func @transform_1(%arg0: i32) -> (i32, i32) {
    %c0_i32 = arith.constant 0 : i32
    %c0_i32_0 = arith.constant 0 : i32
    %c0_i32_1 = arith.constant 0 : i32
    return %c0_i32, %c0_i32_0 : i32, i32
  }
  func.func @transform_2(%arg0: i32) -> (i32, i32) {
    %c0_i32 = arith.constant 0 : i32
    %c0_i32_0 = arith.constant 0 : i32
    %c0_i32_1 = arith.constant 0 : i32
    return %c0_i32, %c0_i32_0 : i32, i32
  }
  func.func @transform_3(%arg0: i32) -> (i32, i32) {
    %c0_i32 = arith.constant 0 : i32
    %c0_i32_0 = arith.constant 0 : i32
    %c0_i32_1 = arith.constant 0 : i32
    return %c0_i32, %c0_i32_0 : i32, i32
  }
  func.func @transform_4(%arg0: i32) -> (i32, i32) {
    %c0_i32 = arith.constant 0 : i32
    %c0_i32_0 = arith.constant 0 : i32
    %c0_i32_1 = arith.constant 0 : i32
    return %c0_i32, %c0_i32_0 : i32, i32
  }
  func.func @transform_5(%arg0: i32) -> (i32, i32) {
    %c0_i32 = arith.constant 0 : i32
    %c0_i32_0 = arith.constant 0 : i32
    %c0_i32_1 = arith.constant 0 : i32
    return %c0_i32, %c0_i32_0 : i32, i32
  }
  func.func @transform_6(%arg0: i32) -> (i32, i32) {
    %c0_i32 = arith.constant 0 : i32
    %c0_i32_0 = arith.constant 0 : i32
    %c0_i32_1 = arith.constant 0 : i32
    return %c0_i32, %c0_i32_0 : i32, i32
  }
  func.func @transform_7(%arg0: i32) -> (i32, i32) {
    %c0_i32 = arith.constant 0 : i32
    %c0_i32_0 = arith.constant 0 : i32
    %c0_i32_1 = arith.constant 0 : i32
    return %c0_i32, %c0_i32_0 : i32, i32
  }
  func.func @transform_8(%arg0: i32) -> (i32, i32) {
    %c0_i32 = arith.constant 0 : i32
    %c0_i32_0 = arith.constant 0 : i32
    %c0_i32_1 = arith.constant 0 : i32
    return %c0_i32, %c0_i32_0 : i32, i32
  }
  func.func @transform_9(%arg0: i32) -> (i32, i32) {
    %c0_i32 = arith.constant 0 : i32
    %c0_i32_0 = arith.constant 0 : i32
    %c0_i32_1 = arith.constant 0 : i32
    return %c0_i32, %c0_i32_0 : i32, i32
  }
  func.func @transform_10(%arg0: i32) -> (i32, i32) {
    %c0_i32 = arith.constant 0 : i32
    %c0_i32_0 = arith.constant 0 : i32
    %c0_i32_1 = arith.constant 0 : i32
    return %c0_i32, %c0_i32_0 : i32, i32
  }
  func.func @transform_11(%arg0: i32) -> (i32, i32) {
    %c0_i32 = arith.constant 0 : i32
    %c0_i32_0 = arith.constant 0 : i32
    %c0_i32_1 = arith.constant 0 : i32
    return %c0_i32, %c0_i32_0 : i32, i32
  }
  func.func @transform_12(%arg0: i32) -> (i32, i32, i32) {
    %c0_i32 = arith.constant 0 : i32
    %c0_i32_0 = arith.constant 0 : i32
    %c0_i32_1 = arith.constant 0 : i32
    return %arg0, %c0_i32, %c0_i32_0 : i32, i32, i32
  }
  func.func @transform_13(%arg0: i32) -> (i32, i32, i32) {
    %c0_i32 = arith.constant 0 : i32
    %c0_i32_0 = arith.constant 0 : i32
    %c0_i32_1 = arith.constant 0 : i32
    return %arg0, %c0_i32, %c0_i32_0 : i32, i32, i32
  }
  func.func @transform_14(%arg0: i32) -> (i32, i32, i32) {
    %c0_i32 = arith.constant 0 : i32
    %c0_i32_0 = arith.constant 0 : i32
    %c0_i32_1 = arith.constant 0 : i32
    return %arg0, %c0_i32, %c0_i32_0 : i32, i32, i32
  }
}

</mosaic_0001>

<llo_original>
// kernel: efficientnet_features_forward.1
$region0: #{efficientnet_features_forward.1}
  #allocation0 [shape = 'u32[]', space=smem, size = 0x4, offset = 0x4, fixed_abs, tag = 'smem constant byte address 0x4 - core index']
  #allocation1 [shape = 'u32[72,128]{1,0:T(1,128)}', space=vmem, size = 0x9000, scoped, tag = 'internal scratch']
  #allocation2 [shape = 'f32[1,10,10,32]{3,2,1,0:T(8,128)}', space=vmem, size = 0x14000, scoped, tag = 'scratch operand']
  #allocation3 [shape = 'f32[1,10,10,96]{3,2,1,0:T(8,128)}', space=vmem, size = 0x14000, scoped, tag = 'scratch operand']
  %s0 = inlined_call_operand.vmem [shape: bf16[2,64,27], index: 0, kind: input, shape index: {}]
  %s1 = inlined_call_operand.vmem [shape: bf16[27,32], index: 1, kind: input, shape index: {}]
  %s2 = inlined_call_operand.vmem [shape: f32[9,128], index: 2, kind: input, shape index: {}]
  %s3 = inlined_call_operand.vmem [shape: f32[12,96], index: 3, kind: input, shape index: {}]
  %s4 = inlined_call_operand.vmem [shape: f32[32,8], index: 4, kind: input, shape index: {}]
  %s5 = inlined_call_operand.vmem [shape: f32[8,32], index: 5, kind: input, shape index: {}]
  %s6 = inlined_call_operand.vmem [shape: f32[96,4], index: 6, kind: input, shape index: {}]
  %s7 = inlined_call_operand.vmem [shape: f32[4,96], index: 7, kind: input, shape index: {}]
  %s8 = inlined_call_operand.vmem [shape: f32[4,96], index: 8, kind: input, shape index: {}]
  %s9 = inlined_call_operand.vmem [shape: bf16[32,16], index: 9, kind: input, shape index: {}]
  %s10 = inlined_call_operand.vmem [shape: bf16[16,96], index: 10, kind: input, shape index: {}]
  %s11 = inlined_call_operand.vmem [shape: bf16[96,24], index: 11, kind: input, shape index: {}]
  %s12 = inlined_call_operand.vmem [shape: f32[2,8,256], index: 12, kind: output, shape index: {0}]
  %s13 = inlined_call_operand.vmem [shape: f32[2,8,128], index: 13, kind: output, shape index: {1}]
  %s14 = inlined_call_operand.vmem [shape: f32[2,1,384], index: 14, kind: output, shape index: {2}]
  %15 = xla_tuple %s12, %s13, %s14
  %s16 = sld [smem:[#allocation0]]
  $region97: #{efficientnet_features_forward.1} parent=0
    _
  %s18 = ssub.s32 1, %s16
  %s19 = scalar_select 0, %s18, %s16
  loop: start=0, step=1, limit=4
  $region2: #{efficientnet_features_forward.1} parent=0 // loop_pre_header
    _
  $region3: #{efficientnet_features_forward.1} parent=0 // loop_header
    %s21 = sphi 0, %s25
    %p22 = scmp.ge.s32.totalorder %s21, 4
    %s31 = sphi 0, %s33
    %s34 = sphi 0, %s31
    %s35 = sphi 0, %s34
    %s51 = sphi 0, %s35
    %s55 = sphi 0, %s55
    %s57 = sphi 0, %s55
    %s58 = sphi 0, %s57
    %s72 = sphi 0, %s58
    %s76 = sphi 0, %s76
    %s78 = sphi 0, %s76
    %s79 = sphi 0, %s78
    %s93 = sphi 0, %s79
    %s97 = sphi 0, %s97
    %s99 = sphi 0, %s97
    %s100 = sphi 0, %s99
    %s114 = sphi 0, %s100
    %s118 = sphi 0, %s118
    %s120 = sphi 0, %s118
    %s121 = sphi 0, %s120
    %s135 = sphi 0, %s121
    %s139 = sphi 0, %s139
    %s141 = sphi 0, %s139
    %s142 = sphi 0, %s141
    %s156 = sphi 0, %s142
    %s160 = sphi 0, %s160
    %s162 = sphi 0, %s160
    %s163 = sphi 0, %s162
    %s177 = sphi 0, %s163
    %s181 = sphi 0, %s181
    %s183 = sphi 0, %s181
    %s184 = sphi 0, %s183
    %s198 = sphi 0, %s184
    %s202 = sphi 0, %s202
    %s204 = sphi 0, %s202
    %s205 = sphi 0, %s204
    %s219 = sphi 0, %s205
    %s223 = sphi 0, %s223
    %s225 = sphi 0, %s223
    %s226 = sphi 0, %s225
    %s240 = sphi 0, %s226
    %s244 = sphi 0, %s244
    %s246 = sphi 0, %s244
    %s247 = sphi 0, %s246
    %s261 = sphi 0, %s247
    %s265 = sphi 0, %s265
    %s267 = sphi 0, %s265
    %s268 = sphi 0, %s267
    %s282 = sphi 0, %s268
    %s288 = sphi 0, %s290
    %s291 = sphi 0, %s288
    %s292 = sphi 0, %s291
    %s308 = sphi 0, %s292
    %s314 = sphi 0, %s316
    %s317 = sphi 0, %s314
    %s318 = sphi 0, %s317
    %s334 = sphi 0, %s318
    %s340 = sphi 0, %s342
    %s343 = sphi 0, %s340
    %s344 = sphi 0, %s343
    %s360 = sphi 0, %s344
  $region4: #{efficientnet_features_forward.1} parent=0 // loop_header_branch
    %24 = sbr.rel (%p22) target = $region8
  $region5: #{efficientnet_features_forward.1} parent=0 // loop_body
    %s26 = ssub.s32 %s21, 1
    %s27 = ssub.s32 %s21, 2
    %s28 = sadd.s32 %s21, 1
    %s29 = ssub.s32 %s21, %s28
    %p30 = scmp.eq.s32.totalorder %s29, 0
    %s32 = sadd.s32 %s31, 1
    %s33 = scalar_select %p30, %s31, %s32
    %p36 = pneg %p30
    %p37 = scmp.eq.s32.totalorder %s21, 1
    %p38 = por %p36, %p37
    %p39 = scmp.ne.s32.totalorder %s31, %s34
    %p40 = scmp.eq.s32.totalorder %s21, 0
    %p41 = por %p39, %p40
    %p42 = scmp.ne.s32.totalorder %s31, %s34
    %p43 = scmp.eq.s32.totalorder %s26, 1
    %p44 = por %p42, %p43
    %p45 = scmp.ne.s32.totalorder %s34, %s35
    %p46 = scmp.eq.s32.totalorder %s26, 0
    %p47 = por %p45, %p46
    %p48 = scmp.ne.s32.totalorder %s34, %s35
    %p49 = scmp.eq.s32.totalorder %s27, 1
    %p50 = por %p48, %p49
    %p52 = scmp.ne.s32.totalorder %s35, %s51
    %p53 = scmp.eq.s32.totalorder %s27, 0
    %p54 = por %p52, %p53
    %s56 = sadd.s32 %s55, 1
    %p59 = scmp.eq.s32.totalorder %s21, 1
    %p60 = scmp.ne.s32.totalorder %s55, %s57
    %p61 = scmp.eq.s32.totalorder %s21, 0
    %p62 = por %p60, %p61
    %p63 = scmp.ne.s32.totalorder %s55, %s57
    %p64 = scmp.eq.s32.totalorder %s26, 1
    %p65 = por %p63, %p64
    %p66 = scmp.ne.s32.totalorder %s57, %s58
    %p67 = scmp.eq.s32.totalorder %s26, 0
    %p68 = por %p66, %p67
    %p69 = scmp.ne.s32.totalorder %s57, %s58
    %p70 = scmp.eq.s32.totalorder %s27, 1
    %p71 = por %p69, %p70
    %p73 = scmp.ne.s32.totalorder %s58, %s72
    %p74 = scmp.eq.s32.totalorder %s27, 0
    %p75 = por %p73, %p74
    %s77 = sadd.s32 %s76, 1
    %p80 = scmp.eq.s32.totalorder %s21, 1
    %p81 = scmp.ne.s32.totalorder %s76, %s78
    %p82 = scmp.eq.s32.totalorder %s21, 0
    %p83 = por %p81, %p82
    %p84 = scmp.ne.s32.totalorder %s76, %s78
    %p85 = scmp.eq.s32.totalorder %s26, 1
    %p86 = por %p84, %p85
    %p87 = scmp.ne.s32.totalorder %s78, %s79
    %p88 = scmp.eq.s32.totalorder %s26, 0
    %p89 = por %p87, %p88
    %p90 = scmp.ne.s32.totalorder %s78, %s79
    %p91 = scmp.eq.s32.totalorder %s27, 1
    %p92 = por %p90, %p91
    %p94 = scmp.ne.s32.totalorder %s79, %s93
    %p95 = scmp.eq.s32.totalorder %s27, 0
    %p96 = por %p94, %p95
    %s98 = sadd.s32 %s97, 1
    %p101 = scmp.eq.s32.totalorder %s21, 1
    %p102 = scmp.ne.s32.totalorder %s97, %s99
    %p103 = scmp.eq.s32.totalorder %s21, 0
    %p104 = por %p102, %p103
    %p105 = scmp.ne.s32.totalorder %s97, %s99
    %p106 = scmp.eq.s32.totalorder %s26, 1
    %p107 = por %p105, %p106
    %p108 = scmp.ne.s32.totalorder %s99, %s100
    %p109 = scmp.eq.s32.totalorder %s26, 0
    %p110 = por %p108, %p109
    %p111 = scmp.ne.s32.totalorder %s99, %s100
    %p112 = scmp.eq.s32.totalorder %s27, 1
    %p113 = por %p111, %p112
    %p115 = scmp.ne.s32.totalorder %s100, %s114
    %p116 = scmp.eq.s32.totalorder %s27, 0
    %p117 = por %p115, %p116
    %s119 = sadd.s32 %s118, 1
    %p122 = scmp.eq.s32.totalorder %s21, 1
    %p123 = scmp.ne.s32.totalorder %s118, %s120
    %p124 = scmp.eq.s32.totalorder %s21, 0
    %p125 = por %p123, %p124
    %p126 = scmp.ne.s32.totalorder %s118, %s120
    %p127 = scmp.eq.s32.totalorder %s26, 1
    %p128 = por %p126, %p127
    %p129 = scmp.ne.s32.totalorder %s120, %s121
    %p130 = scmp.eq.s32.totalorder %s26, 0
    %p131 = por %p129, %p130
    %p132 = scmp.ne.s32.totalorder %s120, %s121
    %p133 = scmp.eq.s32.totalorder %s27, 1
    %p134 = por %p132, %p133
    %p136 = scmp.ne.s32.totalorder %s121, %s135
    %p137 = scmp.eq.s32.totalorder %s27, 0
    %p138 = por %p136, %p137
    %s140 = sadd.s32 %s139, 1
    %p143 = scmp.eq.s32.totalorder %s21, 1
    %p144 = scmp.ne.s32.totalorder %s139, %s141
    %p145 = scmp.eq.s32.totalorder %s21, 0
    %p146 = por %p144, %p145
    %p147 = scmp.ne.s32.totalorder %s139, %s141
    %p148 = scmp.eq.s32.totalorder %s26, 1
    %p149 = por %p147, %p148
    %p150 = scmp.ne.s32.totalorder %s141, %s142
    %p151 = scmp.eq.s32.totalorder %s26, 0
    %p152 = por %p150, %p151
    %p153 = scmp.ne.s32.totalorder %s141, %s142
    %p154 = scmp.eq.s32.totalorder %s27, 1
    %p155 = por %p153, %p154
    %p157 = scmp.ne.s32.totalorder %s142, %s156
    %p158 = scmp.eq.s32.totalorder %s27, 0
    %p159 = por %p157, %p158
    %s161 = sadd.s32 %s160, 1
    %p164 = scmp.eq.s32.totalorder %s21, 1
    %p165 = scmp.ne.s32.totalorder %s160, %s162
    %p166 = scmp.eq.s32.totalorder %s21, 0
    %p167 = por %p165, %p166
    %p168 = scmp.ne.s32.totalorder %s160, %s162
    %p169 = scmp.eq.s32.totalorder %s26, 1
    %p170 = por %p168, %p169
    %p171 = scmp.ne.s32.totalorder %s162, %s163
    %p172 = scmp.eq.s32.totalorder %s26, 0
    %p173 = por %p171, %p172
    %p174 = scmp.ne.s32.totalorder %s162, %s163
    %p175 = scmp.eq.s32.totalorder %s27, 1
    %p176 = por %p174, %p175
    %p178 = scmp.ne.s32.totalorder %s163, %s177
    %p179 = scmp.eq.s32.totalorder %s27, 0
    %p180 = por %p178, %p179
    %s182 = sadd.s32 %s181, 1
    %p185 = scmp.eq.s32.totalorder %s21, 1
    %p186 = scmp.ne.s32.totalorder %s181, %s183
    %p187 = scmp.eq.s32.totalorder %s21, 0
    %p188 = por %p186, %p187
    %p189 = scmp.ne.s32.totalorder %s181, %s183
    %p190 = scmp.eq.s32.totalorder %s26, 1
    %p191 = por %p189, %p190
    %p192 = scmp.ne.s32.totalorder %s183, %s184
    %p193 = scmp.eq.s32.totalorder %s26, 0
    %p194 = por %p192, %p193
    %p195 = scmp.ne.s32.totalorder %s183, %s184
    %p196 = scmp.eq.s32.totalorder %s27, 1
    %p197 = por %p195, %p196
    %p199 = scmp.ne.s32.totalorder %s184, %s198
    %p200 = scmp.eq.s32.totalorder %s27, 0
    %p201 = por %p199, %p200
    %s203 = sadd.s32 %s202, 1
    %p206 = scmp.eq.s32.totalorder %s21, 1
    %p207 = scmp.ne.s32.totalorder %s202, %s204
    %p208 = scmp.eq.s32.totalorder %s21, 0
    %p209 = por %p207, %p208
    %p210 = scmp.ne.s32.totalorder %s202, %s204
    %p211 = scmp.eq.s32.totalorder %s26, 1
    %p212 = por %p210, %p211
    %p213 = scmp.ne.s32.totalorder %s204, %s205
    %p214 = scmp.eq.s32.totalorder %s26, 0
    %p215 = por %p213, %p214
    %p216 = scmp.ne.s32.totalorder %s204, %s205
    %p217 = scmp.eq.s32.totalorder %s27, 1
    %p218 = por %p216, %p217
    %p220 = scmp.ne.s32.totalorder %s205, %s219
    %p221 = scmp.eq.s32.totalorder %s27, 0
    %p222 = por %p220, %p221
    %s224 = sadd.s32 %s223, 1
    %p227 = scmp.eq.s32.totalorder %s21, 1
    %p228 = scmp.ne.s32.totalorder %s223, %s225
    %p229 = scmp.eq.s32.totalorder %s21, 0
    %p230 = por %p228, %p229
    %p231 = scmp.ne.s32.totalorder %s223, %s225
    %p232 = scmp.eq.s32.totalorder %s26, 1
    %p233 = por %p231, %p232
    %p234 = scmp.ne.s32.totalorder %s225, %s226
    %p235 = scmp.eq.s32.totalorder %s26, 0
    %p236 = por %p234, %p235
    %p237 = scmp.ne.s32.totalorder %s225, %s226
    %p238 = scmp.eq.s32.totalorder %s27, 1
    %p239 = por %p237, %p238
    %p241 = scmp.ne.s32.totalorder %s226, %s240
    %p242 = scmp.eq.s32.totalorder %s27, 0
    %p243 = por %p241, %p242
    %s245 = sadd.s32 %s244, 1
    %p248 = scmp.eq.s32.totalorder %s21, 1
    %p249 = scmp.ne.s32.totalorder %s244, %s246
    %p250 = scmp.eq.s32.totalorder %s21, 0
    %p251 = por %p249, %p250
    %p252 = scmp.ne.s32.totalorder %s244, %s246
    %p253 = scmp.eq.s32.totalorder %s26, 1
    %p254 = por %p252, %p253
    %p255 = scmp.ne.s32.totalorder %s246, %s247
    %p256 = scmp.eq.s32.totalorder %s26, 0
    %p257 = por %p255, %p256
    %p258 = scmp.ne.s32.totalorder %s246, %s247
    %p259 = scmp.eq.s32.totalorder %s27, 1
    %p260 = por %p258, %p259
    %p262 = scmp.ne.s32.totalorder %s247, %s261
    %p263 = scmp.eq.s32.totalorder %s27, 0
    %p264 = por %p262, %p263
    %s266 = sadd.s32 %s265, 1
    %p269 = scmp.eq.s32.totalorder %s21, 1
    %p270 = scmp.ne.s32.totalorder %s265, %s267
    %p271 = scmp.eq.s32.totalorder %s21, 0
    %p272 = por %p270, %p271
    %p273 = scmp.ne.s32.totalorder %s265, %s267
    %p274 = scmp.eq.s32.totalorder %s26, 1
    %p275 = por %p273, %p274
    %p276 = scmp.ne.s32.totalorder %s267, %s268
    %p277 = scmp.eq.s32.totalorder %s26, 0
    %p278 = por %p276, %p277
    %p279 = scmp.ne.s32.totalorder %s267, %s268
    %p280 = scmp.eq.s32.totalorder %s27, 1
    %p281 = por %p279, %p280
    %p283 = scmp.ne.s32.totalorder %s268, %s282
    %p284 = scmp.eq.s32.totalorder %s27, 0
    %p285 = por %p283, %p284
    %s286 = ssub.s32 %s21, %s28
    %p287 = scmp.eq.s32.totalorder %s286, 0
    %s289 = sadd.s32 %s288, 1
    %s290 = scalar_select %p287, %s288, %s289
    %p293 = pneg %p287
    %p294 = scmp.eq.s32.totalorder %s21, 1
    %p295 = por %p293, %p294
    %p296 = scmp.ne.s32.totalorder %s288, %s291
    %p297 = scmp.eq.s32.totalorder %s21, 0
    %p298 = por %p296, %p297
    %p299 = scmp.ne.s32.totalorder %s288, %s291
    %p300 = scmp.eq.s32.totalorder %s26, 1
    %p301 = por %p299, %p300
    %p302 = scmp.ne.s32.totalorder %s291, %s292
    %p303 = scmp.eq.s32.totalorder %s26, 0
    %p304 = por %p302, %p303
    %p305 = scmp.ne.s32.totalorder %s291, %s292
    %p306 = scmp.eq.s32.totalorder %s27, 1
    %p307 = por %p305, %p306
    %p309 = scmp.ne.s32.totalorder %s292, %s308
    %p310 = scmp.eq.s32.totalorder %s27, 0
    %p311 = por %p309, %p310
    %s312 = ssub.s32 %s21, %s28
    %p313 = scmp.eq.s32.totalorder %s312, 0
    %s315 = sadd.s32 %s314, 1
    %s316 = scalar_select %p313, %s314, %s315
    %p319 = pneg %p313
    %p320 = scmp.eq.s32.totalorder %s21, 1
    %p321 = por %p319, %p320
    %p322 = scmp.ne.s32.totalorder %s314, %s317
    %p323 = scmp.eq.s32.totalorder %s21, 0
    %p324 = por %p322, %p323
    %p325 = scmp.ne.s32.totalorder %s314, %s317
    %p326 = scmp.eq.s32.totalorder %s26, 1
    %p327 = por %p325, %p326
    %p328 = scmp.ne.s32.totalorder %s317, %s318
    %p329 = scmp.eq.s32.totalorder %s26, 0
    %p330 = por %p328, %p329
    %p331 = scmp.ne.s32.totalorder %s317, %s318
    %p332 = scmp.eq.s32.totalorder %s27, 1
    %p333 = por %p331, %p332
    %p335 = scmp.ne.s32.totalorder %s318, %s334
    %p336 = scmp.eq.s32.totalorder %s27, 0
    %p337 = por %p335, %p336
    %s338 = ssub.s32 %s21, %s28
    %p339 = scmp.eq.s32.totalorder %s338, 0
    %s341 = sadd.s32 %s340, 1
    %s342 = scalar_select %p339, %s340, %s341
    %p345 = pneg %p339
    %p346 = scmp.eq.s32.totalorder %s21, 1
    %p347 = por %p345, %p346
    %p348 = scmp.ne.s32.totalorder %s340, %s343
    %p349 = scmp.eq.s32.totalorder %s21, 0
    %p350 = por %p348, %p349
    %p351 = scmp.ne.s32.totalorder %s340, %s343
    %p352 = scmp.eq.s32.totalorder %s26, 1
    %p353 = por %p351, %p352
    %p354 = scmp.ne.s32.totalorder %s343, %s344
    %p355 = scmp.eq.s32.totalorder %s26, 0
    %p356 = por %p354, %p355
    %p357 = scmp.ne.s32.totalorder %s343, %s344
    %p358 = scmp.eq.s32.totalorder %s27, 1
    %p359 = por %p357, %p358
    %p361 = scmp.ne.s32.totalorder %s344, %s360
    %p362 = scmp.eq.s32.totalorder %s27, 0
    %p363 = por %p361, %p362
    %p364 = scmp.le.s32.totalorder 1, %s21
    %p365 = scmp.lt.s32.totalorder %s21, 3
    %p366 = pnand %p364, %p365
    %p367 = pneg %p366
    // Predicated region
    $region9: #{efficientnet_features_forward.1} parent=5 // pred_check
      _
    $region10: #{efficientnet_features_forward.1} parent=5 // pred_check_branch
      %369 = sbr.rel (%p366) target = $region12
    $region11: #{efficientnet_features_forward.1} parent=5 // pred_region
      %s370 = ssub.s32 %s21, 1
      // Predicated region
      $region13: #{efficientnet_features_forward.1} parent=11 // pred_check
        %p371 = pneg %p68
      $region14: #{efficientnet_features_forward.1} parent=11 // pred_check_branch
        %373 = sbr.rel (%p371) target = $region16
      $region15: #{efficientnet_features_forward.1} parent=11 // pred_region
        _
      $region16: #{efficientnet_features_forward.1} parent=11 // pred_fallthru
        _
      // Predicated region
      $region17: #{efficientnet_features_forward.1} parent=11 // pred_check
        %p374 = pneg %p89
      $region18: #{efficientnet_features_forward.1} parent=11 // pred_check_branch
        %376 = sbr.rel (%p374) target = $region20
      $region19: #{efficientnet_features_forward.1} parent=11 // pred_region
        _
      $region20: #{efficientnet_features_forward.1} parent=11 // pred_fallthru
        _
      // Predicated region
      $region21: #{efficientnet_features_forward.1} parent=11 // pred_check
        %p377 = pneg %p110
      $region22: #{efficientnet_features_forward.1} parent=11 // pred_check_branch
        %379 = sbr.rel (%p377) target = $region24
      $region23: #{efficientnet_features_forward.1} parent=11 // pred_region
        _
      $region24: #{efficientnet_features_forward.1} parent=11 // pred_fallthru
        _
      // Predicated region
      $region25: #{efficientnet_features_forward.1} parent=11 // pred_check
        %p380 = pneg %p131
      $region26: #{efficientnet_features_forward.1} parent=11 // pred_check_branch
        %382 = sbr.rel (%p380) target = $region28
      $region27: #{efficientnet_features_forward.1} parent=11 // pred_region
        _
      $region28: #{efficientnet_features_forward.1} parent=11 // pred_fallthru
        _
      // Predicated region
      $region29: #{efficientnet_features_forward.1} parent=11 // pred_check
        %p383 = pneg %p152
      $region30: #{efficientnet_features_forward.1} parent=11 // pred_check_branch
        %385 = sbr.rel (%p383) target = $region32
      $region31: #{efficientnet_features_forward.1} parent=11 // pred_region
        _
      $region32: #{efficientnet_features_forward.1} parent=11 // pred_fallthru
        _
      // Predicated region
      $region33: #{efficientnet_features_forward.1} parent=11 // pred_check
        %p386 = pneg %p173
      $region34: #{efficientnet_features_forward.1} parent=11 // pred_check_branch
        %388 = sbr.rel (%p386) target = $region36
      $region35: #{efficientnet_features_forward.1} parent=11 // pred_region
        _
      $region36: #{efficientnet_features_forward.1} parent=11 // pred_fallthru
        _
      // Predicated region
      $region37: #{efficientnet_features_forward.1} parent=11 // pred_check
        %p389 = pneg %p194
      $region38: #{efficientnet_features_forward.1} parent=11 // pred_check_branch
        %391 = sbr.rel (%p389) target = $region40
      $region39: #{efficientnet_features_forward.1} parent=11 // pred_region
        _
      $region40: #{efficientnet_features_forward.1} parent=11 // pred_fallthru
        _
      // Predicated region
      $region41: #{efficientnet_features_forward.1} parent=11 // pred_check
        %p392 = pneg %p215
      $region42: #{efficientnet_features_forward.1} parent=11 // pred_check_branch
        %394 = sbr.rel (%p392) target = $region44
      $region43: #{efficientnet_features_forward.1} parent=11 // pred_region
        _
      $region44: #{efficientnet_features_forward.1} parent=11 // pred_fallthru
        _
      // Predicated region
      $region45: #{efficientnet_features_forward.1} parent=11 // pred_check
        %p395 = pneg %p236
      $region46: #{efficientnet_features_forward.1} parent=11 // pred_check_branch
        %397 = sbr.rel (%p395) target = $region48
      $region47: #{efficientnet_features_forward.1} parent=11 // pred_region
        _
      $region48: #{efficientnet_features_forward.1} parent=11 // pred_fallthru
        _
      // Predicated region
      $region49: #{efficientnet_features_forward.1} parent=11 // pred_check
        %p398 = pneg %p257
      $region50: #{efficientnet_features_forward.1} parent=11 // pred_check_branch
        %400 = sbr.rel (%p398) target = $region52
      $region51: #{efficientnet_features_forward.1} parent=11 // pred_region
        _
      $region52: #{efficientnet_features_forward.1} parent=11 // pred_fallthru
        _
      // Predicated region
      $region53: #{efficientnet_features_forward.1} parent=11 // pred_check
        %p401 = pneg %p278
      $region54: #{efficientnet_features_forward.1} parent=11 // pred_check_branch
        %403 = sbr.rel (%p401) target = $region56
      $region55: #{efficientnet_features_forward.1} parent=11 // pred_region
        _
      $region56: #{efficientnet_features_forward.1} parent=11 // pred_fallthru
        _
    $region12: #{efficientnet_features_forward.1} parent=5 // pred_fallthru
      _
    %p404 = scmp.lt.s32.totalorder %s21, 2
    // Predicated region
    $region57: #{efficientnet_features_forward.1} parent=5 // pred_check
      %p405 = pneg %p404
    $region58: #{efficientnet_features_forward.1} parent=5 // pred_check_branch
      %407 = sbr.rel (%p405) target = $region60
    $region59: #{efficientnet_features_forward.1} parent=5 // pred_region
      // Predicated region
      $region61: #{efficientnet_features_forward.1} parent=59 // pred_check
        %p408 = pneg %p41
      $region62: #{efficientnet_features_forward.1} parent=59 // pred_check_branch
        %410 = sbr.rel (%p408) target = $region64
      $region63: #{efficientnet_features_forward.1} parent=59 // pred_region
        %p411 = scmp.lt.s32.totalorder %s21, 1
        %s412 = scalar_select %p411, %s21, 1
        %s413 = smul.addr %s412, 8
        %s414 = smul.addr %s413, 4
        %s415 = scalar_lea.vmem %s0, %s414
      $region64: #{efficientnet_features_forward.1} parent=59 // pred_fallthru
        _
    $region60: #{efficientnet_features_forward.1} parent=5 // pred_fallthru
      _
    %p416 = scmp.le.s32.totalorder 1, %s21
    %p417 = scmp.lt.s32.totalorder %s21, 3
    %p418 = pnand %p416, %p417
    %p419 = pneg %p418
    // Predicated region
    $region65: #{efficientnet_features_forward.1} parent=5 // pred_check
      _
    $region66: #{efficientnet_features_forward.1} parent=5 // pred_check_branch
      %421 = sbr.rel (%p418) target = $region68
    $region67: #{efficientnet_features_forward.1} parent=5 // pred_region
      %s422 = ssub.s32 %s21, 1
      %p423 = scmp.lt.s32.totalorder %s26, 1
      %s424 = scalar_select %p423, %s26, 1
      %s425 = smul.addr %s424, 8
      %s426 = smul.addr %s425, 4
      %s427 = scalar_lea.vmem %s0, %s426
      %p428 = pneg %p47
      %p429 = pneg %p44
      %p430 = pneg %p68
      %p431 = pneg %p65
      %p432 = pneg %p89
      %p433 = pneg %p86
      %p434 = pneg %p110
      %p435 = pneg %p107
      %p436 = pneg %p131
      %p437 = pneg %p128
      %p438 = pneg %p152
      %p439 = pneg %p149
      %p440 = pneg %p173
      %p441 = pneg %p170
      %p442 = pneg %p194
      %p443 = pneg %p191
      %p444 = pneg %p215
      %p445 = pneg %p212
      %p446 = pneg %p236
      %p447 = pneg %p233
      %p448 = pneg %p257
      %p449 = pneg %p254
      %p450 = pneg %p278
      %p451 = pneg %p275
      %p452 = pneg %p304
      %p453 = pneg %p301
      %p454 = scmp.lt.s32.totalorder %s26, 1
      %s455 = scalar_select %p454, %s26, 1
      %s456 = smul.addr %s455, 2
      %s457 = smul.addr %s456, 8
      %s458 = scalar_lea.vmem %s12, %s457
      %p459 = pneg %p330
      %p460 = pneg %p327
      %p461 = scmp.lt.s32.totalorder %s26, 1
      %s462 = scalar_select %p461, %s26, 1
      %s463 = smul.addr %s462, 8
      %s464 = scalar_lea.vmem %s13, %s463
      %p465 = pneg %p356
      %p466 = pneg %p353
      %p467 = scmp.lt.s32.totalorder %s26, 1
      %s468 = scalar_select %p467, %s26, 1
      %s469 = smul.addr %s468, 3
      %s470 = scalar_lea.vmem %s14, %s469
      %p471 = scmp.lt.s32.totalorder %s26, 1
      %s472 = scalar_select %p471, %s26, 1
      %s473 = smul.addr %s472, 8
      %s474 = smul.addr %s473, 4
      %s475 = scalar_lea.vmem %s0, %s474
      %p476 = scmp.lt.s32.totalorder %s26, 1
      %s477 = scalar_select %p476, %s26, 1
      %s478 = smul.addr %s477, 2
      %s479 = smul.addr %s478, 8
      %s480 = scalar_lea.vmem %s12, %s479
      %p481 = scmp.lt.s32.totalorder %s26, 1
      %s482 = scalar_select %p481, %s26, 1
      %s483 = smul.addr %s482, 8
      %s484 = scalar_lea.vmem %s13, %s483
      %p485 = scmp.lt.s32.totalorder %s26, 1
      %s486 = scalar_select %p485, %s26, 1
      %s487 = smul.addr %s486, 3
      %s488 = scalar_lea.vmem %s14, %s487
      %v490 = vld [vmem:[%s475] sm:$0xf]
      %v491 = vld [vmem:[%s475 + $0x4] sm:$0xf]
      %v492 = vld [vmem:[%s475 + $0x8] sm:$0xf]
      %v493 = vld [vmem:[%s475 + $0xc] sm:$0xf]
      %v494 = vld [vmem:[%s475 + $0x10] sm:$0xf]
      %v495 = vld [vmem:[%s475 + $0x14] sm:$0xf]
      %v496 = vld [vmem:[%s475 + $0x18] sm:$0xf]
      %v497 = vld [vmem:[%s475 + $0x1c] sm:$0xf]
      %v498 = vld [vmem:[%s1] sm:$0xf]
      %v499 = vld [vmem:[%s1 + $0x4] sm:$0xf]
      %v500 = vld [vmem:[%s1 + $0x8] sm:$0xf]
      %v501 = vld [vmem:[%s1 + $0xc] sm:$0x3]
      %v510 = vunpack.c.l.b16 %v490
      %v511 = vunpack.c.l.b16 %v491
      %v512 = vunpack.c.l.b16 %v492
      %v513 = vunpack.c.l.b16 %v493
      %v514 = vunpack.c.l.b16 %v494
      %v515 = vunpack.c.l.b16 %v495
      %v516 = vunpack.c.l.b16 %v496
      %v517 = vunpack.c.l.b16 %v497
      %v518 = vpack.c.b16 %v511, %v510
      %v519 = vpack.c.b16 %v513, %v512
      %v520 = vpack.c.b16 %v515, %v514
      %v521 = vpack.c.b16 %v517, %v516
      %v526 = vunpack.c.l.b16 %v498
      %v527 = vunpack.c.l.b16 %v499
      %v528 = vunpack.c.l.b16 %v500
      %v529 = vunpack.c.l.b16 %v501
      %v530 = vpack.c.b16 %v527, %v526
      %v531 = vpack.c.b16 %v529, %v528
      %vm533 = vcmask 220160
      %v535 = vsel %vm533, %v518, 0
      %v538 = vsel %vm533, %v519, 0
      %v541 = vsel %vm533, %v520, 0
      %v544 = vsel %vm533, %v521, 0
      %vm546 = vcmask 1044480
      %vm547 = vcmask 1045504
      %v548 = vsel %vm546, 4294967295, 65535
      %v549 = vsel %vm547, %v548, 0
      %v551 = vand.u32 %v531, %v549
      %553 = vmatpush.bf16.msra.mxu0 0
      %554 = vmatpush.bf16.msra.mxu0 0
      %555 = vmatpush.bf16.msra.mxu0 0
      %556 = vmatpush.bf16.msra.mxu0 0
      %557 = vmatpush.bf16.msra.mxu0 0
      %558 = vmatpush.bf16.msra.mxu0 0
      %559 = vmatpush.bf16.msra.mxu0 %v551
      %560 = vmatpush.bf16.msra.mxu0 %v530
      %561 = vmatmul.bf16.gmra.mxu0 %v535
      %v562 = vpop.f32.mrf.mxu0
      %v563 = vadd.f32 0.0, %v562
      %v564 = vpop.f32.mrf.mxu0
      %v565 = vadd.f32 0.0, %v564
      %566 = vmatmul.bf16.gmra.mxu0 %v538
      %v567 = vpop.f32.mrf.mxu0
      %v568 = vadd.f32 0.0, %v567
      %v569 = vpop.f32.mrf.mxu0
      %v570 = vadd.f32 0.0, %v569
      %571 = vmatmul.bf16.gmra.mxu0 %v541
      %v572 = vpop.f32.mrf.mxu0
      %v573 = vadd.f32 0.0, %v572
      %v574 = vpop.f32.mrf.mxu0
      %v575 = vadd.f32 0.0, %v574
      %576 = vmatmul.bf16.gmra.mxu0 %v544
      %v577 = vpop.f32.mrf.mxu0
      %v578 = vadd.f32 0.0, %v577
      %v579 = vpop.f32.mrf.mxu0
      %v580 = vadd.f32 0.0, %v579
      %581 = vdwg.mxu0
      %v582 = vld [vmem:[%s3] sm:$0x1]
      %v583 = vperm.slane %v582, 0
      %v584 = vmul.f32 %v563, %v583
      %v585 = vmul.f32 %v565, %v583
      %v586 = vmul.f32 %v568, %v583
      %v587 = vmul.f32 %v570, %v583
      %v588 = vmul.f32 %v573, %v583
      %v589 = vmul.f32 %v575, %v583
      %v590 = vmul.f32 %v578, %v583
      %v591 = vmul.f32 %v580, %v583
      %v592 = vld [vmem:[%s3 + $0x1] sm:$0x1]
      %v593 = vperm.slane %v592, 0
      %v594 = vadd.f32 %v584, %v593
      %v595 = vadd.f32 %v585, %v593
      %v596 = vadd.f32 %v586, %v593
      %v597 = vadd.f32 %v587, %v593
      %v598 = vadd.f32 %v588, %v593
      %v599 = vadd.f32 %v589, %v593
      %v600 = vadd.f32 %v590, %v593
      %v601 = vadd.f32 %v591, %v593
      %v602 = vmax.f32 %v594, 0.0
      %v603 = vmax.f32 %v595, 0.0
      %v604 = vmax.f32 %v596, 0.0
      %v605 = vmax.f32 %v597, 0.0
      %v606 = vmax.f32 %v598, 0.0
      %v607 = vmax.f32 %v599, 0.0
      %v608 = vmax.f32 %v600, 0.0
      %v609 = vmax.f32 %v601, 0.0
      %v618 = vrot.slane %v603, 7
      %vm619 = vcmask 1041409
      %v620 = vsel %vm619, %v618, %v602
      %v621 = vrot.slane %v604, 6
      %vm622 = vcmask 1042434
      %v623 = vsel %vm622, %v621, %v620
      %v624 = vrot.slane %v605, 5
      %vm625 = vcmask 1043459
      %v626 = vsel %vm625, %v624, %v623
      %v627 = vrot.slane %v606, 4
      %vm628 = vcmask 1044484
      %v629 = vsel %vm628, %v627, %v626
      %v630 = vrot.slane %v607, 3
      %vm631 = vcmask 1045509
      %v632 = vsel %vm631, %v630, %v629
      %v633 = vrot.slane %v608, 2
      %vm634 = vcmask 1046534
      %v635 = vsel %vm634, %v633, %v632
      %v636 = vrot.slane %v609, 1
      %vm637 = vcmask 1047559
      %v638 = vsel %vm637, %v636, %v635
      %v640 = vrot.slane %v602, 1
      %v641 = vsel %vm619, %v603, %v640
      %v642 = vrot.slane %v604, 7
      %v643 = vsel %vm622, %v642, %v641
      %v644 = vrot.slane %v605, 6
      %v645 = vsel %vm625, %v644, %v643
      %v646 = vrot.slane %v606, 5
      %v647 = vsel %vm628, %v646, %v645
      %v648 = vrot.slane %v607, 4
      %v649 = vsel %vm631, %v648, %v647
      %v650 = vrot.slane %v608, 3
      %v651 = vsel %vm634, %v650, %v649
      %v652 = vrot.slane %v609, 2
      %v653 = vsel %vm637, %v652, %v651
      %654 = vrot.lane.b32.xlu0 %v653, 32
      %v655 = vpop.permute.xlu0 %654
      %v657 = vrot.slane %v602, 2
      %v658 = vrot.slane %v603, 1
      %v659 = vsel %vm619, %v658, %v657
      %v660 = vsel %vm622, %v604, %v659
      %v661 = vrot.slane %v605, 7
      %v662 = vsel %vm625, %v661, %v660
      %v663 = vrot.slane %v606, 6
      %v664 = vsel %vm628, %v663, %v662
      %v665 = vrot.slane %v607, 5
      %v666 = vsel %vm631, %v665, %v664
      %v667 = vrot.slane %v608, 4
      %v668 = vsel %vm634, %v667, %v666
      %v669 = vrot.slane %v609, 3
      %v670 = vsel %vm637, %v669, %v668
      %671 = vrot.lane.b32.xlu0 %v670, 64
      %v672 = vpop.permute.xlu0 %671
      %v674 = vrot.slane %v602, 3
      %v675 = vrot.slane %v603, 2
      %v676 = vsel %vm619, %v675, %v674
      %v677 = vrot.slane %v604, 1
      %v678 = vsel %vm622, %v677, %v676
      %v679 = vsel %vm625, %v605, %v678
      %v680 = vrot.slane %v606, 7
      %v681 = vsel %vm628, %v680, %v679
      %v682 = vrot.slane %v607, 6
      %v683 = vsel %vm631, %v682, %v681
      %v684 = vrot.slane %v608, 5
      %v685 = vsel %vm634, %v684, %v683
      %v686 = vrot.slane %v609, 4
      %v687 = vsel %vm637, %v686, %v685
      %688 = vrot.lane.b32.xlu0 %v687, 96
      %v689 = vpop.permute.xlu0 %688
      %v691 = vrot.slane %v602, 4
      %v692 = vrot.slane %v603, 3
      %v693 = vsel %vm619, %v692, %v691
      %v694 = vrot.slane %v604, 2
      %v695 = vsel %vm622, %v694, %v693
      %v696 = vrot.slane %v605, 1
      %v697 = vsel %vm625, %v696, %v695
      %v698 = vsel %vm628, %v606, %v697
      %v699 = vrot.slane %v607, 7
      %v700 = vsel %vm631, %v699, %v698
      %v701 = vrot.slane %v608, 6
      %v702 = vsel %vm634, %v701, %v700
      %v703 = vrot.slane %v609, 5
      %v704 = vsel %vm637, %v703, %v702
      %v706 = vrot.slane %v602, 5
      %v707 = vrot.slane %v603, 4
      %v708 = vsel %vm619, %v707, %v706
      %v709 = vrot.slane %v604, 3
      %v710 = vsel %vm622, %v709, %v708
      %v711 = vrot.slane %v605, 2
      %v712 = vsel %vm625, %v711, %v710
      %v713 = vrot.slane %v606, 1
      %v714 = vsel %vm628, %v713, %v712
      %v715 = vsel %vm631, %v607, %v714
      %v716 = vrot.slane %v608, 7
      %v717 = vsel %vm634, %v716, %v715
      %v718 = vrot.slane %v609, 6
      %v719 = vsel %vm637, %v718, %v717
      %720 = vrot.lane.b32.xlu0 %v719, 32
      %v721 = vpop.permute.xlu0 %720
      %v723 = vrot.slane %v602, 6
      %v724 = vrot.slane %v603, 5
      %v725 = vsel %vm619, %v724, %v723
      %v726 = vrot.slane %v604, 4
      %v727 = vsel %vm622, %v726, %v725
      %v728 = vrot.slane %v605, 3
      %v729 = vsel %vm625, %v728, %v727
      %v730 = vrot.slane %v606, 2
      %v731 = vsel %vm628, %v730, %v729
      %v732 = vrot.slane %v607, 1
      %v733 = vsel %vm631, %v732, %v731
      %v734 = vsel %vm634, %v608, %v733
      %v735 = vrot.slane %v609, 7
      %v736 = vsel %vm637, %v735, %v734
      %737 = vrot.lane.b32.xlu0 %v736, 64
      %v738 = vpop.permute.xlu0 %737
      %v740 = vrot.slane %v602, 7
      %v741 = vrot.slane %v603, 6
      %v742 = vsel %vm619, %v741, %v740
      %v743 = vrot.slane %v604, 5
      %v744 = vsel %vm622, %v743, %v742
      %v745 = vrot.slane %v605, 4
      %v746 = vsel %vm625, %v745, %v744
      %v747 = vrot.slane %v606, 3
      %v748 = vsel %vm628, %v747, %v746
      %v749 = vrot.slane %v607, 2
      %v750 = vsel %vm631, %v749, %v748
      %v751 = vrot.slane %v608, 1
      %v752 = vsel %vm634, %v751, %v750
      %v753 = vsel %vm637, %v609, %v752
      %754 = vrot.lane.b32.xlu0 %v753, 96
      %v755 = vpop.permute.xlu0 %754
      %vm757 = vcmask 261120
      %v758 = vsel %vm757, %v638, %v655
      %vm759 = vcmask 523264
      %v760 = vsel %vm759, %v758, %v672
      %vm761 = vcmask 785408
      %v762 = vsel %vm761, %v760, %v689
      %v763 = vsel %vm757, %v704, %v721
      %v764 = vsel %vm759, %v763, %v738
      %v765 = vsel %vm761, %v764, %v755
      %766 = vst [vmem:[%s480] sm:$0xff] %v762
      %767 = vst [vmem:[%s480 + $0x8] sm:$0xff] %v765
      %768 = vst.msk [vmem:[#allocation2] sm:$0xff] %vm757, 0.0
      %vm769 = vcmask 254976
      %770 = vst.msk [vmem:[#allocation2 + $0x8] sm:$0x3] %vm769, 0.0
      %s771 = scalar_lea.vmem [#allocation2], 144
      %772 = vst.msk [vmem:[%s771] sm:$0xff] %vm757, 0.0
      %773 = vst.msk [vmem:[%s771 + $0x8] sm:$0x3] %vm769, 0.0
      %vm774 = vcmask 253952
      %775 = vst.msk [vmem:[#allocation2] sm:$0x1] %vm774, 0.0
      %776 = vst.msk [vmem:[#allocation2 + $0x10] sm:$0x1] %vm774, 0.0
      %777 = vst.msk [vmem:[#allocation2 + $0x20] sm:$0x1] %vm774, 0.0
      %778 = vst.msk [vmem:[#allocation2 + $0x30] sm:$0x1] %vm774, 0.0
      %779 = vst.msk [vmem:[#allocation2 + $0x40] sm:$0x1] %vm774, 0.0
      %780 = vst.msk [vmem:[#allocation2 + $0x50] sm:$0x1] %vm774, 0.0
      %781 = vst.msk [vmem:[#allocation2 + $0x60] sm:$0x1] %vm774, 0.0
      %782 = vst.msk [vmem:[#allocation2 + $0x70] sm:$0x1] %vm774, 0.0
      %783 = vst.msk [vmem:[#allocation2 + $0x80] sm:$0x1] %vm774, 0.0
      %784 = vst.msk [vmem:[#allocation2 + $0x90] sm:$0x1] %vm774, 0.0
      %785 = vst.msk [vmem:[#allocation2 + $0x9] sm:$0x1] %vm774, 0.0
      %786 = vst.msk [vmem:[#allocation2 + $0x19] sm:$0x1] %vm774, 0.0
      %787 = vst.msk [vmem:[#allocation2 + $0x29] sm:$0x1] %vm774, 0.0
      %788 = vst.msk [vmem:[#allocation2 + $0x39] sm:$0x1] %vm774, 0.0
      %789 = vst.msk [vmem:[#allocation2 + $0x49] sm:$0x1] %vm774, 0.0
      %790 = vst.msk [vmem:[#allocation2 + $0x59] sm:$0x1] %vm774, 0.0
      %791 = vst.msk [vmem:[#allocation2 + $0x69] sm:$0x1] %vm774, 0.0
      %792 = vst.msk [vmem:[#allocation2 + $0x79] sm:$0x1] %vm774, 0.0
      %793 = vst.msk [vmem:[#allocation2 + $0x89] sm:$0x1] %vm774, 0.0
      %794 = vst.msk [vmem:[#allocation2 + $0x99] sm:$0x1] %vm774, 0.0
      %s795 = scalar_lea.vmem [#allocation2], 16
      %796 = vst.msk [vmem:[%s795 + $0x1] sm:$0xff] %vm757, %v602
      %797 = vst.msk [vmem:[%s795 + $0x11] sm:$0xff] %vm757, %v603
      %798 = vst.msk [vmem:[%s795 + $0x21] sm:$0xff] %vm757, %v604
      %799 = vst.msk [vmem:[%s795 + $0x31] sm:$0xff] %vm757, %v605
      %800 = vst.msk [vmem:[%s795 + $0x41] sm:$0xff] %vm757, %v606
      %801 = vst.msk [vmem:[%s795 + $0x51] sm:$0xff] %vm757, %v607
      %802 = vst.msk [vmem:[%s795 + $0x61] sm:$0xff] %vm757, %v608
      %803 = vst.msk [vmem:[%s795 + $0x71] sm:$0xff] %vm757, %v609
      %v804 = vld [vmem:[#allocation2] sm:$0xff]
      %v805 = vld [vmem:[#allocation2 + $0x10] sm:$0xff]
      %v806 = vld [vmem:[#allocation2 + $0x20] sm:$0xff]
      %v807 = vld [vmem:[#allocation2 + $0x30] sm:$0xff]
      %v808 = vld [vmem:[#allocation2 + $0x40] sm:$0xff]
      %v809 = vld [vmem:[#allocation2 + $0x50] sm:$0xff]
      %v810 = vld [vmem:[#allocation2 + $0x60] sm:$0xff]
      %v811 = vld [vmem:[#allocation2 + $0x70] sm:$0xff]
      %v812 = vld [vmem:[%s2] sm:$0x1]
      %v813 = vperm.slane %v812, 0
      %v814 = vmul.f32 %v804, %v813
      %v815 = vmul.f32 %v805, %v813
      %v816 = vmul.f32 %v806, %v813
      %v817 = vmul.f32 %v807, %v813
      %v818 = vmul.f32 %v808, %v813
      %v819 = vmul.f32 %v809, %v813
      %v820 = vmul.f32 %v810, %v813
      %v821 = vmul.f32 %v811, %v813
      %v822 = vadd.f32 %v814, 0.0
      %v823 = vadd.f32 %v815, 0.0
      %v824 = vadd.f32 %v816, 0.0
      %v825 = vadd.f32 %v817, 0.0
      %v826 = vadd.f32 %v818, 0.0
      %v827 = vadd.f32 %v819, 0.0
      %v828 = vadd.f32 %v820, 0.0
      %v829 = vadd.f32 %v821, 0.0
      %v830 = vld [vmem:[#allocation2 + $0x1] sm:$0xff]
      %v831 = vld [vmem:[#allocation2 + $0x11] sm:$0xff]
      %v832 = vld [vmem:[#allocation2 + $0x21] sm:$0xff]
      %v833 = vld [vmem:[#allocation2 + $0x31] sm:$0xff]
      %v834 = vld [vmem:[#allocation2 + $0x41] sm:$0xff]
      %v835 = vld [vmem:[#allocation2 + $0x51] sm:$0xff]
      %v836 = vld [vmem:[#allocation2 + $0x61] sm:$0xff]
      %v837 = vld [vmem:[#allocation2 + $0x71] sm:$0xff]
      %v838 = vld [vmem:[%s2 + $0x1] sm:$0x1]
      %v839 = vperm.slane %v838, 0
      %v840 = vmul.f32 %v830, %v839
      %v841 = vmul.f32 %v831, %v839
      %v842 = vmul.f32 %v832, %v839
      %v843 = vmul.f32 %v833, %v839
      %v844 = vmul.f32 %v834, %v839
      %v845 = vmul.f32 %v835, %v839
      %v846 = vmul.f32 %v836, %v839
      %v847 = vmul.f32 %v837, %v839
      %v848 = vadd.f32 %v822, %v840
      %v849 = vadd.f32 %v823, %v841
      %v850 = vadd.f32 %v824, %v842
      %v851 = vadd.f32 %v825, %v843
      %v852 = vadd.f32 %v826, %v844
      %v853 = vadd.f32 %v827, %v845
      %v854 = vadd.f32 %v828, %v846
      %v855 = vadd.f32 %v829, %v847
      %v856 = vld [vmem:[#allocation2 + $0x2] sm:$0xff]
      %v857 = vld [vmem:[#allocation2 + $0x12] sm:$0xff]
      %v858 = vld [vmem:[#allocation2 + $0x22] sm:$0xff]
      %v859 = vld [vmem:[#allocation2 + $0x32] sm:$0xff]
      %v860 = vld [vmem:[#allocation2 + $0x42] sm:$0xff]
      %v861 = vld [vmem:[#allocation2 + $0x52] sm:$0xff]
      %v862 = vld [vmem:[#allocation2 + $0x62] sm:$0xff]
      %v863 = vld [vmem:[#allocation2 + $0x72] sm:$0xff]
      %v864 = vld [vmem:[%s2 + $0x2] sm:$0x1]
      %v865 = vperm.slane %v864, 0
      %v866 = vmul.f32 %v856, %v865
      %v867 = vmul.f32 %v857, %v865
      %v868 = vmul.f32 %v858, %v865
      %v869 = vmul.f32 %v859, %v865
      %v870 = vmul.f32 %v860, %v865
      %v871 = vmul.f32 %v861, %v865
      %v872 = vmul.f32 %v862, %v865
      %v873 = vmul.f32 %v863, %v865
      %v874 = vadd.f32 %v848, %v866
      %v875 = vadd.f32 %v849, %v867
      %v876 = vadd.f32 %v850, %v868
      %v877 = vadd.f32 %v851, %v869
      %v878 = vadd.f32 %v852, %v870
      %v879 = vadd.f32 %v853, %v871
      %v880 = vadd.f32 %v854, %v872
      %v881 = vadd.f32 %v855, %v873
      %v882 = vld [vmem:[%s795] sm:$0xff]
      %v883 = vld [vmem:[%s795 + $0x10] sm:$0xff]
      %v884 = vld [vmem:[%s795 + $0x20] sm:$0xff]
      %v885 = vld [vmem:[%s795 + $0x30] sm:$0xff]
      %v886 = vld [vmem:[%s795 + $0x40] sm:$0xff]
      %v887 = vld [vmem:[%s795 + $0x50] sm:$0xff]
      %v888 = vld [vmem:[%s795 + $0x60] sm:$0xff]
      %v889 = vld [vmem:[%s795 + $0x70] sm:$0xff]
      %v890 = vld [vmem:[%s2 + $0x3] sm:$0x1]
      %v891 = vperm.slane %v890, 0
      %v892 = vmul.f32 %v882, %v891
      %v893 = vmul.f32 %v883, %v891
      %v894 = vmul.f32 %v884, %v891
      %v895 = vmul.f32 %v885, %v891
      %v896 = vmul.f32 %v886, %v891
      %v897 = vmul.f32 %v887, %v891
      %v898 = vmul.f32 %v888, %v891
      %v899 = vmul.f32 %v889, %v891
      %v900 = vadd.f32 %v874, %v892
      %v901 = vadd.f32 %v875, %v893
      %v902 = vadd.f32 %v876, %v894
      %v903 = vadd.f32 %v877, %v895
      %v904 = vadd.f32 %v878, %v896
      %v905 = vadd.f32 %v879, %v897
      %v906 = vadd.f32 %v880, %v898
      %v907 = vadd.f32 %v881, %v899
      %v908 = vld [vmem:[%s795 + $0x1] sm:$0xff]
      %v909 = vld [vmem:[%s795 + $0x11] sm:$0xff]
      %v910 = vld [vmem:[%s795 + $0x21] sm:$0xff]
      %v911 = vld [vmem:[%s795 + $0x31] sm:$0xff]
      %v912 = vld [vmem:[%s795 + $0x41] sm:$0xff]
      %v913 = vld [vmem:[%s795 + $0x51] sm:$0xff]
      %v914 = vld [vmem:[%s795 + $0x61] sm:$0xff]
      %v915 = vld [vmem:[%s795 + $0x71] sm:$0xff]
      %v916 = vld [vmem:[%s2 + $0x4] sm:$0x1]
      %v917 = vperm.slane %v916, 0
      %v918 = vmul.f32 %v908, %v917
      %v919 = vmul.f32 %v909, %v917
      %v920 = vmul.f32 %v910, %v917
      %v921 = vmul.f32 %v911, %v917
      %v922 = vmul.f32 %v912, %v917
      %v923 = vmul.f32 %v913, %v917
      %v924 = vmul.f32 %v914, %v917
      %v925 = vmul.f32 %v915, %v917
      %v926 = vadd.f32 %v900, %v918
      %v927 = vadd.f32 %v901, %v919
      %v928 = vadd.f32 %v902, %v920
      %v929 = vadd.f32 %v903, %v921
      %v930 = vadd.f32 %v904, %v922
      %v931 = vadd.f32 %v905, %v923
      %v932 = vadd.f32 %v906, %v924
      %v933 = vadd.f32 %v907, %v925
      %v934 = vld [vmem:[%s795 + $0x2] sm:$0xff]
      %v935 = vld [vmem:[%s795 + $0x12] sm:$0xff]
      %v936 = vld [vmem:[%s795 + $0x22] sm:$0xff]
      %v937 = vld [vmem:[%s795 + $0x32] sm:$0xff]
      %v938 = vld [vmem:[%s795 + $0x42] sm:$0xff]
      %v939 = vld [vmem:[%s795 + $0x52] sm:$0xff]
      %v940 = vld [vmem:[%s795 + $0x62] sm:$0xff]
      %v941 = vld [vmem:[%s795 + $0x72] sm:$0xff]
      %v942 = vld [vmem:[%s2 + $0x5] sm:$0x1]
      %v943 = vperm.slane %v942, 0
      %v944 = vmul.f32 %v934, %v943
      %v945 = vmul.f32 %v935, %v943
      %v946 = vmul.f32 %v936, %v943
      %v947 = vmul.f32 %v937, %v943
      %v948 = vmul.f32 %v938, %v943
      %v949 = vmul.f32 %v939, %v943
      %v950 = vmul.f32 %v940, %v943
      %v951 = vmul.f32 %v941, %v943
      %v952 = vadd.f32 %v926, %v944
      %v953 = vadd.f32 %v927, %v945
      %v954 = vadd.f32 %v928, %v946
      %v955 = vadd.f32 %v929, %v947
      %v956 = vadd.f32 %v930, %v948
      %v957 = vadd.f32 %v931, %v949
      %v958 = vadd.f32 %v932, %v950
      %v959 = vadd.f32 %v933, %v951
      %s960 = scalar_lea.vmem [#allocation2], 32
      %v961 = vld [vmem:[%s960] sm:$0xff]
      %v962 = vld [vmem:[%s960 + $0x10] sm:$0xff]
      %v963 = vld [vmem:[%s960 + $0x20] sm:$0xff]
      %v964 = vld [vmem:[%s960 + $0x30] sm:$0xff]
      %v965 = vld [vmem:[%s960 + $0x40] sm:$0xff]
      %v966 = vld [vmem:[%s960 + $0x50] sm:$0xff]
      %v967 = vld [vmem:[%s960 + $0x60] sm:$0xff]
      %v968 = vld [vmem:[%s960 + $0x70] sm:$0xff]
      %v969 = vld [vmem:[%s2 + $0x6] sm:$0x1]
      %v970 = vperm.slane %v969, 0
      %v971 = vmul.f32 %v961, %v970
      %v972 = vmul.f32 %v962, %v970
      %v973 = vmul.f32 %v963, %v970
      %v974 = vmul.f32 %v964, %v970
      %v975 = vmul.f32 %v965, %v970
      %v976 = vmul.f32 %v966, %v970
      %v977 = vmul.f32 %v967, %v970
      %v978 = vmul.f32 %v968, %v970
      %v979 = vadd.f32 %v952, %v971
      %v980 = vadd.f32 %v953, %v972
      %v981 = vadd.f32 %v954, %v973
      %v982 = vadd.f32 %v955, %v974
      %v983 = vadd.f32 %v956, %v975
      %v984 = vadd.f32 %v957, %v976
      %v985 = vadd.f32 %v958, %v977
      %v986 = vadd.f32 %v959, %v978
      %v987 = vld [vmem:[%s960 + $0x1] sm:$0xff]
      %v988 = vld [vmem:[%s960 + $0x11] sm:$0xff]
      %v989 = vld [vmem:[%s960 + $0x21] sm:$0xff]
      %v990 = vld [vmem:[%s960 + $0x31] sm:$0xff]
      %v991 = vld [vmem:[%s960 + $0x41] sm:$0xff]
      %v992 = vld [vmem:[%s960 + $0x51] sm:$0xff]
      %v993 = vld [vmem:[%s960 + $0x61] sm:$0xff]
      %v994 = vld [vmem:[%s960 + $0x71] sm:$0xff]
      %v995 = vld [vmem:[%s2 + $0x7] sm:$0x1]
      %v996 = vperm.slane %v995, 0
      %v997 = vmul.f32 %v987, %v996
      %v998 = vmul.f32 %v988, %v996
      %v999 = vmul.f32 %v989, %v996
      %v1000 = vmul.f32 %v990, %v996
      %v1001 = vmul.f32 %v991, %v996
      %v1002 = vmul.f32 %v992, %v996
      %v1003 = vmul.f32 %v993, %v996
      %v1004 = vmul.f32 %v994, %v996
      %v1005 = vadd.f32 %v979, %v997
      %v1006 = vadd.f32 %v980, %v998
      %v1007 = vadd.f32 %v981, %v999
      %v1008 = vadd.f32 %v982, %v1000
      %v1009 = vadd.f32 %v983, %v1001
      %v1010 = vadd.f32 %v984, %v1002
      %v1011 = vadd.f32 %v985, %v1003
      %v1012 = vadd.f32 %v986, %v1004
      %v1013 = vld [vmem:[%s960 + $0x2] sm:$0xff]
      %v1014 = vld [vmem:[%s960 + $0x12] sm:$0xff]
      %v1015 = vld [vmem:[%s960 + $0x22] sm:$0xff]
      %v1016 = vld [vmem:[%s960 + $0x32] sm:$0xff]
      %v1017 = vld [vmem:[%s960 + $0x42] sm:$0xff]
      %v1018 = vld [vmem:[%s960 + $0x52] sm:$0xff]
      %v1019 = vld [vmem:[%s960 + $0x62] sm:$0xff]
      %v1020 = vld [vmem:[%s960 + $0x72] sm:$0xff]
      %v1021 = vld [vmem:[%s2 + $0x8] sm:$0x1]
      %v1022 = vperm.slane %v1021, 0
      %v1023 = vmul.f32 %v1013, %v1022
      %v1024 = vmul.f32 %v1014, %v1022
      %v1025 = vmul.f32 %v1015, %v1022
      %v1026 = vmul.f32 %v1016, %v1022
      %v1027 = vmul.f32 %v1017, %v1022
      %v1028 = vmul.f32 %v1018, %v1022
      %v1029 = vmul.f32 %v1019, %v1022
      %v1030 = vmul.f32 %v1020, %v1022
      %v1031 = vadd.f32 %v1005, %v1023
      %v1032 = vadd.f32 %v1006, %v1024
      %v1033 = vadd.f32 %v1007, %v1025
      %v1034 = vadd.f32 %v1008, %v1026
      %v1035 = vadd.f32 %v1009, %v1027
      %v1036 = vadd.f32 %v1010, %v1028
      %v1037 = vadd.f32 %v1011, %v1029
      %v1038 = vadd.f32 %v1012, %v1030
      %v1039 = vld [vmem:[%s3 + $0x2] sm:$0x1]
      %v1040 = vperm.slane %v1039, 0
      %v1041 = vmul.f32 %v1031, %v1040
      %v1042 = vmul.f32 %v1032, %v1040
      %v1043 = vmul.f32 %v1033, %v1040
      %v1044 = vmul.f32 %v1034, %v1040
      %v1045 = vmul.f32 %v1035, %v1040
      %v1046 = vmul.f32 %v1036, %v1040
      %v1047 = vmul.f32 %v1037, %v1040
      %v1048 = vmul.f32 %v1038, %v1040
      %v1049 = vld [vmem:[%s3 + $0x3] sm:$0x1]
      %v1050 = vperm.slane %v1049, 0
      %v1051 = vadd.f32 %v1041, %v1050
      %v1052 = vadd.f32 %v1042, %v1050
      %v1053 = vadd.f32 %v1043, %v1050
      %v1054 = vadd.f32 %v1044, %v1050
      %v1055 = vadd.f32 %v1045, %v1050
      %v1056 = vadd.f32 %v1046, %v1050
      %v1057 = vadd.f32 %v1047, %v1050
      %v1058 = vadd.f32 %v1048, %v1050
      %v1059 = vmax.f32 %v1051, 0.0
      %v1060 = vmax.f32 %v1052, 0.0
      %v1061 = vmax.f32 %v1053, 0.0
      %v1062 = vmax.f32 %v1054, 0.0
      %v1063 = vmax.f32 %v1055, 0.0
      %v1064 = vmax.f32 %v1056, 0.0
      %v1065 = vmax.f32 %v1057, 0.0
      %v1066 = vmax.f32 %v1058, 0.0
      %v1067 = vsel %vm757, %v1059, 0.0
      %v1068 = vsel %vm757, %v1060, 0.0
      %v1069 = vadd.f32 %v1067, %v1068
      %v1070 = vsel %vm757, %v1061, 0.0
      %v1071 = vadd.f32 %v1069, %v1070
      %v1072 = vsel %vm757, %v1062, 0.0
      %v1073 = vadd.f32 %v1071, %v1072
      %v1074 = vsel %vm757, %v1063, 0.0
      %v1075 = vadd.f32 %v1073, %v1074
      %v1076 = vsel %vm757, %v1064, 0.0
      %v1077 = vadd.f32 %v1075, %v1076
      %v1078 = vsel %vm757, %v1065, 0.0
      %v1079 = vadd.f32 %v1077, %v1078
      %v1080 = vsel %vm757, %v1066, 0.0
      %v1081 = vadd.f32 %v1079, %v1080
      %v1082 = vrot.slane %v1081, 4
      %v1083 = vadd.f32 %v1081, %v1082
      %v1084 = vrot.slane %v1083, 2
      %v1085 = vadd.f32 %v1083, %v1084
      %v1086 = vrot.slane %v1085, 1
      %v1087 = vadd.f32 %v1085, %v1086
      %v1088 = vrcp.pop 64.0
      %v1089 = vmul.f32 64.0, %v1088
      %v1090 = vsub.f32 1.0, %v1089
      %v1091 = vmul.f32 %v1088, %v1090
      %v1092 = vadd.f32 %v1088, %v1091
      %vm1093 = vweird.f32 %v1088
      %v1094 = vsel %vm1093, %v1088, %v1092
      %v1095 = vmul.f32 %v1087, %v1094
      %v1096 = vld [vmem:[%s8] sm:$0x1]
      %v1097 = vld [vmem:[%s8 + $0x1] sm:$0x1]
      %v1098 = vlaneseq
      %v1099 = vshrl.u32 %v1098, 7
      %1101 = vset.pattern.permute.xlu0 %v1099
      %1102 = vperm.xlu0 %1101, %v1095
      %v1103 = vpop.permute.xlu0 %1102
      %v1104 = vlaneseq
      %v1105 = vshrl.u32 %v1104, 7
      %v1106 = vadd.s32 %v1105, 8
      %1107 = vset.pattern.permute.xlu0 %v1106
      %1108 = vperm.xlu0 %1107, %v1095
      %v1109 = vpop.permute.xlu0 %1108
      %v1110 = vlaneseq
      %v1111 = vshrl.u32 %v1110, 7
      %v1112 = vadd.s32 %v1111, 16
      %1113 = vset.pattern.permute.xlu0 %v1112
      %1114 = vperm.xlu0 %1113, %v1095
      %v1115 = vpop.permute.xlu0 %1114
      %v1116 = vlaneseq
      %v1117 = vshrl.u32 %v1116, 7
      %v1118 = vadd.s32 %v1117, 24
      %1119 = vset.pattern.permute.xlu0 %v1118
      %1120 = vperm.xlu0 %1119, %v1095
      %v1121 = vpop.permute.xlu0 %1120
      %v1122 = vld [vmem:[%s4] sm:$0xff]
      %v1123 = vld [vmem:[%s4 + $0x8] sm:$0xff]
      %v1124 = vld [vmem:[%s4 + $0x10] sm:$0xff]
      %v1125 = vld [vmem:[%s4 + $0x18] sm:$0xff]
      %v1126 = vmul.f32 %v1103, %v1122
      %v1127 = vmul.f32 %v1109, %v1123
      %v1128 = vmul.f32 %v1115, %v1124
      %v1129 = vmul.f32 %v1121, %v1125
      %vm1130 = vcmask 64512
      %v1131 = vsel %vm1130, %v1126, 0.0
      %v1132 = vsel %vm1130, %v1127, 0.0
      %v1133 = vadd.f32 %v1131, %v1132
      %v1134 = vsel %vm1130, %v1128, 0.0
      %v1135 = vadd.f32 %v1133, %v1134
      %v1136 = vsel %vm1130, %v1129, 0.0
      %v1137 = vadd.f32 %v1135, %v1136
      %v1138 = vrot.slane %v1137, 4
      %v1139 = vadd.f32 %v1137, %v1138
      %v1140 = vrot.slane %v1139, 2
      %v1141 = vadd.f32 %v1139, %v1140
      %v1142 = vrot.slane %v1141, 1
      %v1143 = vadd.f32 %v1141, %v1142
      %v1144 = vadd.f32 %v1143, %v1096
      %v1145 = vmax.f32 %v1144, 0.0
      %v1146 = vperm.slane %v1145, 0
      %v1147 = vlaneseq
      %v1148 = vshrl.u32 %v1147, 7
      %1150 = vset.pattern.permute.xlu0 %v1148
      %1151 = vperm.xlu0 %1150, %v1146
      %v1152 = vpop.permute.xlu0 %1151
      %v1153 = vld [vmem:[%s5] sm:$0xff]
      %v1154 = vmul.f32 %v1152, %v1153
      %v1155 = vsel %vm757, %v1154, 0.0
      %v1156 = vrot.slane %v1155, 4
      %v1157 = vadd.f32 %v1155, %v1156
      %v1158 = vrot.slane %v1157, 2
      %v1159 = vadd.f32 %v1157, %v1158
      %v1160 = vrot.slane %v1159, 1
      %v1161 = vadd.f32 %v1159, %v1160
      %v1162 = vadd.f32 %v1161, %v1097
      %v1163 = vxor.u32 %v1162, 2147483648
      %v1164 = vmul.f32 %v1163, 1.442695
      %v1165 = vpow.pop %v1164
      %v1166 = vadd.f32 %v1165, 1.0
      %v1167 = vrcp.pop %v1166
      %v1168 = vmul.f32 %v1166, %v1167
      %v1169 = vsub.f32 1.0, %v1168
      %v1170 = vmul.f32 %v1167, %v1169
      %v1171 = vadd.f32 %v1167, %v1170
      %vm1172 = vweird.f32 %v1166
      %vm1173 = vweird.f32 %v1167
      %vm1174 = vmor %vm1172, %vm1173
      %v1175 = vsel %vm1174, %v1167, %v1171
      %v1176 = vand.u32 2147483647, %v1166
      %vm1177 = vcmp.eq.f32.partialorder %v1176, 8.507059e+37
      %v1178 = vand.u32 %v1166, 2147483648
      %v1179 = vor.u32 1.1754944e-38, %v1178
      %v1180 = vsel %vm1177, %v1179, %v1175
      %v1181 = vmul.f32 1.0, %v1180
      %v1182 = vperm.slane %v1181, 0
      %v1183 = vmul.f32 %v1059, %v1182
      %v1184 = vmul.f32 %v1060, %v1182
      %v1185 = vmul.f32 %v1061, %v1182
      %v1186 = vmul.f32 %v1062, %v1182
      %v1187 = vmul.f32 %v1063, %v1182
      %v1188 = vmul.f32 %v1064, %v1182
      %v1189 = vmul.f32 %v1065, %v1182
      %v1190 = vmul.f32 %v1066, %v1182
      %v1191 = vpack.c.bf16 %v1184, %v1183
      %v1192 = vpack.c.bf16 %v1186, %v1185
      %v1193 = vpack.c.bf16 %v1188, %v1187
      %v1194 = vpack.c.bf16 %v1190, %v1189
      %v1195 = vld [vmem:[%s9] sm:$0xf]
      %v1196 = vld [vmem:[%s9 + $0x4] sm:$0xf]
      %v1197 = vld [vmem:[%s9 + $0x8] sm:$0xf]
      %v1198 = vld [vmem:[%s9 + $0xc] sm:$0xf]
      %v1203 = vunpack.c.l.b16 %v1195
      %v1204 = vunpack.c.l.b16 %v1196
      %v1205 = vunpack.c.l.b16 %v1197
      %v1206 = vunpack.c.l.b16 %v1198
      %v1207 = vpack.c.b16 %v1204, %v1203
      %v1208 = vpack.c.b16 %v1206, %v1205
      %v1212 = vsel %vm757, %v1191, 0
      %v1215 = vsel %vm757, %v1192, 0
      %v1218 = vsel %vm757, %v1193, 0
      %v1221 = vsel %vm757, %v1194, 0
      %1223 = vmatpush.bf16.msra.mxu0 0
      %1224 = vmatpush.bf16.msra.mxu0 0
      %1225 = vmatpush.bf16.msra.mxu0 0
      %1226 = vmatpush.bf16.msra.mxu0 0
      %1227 = vmatpush.bf16.msra.mxu0 0
      %1228 = vmatpush.bf16.msra.mxu0 0
      %1229 = vmatpush.bf16.msra.mxu0 %v1208
      %1230 = vmatpush.bf16.msra.mxu0 %v1207
      %1231 = vmatmul.bf16.gmra.mxu0 %v1212
      %v1232 = vpop.f32.mrf.mxu0
      %v1233 = vadd.f32 0.0, %v1232
      %v1234 = vpop.f32.mrf.mxu0
      %v1235 = vadd.f32 0.0, %v1234
      %1236 = vmatmul.bf16.gmra.mxu0 %v1215
      %v1237 = vpop.f32.mrf.mxu0
      %v1238 = vadd.f32 0.0, %v1237
      %v1239 = vpop.f32.mrf.mxu0
      %v1240 = vadd.f32 0.0, %v1239
      %1241 = vmatmul.bf16.gmra.mxu0 %v1218
      %v1242 = vpop.f32.mrf.mxu0
      %v1243 = vadd.f32 0.0, %v1242
      %v1244 = vpop.f32.mrf.mxu0
      %v1245 = vadd.f32 0.0, %v1244
      %1246 = vmatmul.bf16.gmra.mxu0 %v1221
      %v1247 = vpop.f32.mrf.mxu0
      %v1248 = vadd.f32 0.0, %v1247
      %v1249 = vpop.f32.mrf.mxu0
      %v1250 = vadd.f32 0.0, %v1249
      %1251 = vdwg.mxu0
      %v1252 = vld [vmem:[%s3 + $0x4] sm:$0x1]
      %v1253 = vperm.slane %v1252, 0
      %v1254 = vmul.f32 %v1233, %v1253
      %v1255 = vmul.f32 %v1235, %v1253
      %v1256 = vmul.f32 %v1238, %v1253
      %v1257 = vmul.f32 %v1240, %v1253
      %v1258 = vmul.f32 %v1243, %v1253
      %v1259 = vmul.f32 %v1245, %v1253
      %v1260 = vmul.f32 %v1248, %v1253
      %v1261 = vmul.f32 %v1250, %v1253
      %v1262 = vld [vmem:[%s3 + $0x5] sm:$0x1]
      %v1263 = vperm.slane %v1262, 0
      %v1264 = vadd.f32 %v1254, %v1263
      %v1265 = vadd.f32 %v1255, %v1263
      %v1266 = vadd.f32 %v1256, %v1263
      %v1267 = vadd.f32 %v1257, %v1263
      %v1268 = vadd.f32 %v1258, %v1263
      %v1269 = vadd.f32 %v1259, %v1263
      %v1270 = vadd.f32 %v1260, %v1263
      %v1271 = vadd.f32 %v1261, %v1263
      %v1280 = vrot.slane %v1265, 7
      %v1281 = vsel %vm619, %v1280, %v1264
      %v1282 = vrot.slane %v1266, 6
      %v1283 = vsel %vm622, %v1282, %v1281
      %v1284 = vrot.slane %v1267, 5
      %v1285 = vsel %vm625, %v1284, %v1283
      %v1286 = vrot.slane %v1268, 4
      %v1287 = vsel %vm628, %v1286, %v1285
      %v1288 = vrot.slane %v1269, 3
      %v1289 = vsel %vm631, %v1288, %v1287
      %v1290 = vrot.slane %v1270, 2
      %v1291 = vsel %vm634, %v1290, %v1289
      %v1292 = vrot.slane %v1271, 1
      %v1293 = vsel %vm637, %v1292, %v1291
      %v1295 = vrot.slane %v1264, 1
      %v1296 = vsel %vm619, %v1265, %v1295
      %v1297 = vrot.slane %v1266, 7
      %v1298 = vsel %vm622, %v1297, %v1296
      %v1299 = vrot.slane %v1267, 6
      %v1300 = vsel %vm625, %v1299, %v1298
      %v1301 = vrot.slane %v1268, 5
      %v1302 = vsel %vm628, %v1301, %v1300
      %v1303 = vrot.slane %v1269, 4
      %v1304 = vsel %vm631, %v1303, %v1302
      %v1305 = vrot.slane %v1270, 3
      %v1306 = vsel %vm634, %v1305, %v1304
      %v1307 = vrot.slane %v1271, 2
      %v1308 = vsel %vm637, %v1307, %v1306
      %1309 = vrot.lane.b32.xlu0 %v1308, 16
      %v1310 = vpop.permute.xlu0 %1309
      %v1312 = vrot.slane %v1264, 2
      %v1313 = vrot.slane %v1265, 1
      %v1314 = vsel %vm619, %v1313, %v1312
      %v1315 = vsel %vm622, %v1266, %v1314
      %v1316 = vrot.slane %v1267, 7
      %v1317 = vsel %vm625, %v1316, %v1315
      %v1318 = vrot.slane %v1268, 6
      %v1319 = vsel %vm628, %v1318, %v1317
      %v1320 = vrot.slane %v1269, 5
      %v1321 = vsel %vm631, %v1320, %v1319
      %v1322 = vrot.slane %v1270, 4
      %v1323 = vsel %vm634, %v1322, %v1321
      %v1324 = vrot.slane %v1271, 3
      %v1325 = vsel %vm637, %v1324, %v1323
      %1326 = vrot.lane.b32.xlu0 %v1325, 32
      %v1327 = vpop.permute.xlu0 %1326
      %v1329 = vrot.slane %v1264, 3
      %v1330 = vrot.slane %v1265, 2
      %v1331 = vsel %vm619, %v1330, %v1329
      %v1332 = vrot.slane %v1266, 1
      %v1333 = vsel %vm622, %v1332, %v1331
      %v1334 = vsel %vm625, %v1267, %v1333
      %v1335 = vrot.slane %v1268, 7
      %v1336 = vsel %vm628, %v1335, %v1334
      %v1337 = vrot.slane %v1269, 6
      %v1338 = vsel %vm631, %v1337, %v1336
      %v1339 = vrot.slane %v1270, 5
      %v1340 = vsel %vm634, %v1339, %v1338
      %v1341 = vrot.slane %v1271, 4
      %v1342 = vsel %vm637, %v1341, %v1340
      %1343 = vrot.lane.b32.xlu0 %v1342, 48
      %v1344 = vpop.permute.xlu0 %1343
      %v1346 = vrot.slane %v1264, 4
      %v1347 = vrot.slane %v1265, 3
      %v1348 = vsel %vm619, %v1347, %v1346
      %v1349 = vrot.slane %v1266, 2
      %v1350 = vsel %vm622, %v1349, %v1348
      %v1351 = vrot.slane %v1267, 1
      %v1352 = vsel %vm625, %v1351, %v1350
      %v1353 = vsel %vm628, %v1268, %v1352
      %v1354 = vrot.slane %v1269, 7
      %v1355 = vsel %vm631, %v1354, %v1353
      %v1356 = vrot.slane %v1270, 6
      %v1357 = vsel %vm634, %v1356, %v1355
      %v1358 = vrot.slane %v1271, 5
      %v1359 = vsel %vm637, %v1358, %v1357
      %1360 = vrot.lane.b32.xlu0 %v1359, 64
      %v1361 = vpop.permute.xlu0 %1360
      %v1363 = vrot.slane %v1264, 5
      %v1364 = vrot.slane %v1265, 4
      %v1365 = vsel %vm619, %v1364, %v1363
      %v1366 = vrot.slane %v1266, 3
      %v1367 = vsel %vm622, %v1366, %v1365
      %v1368 = vrot.slane %v1267, 2
      %v1369 = vsel %vm625, %v1368, %v1367
      %v1370 = vrot.slane %v1268, 1
      %v1371 = vsel %vm628, %v1370, %v1369
      %v1372 = vsel %vm631, %v1269, %v1371
      %v1373 = vrot.slane %v1270, 7
      %v1374 = vsel %vm634, %v1373, %v1372
      %v1375 = vrot.slane %v1271, 6
      %v1376 = vsel %vm637, %v1375, %v1374
      %1377 = vrot.lane.b32.xlu0 %v1376, 80
      %v1378 = vpop.permute.xlu0 %1377
      %v1380 = vrot.slane %v1264, 6
      %v1381 = vrot.slane %v1265, 5
      %v1382 = vsel %vm619, %v1381, %v1380
      %v1383 = vrot.slane %v1266, 4
      %v1384 = vsel %vm622, %v1383, %v1382
      %v1385 = vrot.slane %v1267, 3
      %v1386 = vsel %vm625, %v1385, %v1384
      %v1387 = vrot.slane %v1268, 2
      %v1388 = vsel %vm628, %v1387, %v1386
      %v1389 = vrot.slane %v1269, 1
      %v1390 = vsel %vm631, %v1389, %v1388
      %v1391 = vsel %vm634, %v1270, %v1390
      %v1392 = vrot.slane %v1271, 7
      %v1393 = vsel %vm637, %v1392, %v1391
      %1394 = vrot.lane.b32.xlu0 %v1393, 96
      %v1395 = vpop.permute.xlu0 %1394
      %v1397 = vrot.slane %v1264, 7
      %v1398 = vrot.slane %v1265, 6
      %v1399 = vsel %vm619, %v1398, %v1397
      %v1400 = vrot.slane %v1266, 5
      %v1401 = vsel %vm622, %v1400, %v1399
      %v1402 = vrot.slane %v1267, 4
      %v1403 = vsel %vm625, %v1402, %v1401
      %v1404 = vrot.slane %v1268, 3
      %v1405 = vsel %vm628, %v1404, %v1403
      %v1406 = vrot.slane %v1269, 2
      %v1407 = vsel %vm631, %v1406, %v1405
      %v1408 = vrot.slane %v1270, 1
      %v1409 = vsel %vm634, %v1408, %v1407
      %v1410 = vsel %vm637, %v1271, %v1409
      %1411 = vrot.lane.b32.xlu0 %v1410, 112
      %v1412 = vpop.permute.xlu0 %1411
      %vm1414 = vcmask 130048
      %v1415 = vsel %vm1414, %v1293, %v1310
      %v1416 = vsel %vm757, %v1415, %v1327
      %vm1417 = vcmask 392192
      %v1418 = vsel %vm1417, %v1416, %v1344
      %v1419 = vsel %vm759, %v1418, %v1361
      %vm1420 = vcmask 654336
      %v1421 = vsel %vm1420, %v1419, %v1378
      %v1422 = vsel %vm761, %v1421, %v1395
      %vm1423 = vcmask 916480
      %v1424 = vsel %vm1423, %v1422, %v1412
      %1425 = vst [vmem:[%s484] sm:$0xff] %v1424
      %v1426 = vpack.c.bf16 %v1265, %v1264
      %v1427 = vpack.c.bf16 %v1267, %v1266
      %v1428 = vpack.c.bf16 %v1269, %v1268
      %v1429 = vpack.c.bf16 %v1271, %v1270
      %v1430 = vld [vmem:[%s10] sm:$0xf]
      %v1431 = vld [vmem:[%s10 + $0x4] sm:$0xf]
      %v1434 = vunpack.c.l.b16 %v1430
      %v1435 = vunpack.c.l.b16 %v1431
      %v1436 = vpack.c.b16 %v1435, %v1434
      %v1439 = vsel %vm1414, %v1426, 0
      %v1442 = vsel %vm1414, %v1427, 0
      %v1445 = vsel %vm1414, %v1428, 0
      %v1448 = vsel %vm1414, %v1429, 0
      %1450 = vmatpush.bf16.msra.mxu0 0
      %1451 = vmatpush.bf16.msra.mxu0 0
      %1452 = vmatpush.bf16.msra.mxu0 0
      %1453 = vmatpush.bf16.msra.mxu0 0
      %1454 = vmatpush.bf16.msra.mxu0 0
      %1455 = vmatpush.bf16.msra.mxu0 0
      %1456 = vmatpush.bf16.msra.mxu0 0
      %1457 = vmatpush.bf16.msra.mxu0 %v1436
      %1458 = vmatmul.bf16.gmra.mxu0 %v1439
      %v1459 = vpop.f32.mrf.mxu0
      %v1460 = vadd.f32 0.0, %v1459
      %v1461 = vpop.f32.mrf.mxu0
      %v1462 = vadd.f32 0.0, %v1461
      %1463 = vmatmul.bf16.gmra.mxu0 %v1442
      %v1464 = vpop.f32.mrf.mxu0
      %v1465 = vadd.f32 0.0, %v1464
      %v1466 = vpop.f32.mrf.mxu0
      %v1467 = vadd.f32 0.0, %v1466
      %1468 = vmatmul.bf16.gmra.mxu0 %v1445
      %v1469 = vpop.f32.mrf.mxu0
      %v1470 = vadd.f32 0.0, %v1469
      %v1471 = vpop.f32.mrf.mxu0
      %v1472 = vadd.f32 0.0, %v1471
      %1473 = vmatmul.bf16.gmra.mxu0 %v1448
      %v1474 = vpop.f32.mrf.mxu0
      %v1475 = vadd.f32 0.0, %v1474
      %v1476 = vpop.f32.mrf.mxu0
      %v1477 = vadd.f32 0.0, %v1476
      %1478 = vdwg.mxu0
      %v1479 = vld [vmem:[%s3 + $0x6] sm:$0x1]
      %v1480 = vperm.slane %v1479, 0
      %v1481 = vmul.f32 %v1460, %v1480
      %v1482 = vmul.f32 %v1462, %v1480
      %v1483 = vmul.f32 %v1465, %v1480
      %v1484 = vmul.f32 %v1467, %v1480
      %v1485 = vmul.f32 %v1470, %v1480
      %v1486 = vmul.f32 %v1472, %v1480
      %v1487 = vmul.f32 %v1475, %v1480
      %v1488 = vmul.f32 %v1477, %v1480
      %v1489 = vld [vmem:[%s3 + $0x7] sm:$0x1]
      %v1490 = vperm.slane %v1489, 0
      %v1491 = vadd.f32 %v1481, %v1490
      %v1492 = vadd.f32 %v1482, %v1490
      %v1493 = vadd.f32 %v1483, %v1490
      %v1494 = vadd.f32 %v1484, %v1490
      %v1495 = vadd.f32 %v1485, %v1490
      %v1496 = vadd.f32 %v1486, %v1490
      %v1497 = vadd.f32 %v1487, %v1490
      %v1498 = vadd.f32 %v1488, %v1490
      %v1499 = vmax.f32 %v1491, 0.0
      %v1500 = vmax.f32 %v1492, 0.0
      %v1501 = vmax.f32 %v1493, 0.0
      %v1502 = vmax.f32 %v1494, 0.0
      %v1503 = vmax.f32 %v1495, 0.0
      %v1504 = vmax.f32 %v1496, 0.0
      %v1505 = vmax.f32 %v1497, 0.0
      %v1506 = vmax.f32 %v1498, 0.0
      %1507 = vst.msk [vmem:[#allocation3] sm:$0xff] %vm761, 0.0
      %vm1508 = vcmask 779264
      %1509 = vst.msk [vmem:[#allocation3 + $0x8] sm:$0x3] %vm1508, 0.0
      %s1510 = scalar_lea.vmem [#allocation3], 144
      %1511 = vst.msk [vmem:[%s1510] sm:$0xff] %vm761, 0.0
      %1512 = vst.msk [vmem:[%s1510 + $0x8] sm:$0x3] %vm1508, 0.0
      %vm1513 = vcmask 778240
      %1514 = vst.msk [vmem:[#allocation3] sm:$0x1] %vm1513, 0.0
      %1515 = vst.msk [vmem:[#allocation3 + $0x10] sm:$0x1] %vm1513, 0.0
      %1516 = vst.msk [vmem:[#allocation3 + $0x20] sm:$0x1] %vm1513, 0.0
      %1517 = vst.msk [vmem:[#allocation3 + $0x30] sm:$0x1] %vm1513, 0.0
      %1518 = vst.msk [vmem:[#allocation3 + $0x40] sm:$0x1] %vm1513, 0.0
      %1519 = vst.msk [vmem:[#allocation3 + $0x50] sm:$0x1] %vm1513, 0.0
      %1520 = vst.msk [vmem:[#allocation3 + $0x60] sm:$0x1] %vm1513, 0.0
      %1521 = vst.msk [vmem:[#allocation3 + $0x70] sm:$0x1] %vm1513, 0.0
      %1522 = vst.msk [vmem:[#allocation3 + $0x80] sm:$0x1] %vm1513, 0.0
      %1523 = vst.msk [vmem:[#allocation3 + $0x90] sm:$0x1] %vm1513, 0.0
      %1524 = vst.msk [vmem:[#allocation3 + $0x9] sm:$0x1] %vm1513, 0.0
      %1525 = vst.msk [vmem:[#allocation3 + $0x19] sm:$0x1] %vm1513, 0.0
      %1526 = vst.msk [vmem:[#allocation3 + $0x29] sm:$0x1] %vm1513, 0.0
      %1527 = vst.msk [vmem:[#allocation3 + $0x39] sm:$0x1] %vm1513, 0.0
      %1528 = vst.msk [vmem:[#allocation3 + $0x49] sm:$0x1] %vm1513, 0.0
      %1529 = vst.msk [vmem:[#allocation3 + $0x59] sm:$0x1] %vm1513, 0.0
      %1530 = vst.msk [vmem:[#allocation3 + $0x69] sm:$0x1] %vm1513, 0.0
      %1531 = vst.msk [vmem:[#allocation3 + $0x79] sm:$0x1] %vm1513, 0.0
      %1532 = vst.msk [vmem:[#allocation3 + $0x89] sm:$0x1] %vm1513, 0.0
      %1533 = vst.msk [vmem:[#allocation3 + $0x99] sm:$0x1] %vm1513, 0.0
      %s1534 = scalar_lea.vmem [#allocation3], 16
      %1535 = vst.msk [vmem:[%s1534 + $0x1] sm:$0xff] %vm761, %v1499
      %1536 = vst.msk [vmem:[%s1534 + $0x11] sm:$0xff] %vm761, %v1500
      %1537 = vst.msk [vmem:[%s1534 + $0x21] sm:$0xff] %vm761, %v1501
      %1538 = vst.msk [vmem:[%s1534 + $0x31] sm:$0xff] %vm761, %v1502
      %1539 = vst.msk [vmem:[%s1534 + $0x41] sm:$0xff] %vm761, %v1503
      %1540 = vst.msk [vmem:[%s1534 + $0x51] sm:$0xff] %vm761, %v1504
      %1541 = vst.msk [vmem:[%s1534 + $0x61] sm:$0xff] %vm761, %v1505
      %1542 = vst.msk [vmem:[%s1534 + $0x71] sm:$0xff] %vm761, %v1506
      %v1543 = vld [vmem:[#allocation3] sm:$0xff]
      %v1544 = vld [vmem:[#allocation3 + $0x20] sm:$0xff]
      %v1545 = vld [vmem:[#allocation3 + $0x40] sm:$0xff]
      %v1546 = vld [vmem:[#allocation3 + $0x60] sm:$0xff]
      %v1547 = vld [vmem:[%s2] sm:$0x1]
      %v1548 = vperm.slane %v1547, 0
      %1550 = vrot.lane.b32.xlu0 %v1548, 96
      %v1551 = vpop.permute.xlu0 %1550
      %v1553 = vmul.f32 %v1543, %v1551
      %v1554 = vmul.f32 %v1544, %v1551
      %v1555 = vmul.f32 %v1545, %v1551
      %v1556 = vmul.f32 %v1546, %v1551
      %v1557 = vadd.f32 %v1553, 0.0
      %v1558 = vadd.f32 %v1554, 0.0
      %v1559 = vadd.f32 %v1555, 0.0
      %v1560 = vadd.f32 %v1556, 0.0
      %v1561 = vld [vmem:[#allocation3 + $0x1] sm:$0xff]
      %v1562 = vld [vmem:[#allocation3 + $0x21] sm:$0xff]
      %v1563 = vld [vmem:[#allocation3 + $0x41] sm:$0xff]
      %v1564 = vld [vmem:[#allocation3 + $0x61] sm:$0xff]
      %v1565 = vld [vmem:[%s2 + $0x1] sm:$0x1]
      %v1566 = vperm.slane %v1565, 0
      %1568 = vrot.lane.b32.xlu0 %v1566, 96
      %v1569 = vpop.permute.xlu0 %1568
      %v1571 = vmul.f32 %v1561, %v1569
      %v1572 = vmul.f32 %v1562, %v1569
      %v1573 = vmul.f32 %v1563, %v1569
      %v1574 = vmul.f32 %v1564, %v1569
      %v1575 = vadd.f32 %v1557, %v1571
      %v1576 = vadd.f32 %v1558, %v1572
      %v1577 = vadd.f32 %v1559, %v1573
      %v1578 = vadd.f32 %v1560, %v1574
      %v1579 = vld [vmem:[#allocation3 + $0x2] sm:$0xff]
      %v1580 = vld [vmem:[#allocation3 + $0x22] sm:$0xff]
      %v1581 = vld [vmem:[#allocation3 + $0x42] sm:$0xff]
      %v1582 = vld [vmem:[#allocation3 + $0x62] sm:$0xff]
      %v1583 = vld [vmem:[%s2 + $0x2] sm:$0x1]
      %v1584 = vperm.slane %v1583, 0
      %1586 = vrot.lane.b32.xlu0 %v1584, 96
      %v1587 = vpop.permute.xlu0 %1586
      %v1589 = vmul.f32 %v1579, %v1587
      %v1590 = vmul.f32 %v1580, %v1587
      %v1591 = vmul.f32 %v1581, %v1587
      %v1592 = vmul.f32 %v1582, %v1587
      %v1593 = vadd.f32 %v1575, %v1589
      %v1594 = vadd.f32 %v1576, %v1590
      %v1595 = vadd.f32 %v1577, %v1591
      %v1596 = vadd.f32 %v1578, %v1592
      %v1597 = vld [vmem:[%s1534] sm:$0xff]
      %v1598 = vld [vmem:[%s1534 + $0x20] sm:$0xff]
      %v1599 = vld [vmem:[%s1534 + $0x40] sm:$0xff]
      %v1600 = vld [vmem:[%s1534 + $0x60] sm:$0xff]
      %v1601 = vld [vmem:[%s2 + $0x3] sm:$0x1]
      %v1602 = vperm.slane %v1601, 0
      %1604 = vrot.lane.b32.xlu0 %v1602, 96
      %v1605 = vpop.permute.xlu0 %1604
      %v1607 = vmul.f32 %v1597, %v1605
      %v1608 = vmul.f32 %v1598, %v1605
      %v1609 = vmul.f32 %v1599, %v1605
      %v1610 = vmul.f32 %v1600, %v1605
      %v1611 = vadd.f32 %v1593, %v1607
      %v1612 = vadd.f32 %v1594, %v1608
      %v1613 = vadd.f32 %v1595, %v1609
      %v1614 = vadd.f32 %v1596, %v1610
      %v1615 = vld [vmem:[%s1534 + $0x1] sm:$0xff]
      %v1616 = vld [vmem:[%s1534 + $0x21] sm:$0xff]
      %v1617 = vld [vmem:[%s1534 + $0x41] sm:$0xff]
      %v1618 = vld [vmem:[%s1534 + $0x61] sm:$0xff]
      %v1619 = vld [vmem:[%s2 + $0x4] sm:$0x1]
      %v1620 = vperm.slane %v1619, 0
      %1622 = vrot.lane.b32.xlu0 %v1620, 96
      %v1623 = vpop.permute.xlu0 %1622
      %v1625 = vmul.f32 %v1615, %v1623
      %v1626 = vmul.f32 %v1616, %v1623
      %v1627 = vmul.f32 %v1617, %v1623
      %v1628 = vmul.f32 %v1618, %v1623
      %v1629 = vadd.f32 %v1611, %v1625
      %v1630 = vadd.f32 %v1612, %v1626
      %v1631 = vadd.f32 %v1613, %v1627
      %v1632 = vadd.f32 %v1614, %v1628
      %v1633 = vld [vmem:[%s1534 + $0x2] sm:$0xff]
      %v1634 = vld [vmem:[%s1534 + $0x22] sm:$0xff]
      %v1635 = vld [vmem:[%s1534 + $0x42] sm:$0xff]
      %v1636 = vld [vmem:[%s1534 + $0x62] sm:$0xff]
      %v1637 = vld [vmem:[%s2 + $0x5] sm:$0x1]
      %v1638 = vperm.slane %v1637, 0
      %1640 = vrot.lane.b32.xlu0 %v1638, 96
      %v1641 = vpop.permute.xlu0 %1640
      %v1643 = vmul.f32 %v1633, %v1641
      %v1644 = vmul.f32 %v1634, %v1641
      %v1645 = vmul.f32 %v1635, %v1641
      %v1646 = vmul.f32 %v1636, %v1641
      %v1647 = vadd.f32 %v1629, %v1643
      %v1648 = vadd.f32 %v1630, %v1644
      %v1649 = vadd.f32 %v1631, %v1645
      %v1650 = vadd.f32 %v1632, %v1646
      %s1651 = scalar_lea.vmem [#allocation3], 32
      %v1652 = vld [vmem:[%s1651] sm:$0xff]
      %v1653 = vld [vmem:[%s1651 + $0x20] sm:$0xff]
      %v1654 = vld [vmem:[%s1651 + $0x40] sm:$0xff]
      %v1655 = vld [vmem:[%s1651 + $0x60] sm:$0xff]
      %v1656 = vld [vmem:[%s2 + $0x6] sm:$0x1]
      %v1657 = vperm.slane %v1656, 0
      %1659 = vrot.lane.b32.xlu0 %v1657, 96
      %v1660 = vpop.permute.xlu0 %1659
      %v1662 = vmul.f32 %v1652, %v1660
      %v1663 = vmul.f32 %v1653, %v1660
      %v1664 = vmul.f32 %v1654, %v1660
      %v1665 = vmul.f32 %v1655, %v1660
      %v1666 = vadd.f32 %v1647, %v1662
      %v1667 = vadd.f32 %v1648, %v1663
      %v1668 = vadd.f32 %v1649, %v1664
      %v1669 = vadd.f32 %v1650, %v1665
      %v1670 = vld [vmem:[%s1651 + $0x1] sm:$0xff]
      %v1671 = vld [vmem:[%s1651 + $0x21] sm:$0xff]
      %v1672 = vld [vmem:[%s1651 + $0x41] sm:$0xff]
      %v1673 = vld [vmem:[%s1651 + $0x61] sm:$0xff]
      %v1674 = vld [vmem:[%s2 + $0x7] sm:$0x1]
      %v1675 = vperm.slane %v1674, 0
      %1677 = vrot.lane.b32.xlu0 %v1675, 96
      %v1678 = vpop.permute.xlu0 %1677
      %v1680 = vmul.f32 %v1670, %v1678
      %v1681 = vmul.f32 %v1671, %v1678
      %v1682 = vmul.f32 %v1672, %v1678
      %v1683 = vmul.f32 %v1673, %v1678
      %v1684 = vadd.f32 %v1666, %v1680
      %v1685 = vadd.f32 %v1667, %v1681
      %v1686 = vadd.f32 %v1668, %v1682
      %v1687 = vadd.f32 %v1669, %v1683
      %v1688 = vld [vmem:[%s1651 + $0x2] sm:$0xff]
      %v1689 = vld [vmem:[%s1651 + $0x22] sm:$0xff]
      %v1690 = vld [vmem:[%s1651 + $0x42] sm:$0xff]
      %v1691 = vld [vmem:[%s1651 + $0x62] sm:$0xff]
      %v1692 = vld [vmem:[%s2 + $0x8] sm:$0x1]
      %v1693 = vperm.slane %v1692, 0
      %1695 = vrot.lane.b32.xlu0 %v1693, 96
      %v1696 = vpop.permute.xlu0 %1695
      %v1698 = vmul.f32 %v1688, %v1696
      %v1699 = vmul.f32 %v1689, %v1696
      %v1700 = vmul.f32 %v1690, %v1696
      %v1701 = vmul.f32 %v1691, %v1696
      %v1702 = vadd.f32 %v1684, %v1698
      %v1703 = vadd.f32 %v1685, %v1699
      %v1704 = vadd.f32 %v1686, %v1700
      %v1705 = vadd.f32 %v1687, %v1701
      %v1710 = vrot.slane %v1702, 1
      %v1711 = vrot.slane %v1703, 1
      %v1712 = vrot.slane %v1704, 1
      %v1713 = vrot.slane %v1705, 1
      %v1718 = vrot.slane %v1702, 2
      %v1719 = vrot.slane %v1703, 2
      %v1720 = vrot.slane %v1704, 2
      %v1721 = vrot.slane %v1705, 2
      %v1726 = vrot.slane %v1702, 3
      %v1727 = vrot.slane %v1703, 3
      %v1728 = vrot.slane %v1704, 3
      %v1729 = vrot.slane %v1705, 3
      %vm1734 = vcmask 1040384
      %v1735 = vsel %vm1734, %v1702, %v1710
      %v1736 = vsel %vm1734, %v1703, %v1711
      %v1737 = vsel %vm1734, %v1704, %v1712
      %v1738 = vsel %vm1734, %v1705, %v1713
      %vm1739 = vcmask 1041408
      %v1740 = vsel %vm1739, %v1735, %v1718
      %v1741 = vsel %vm1739, %v1736, %v1719
      %v1742 = vsel %vm1739, %v1737, %v1720
      %v1743 = vsel %vm1739, %v1738, %v1721
      %vm1744 = vcmask 1042432
      %v1745 = vsel %vm1744, %v1740, %v1726
      %v1746 = vsel %vm1744, %v1741, %v1727
      %v1747 = vsel %vm1744, %v1742, %v1728
      %v1748 = vsel %vm1744, %v1743, %v1729
      %v1749 = vld [vmem:[%s3 + $0x8] sm:$0x1]
      %v1750 = vperm.slane %v1749, 0
      %v1751 = vmul.f32 %v1745, %v1750
      %v1752 = vmul.f32 %v1746, %v1750
      %v1753 = vmul.f32 %v1747, %v1750
      %v1754 = vmul.f32 %v1748, %v1750
      %v1755 = vld [vmem:[%s3 + $0x9] sm:$0x1]
      %v1756 = vperm.slane %v1755, 0
      %v1757 = vadd.f32 %v1751, %v1756
      %v1758 = vadd.f32 %v1752, %v1756
      %v1759 = vadd.f32 %v1753, %v1756
      %v1760 = vadd.f32 %v1754, %v1756
      %v1761 = vmax.f32 %v1757, 0.0
      %v1762 = vmax.f32 %v1758, 0.0
      %v1763 = vmax.f32 %v1759, 0.0
      %v1764 = vmax.f32 %v1760, 0.0
      %1769 = vst [vmem:[#allocation1] ss:$2 sm:$0xff] %v1761
      %s1770 = scalar_lea.vmem [#allocation1], 1
      %1771 = vst [vmem:[%s1770] ss:$2 sm:$0xff] %v1762
      %s1772 = scalar_lea.vmem [#allocation1], 16
      %1773 = vst [vmem:[%s1772] ss:$2 sm:$0xff] %v1763
      %s1774 = scalar_lea.vmem [#allocation1], 17
      %1775 = vst [vmem:[%s1774] ss:$2 sm:$0xff] %v1764
      %v1776 = vld.sshfl [vmem:[#allocation1] sm:$0xff pattern:$0x75316420]
      %v1777 = vld.sshfl [vmem:[#allocation1 + $0x10] sm:$0xff pattern:$0x75316420]
      %v1780 = vsel %vm761, %v1776, 0.0
      %v1781 = vsel %vm761, %v1777, 0.0
      %v1782 = vadd.f32 %v1780, %v1781
      %v1783 = vrot.slane %v1782, 4
      %v1784 = vadd.f32 %v1782, %v1783
      %v1785 = vrot.slane %v1784, 2
      %v1786 = vadd.f32 %v1784, %v1785
      %v1787 = vrot.slane %v1786, 1
      %v1788 = vadd.f32 %v1786, %v1787
      %v1789 = vrcp.pop 16.0
      %v1790 = vmul.f32 16.0, %v1789
      %v1791 = vsub.f32 1.0, %v1790
      %v1792 = vmul.f32 %v1789, %v1791
      %v1793 = vadd.f32 %v1789, %v1792
      %vm1794 = vweird.f32 %v1789
      %v1795 = vsel %vm1794, %v1789, %v1793
      %v1796 = vmul.f32 %v1788, %v1795
      %v1797 = vld [vmem:[%s8 + $0x2] sm:$0x1]
      %v1798 = vld [vmem:[%s8 + $0x3] sm:$0x1]
      %v1799 = vlaneseq
      %v1800 = vshrl.u32 %v1799, 7
      %1802 = vset.pattern.permute.xlu0 %v1800
      %1803 = vperm.xlu0 %1802, %v1796
      %v1804 = vpop.permute.xlu0 %1803
      %v1805 = vlaneseq
      %v1806 = vshrl.u32 %v1805, 7
      %v1807 = vadd.s32 %v1806, 8
      %1808 = vset.pattern.permute.xlu0 %v1807
      %1809 = vperm.xlu0 %1808, %v1796
      %v1810 = vpop.permute.xlu0 %1809
      %v1811 = vlaneseq
      %v1812 = vshrl.u32 %v1811, 7
      %v1813 = vadd.s32 %v1812, 16
      %1814 = vset.pattern.permute.xlu0 %v1813
      %1815 = vperm.xlu0 %1814, %v1796
      %v1816 = vpop.permute.xlu0 %1815
      %v1817 = vlaneseq
      %v1818 = vshrl.u32 %v1817, 7
      %v1819 = vadd.s32 %v1818, 24
      %1820 = vset.pattern.permute.xlu0 %v1819
      %1821 = vperm.xlu0 %1820, %v1796
      %v1822 = vpop.permute.xlu0 %1821
      %v1823 = vlaneseq
      %v1824 = vshrl.u32 %v1823, 7
      %v1825 = vadd.s32 %v1824, 32
      %1826 = vset.pattern.permute.xlu0 %v1825
      %1827 = vperm.xlu0 %1826, %v1796
      %v1828 = vpop.permute.xlu0 %1827
      %v1829 = vlaneseq
      %v1830 = vshrl.u32 %v1829, 7
      %v1831 = vadd.s32 %v1830, 40
      %1832 = vset.pattern.permute.xlu0 %v1831
      %1833 = vperm.xlu0 %1832, %v1796
      %v1834 = vpop.permute.xlu0 %1833
      %v1835 = vlaneseq
      %v1836 = vshrl.u32 %v1835, 7
      %v1837 = vadd.s32 %v1836, 48
      %1838 = vset.pattern.permute.xlu0 %v1837
      %1839 = vperm.xlu0 %1838, %v1796
      %v1840 = vpop.permute.xlu0 %1839
      %v1841 = vlaneseq
      %v1842 = vshrl.u32 %v1841, 7
      %v1843 = vadd.s32 %v1842, 56
      %1844 = vset.pattern.permute.xlu0 %v1843
      %1845 = vperm.xlu0 %1844, %v1796
      %v1846 = vpop.permute.xlu0 %1845
      %v1847 = vlaneseq
      %v1848 = vshrl.u32 %v1847, 7
      %v1849 = vadd.s32 %v1848, 64
      %1850 = vset.pattern.permute.xlu0 %v1849
      %1851 = vperm.xlu0 %1850, %v1796
      %v1852 = vpop.permute.xlu0 %1851
      %v1853 = vlaneseq
      %v1854 = vshrl.u32 %v1853, 7
      %v1855 = vadd.s32 %v1854, 72
      %1856 = vset.pattern.permute.xlu0 %v1855
      %1857 = vperm.xlu0 %1856, %v1796
      %v1858 = vpop.permute.xlu0 %1857
      %v1859 = vlaneseq
      %v1860 = vshrl.u32 %v1859, 7
      %v1861 = vadd.s32 %v1860, 80
      %1862 = vset.pattern.permute.xlu0 %v1861
      %1863 = vperm.xlu0 %1862, %v1796
      %v1864 = vpop.permute.xlu0 %1863
      %v1865 = vlaneseq
      %v1866 = vshrl.u32 %v1865, 7
      %v1867 = vadd.s32 %v1866, 88
      %1868 = vset.pattern.permute.xlu0 %v1867
      %1869 = vperm.xlu0 %1868, %v1796
      %v1870 = vpop.permute.xlu0 %1869
      %v1871 = vld [vmem:[%s6] sm:$0xff]
      %v1872 = vld [vmem:[%s6 + $0x8] sm:$0xff]
      %v1873 = vld [vmem:[%s6 + $0x10] sm:$0xff]
      %v1874 = vld [vmem:[%s6 + $0x18] sm:$0xff]
      %v1875 = vld [vmem:[%s6 + $0x20] sm:$0xff]
      %v1876 = vld [vmem:[%s6 + $0x28] sm:$0xff]
      %v1877 = vld [vmem:[%s6 + $0x30] sm:$0xff]
      %v1878 = vld [vmem:[%s6 + $0x38] sm:$0xff]
      %v1879 = vld [vmem:[%s6 + $0x40] sm:$0xff]
      %v1880 = vld [vmem:[%s6 + $0x48] sm:$0xff]
      %v1881 = vld [vmem:[%s6 + $0x50] sm:$0xff]
      %v1882 = vld [vmem:[%s6 + $0x58] sm:$0xff]
      %v1883 = vmul.f32 %v1804, %v1871
      %v1884 = vmul.f32 %v1810, %v1872
      %v1885 = vmul.f32 %v1816, %v1873
      %v1886 = vmul.f32 %v1822, %v1874
      %v1887 = vmul.f32 %v1828, %v1875
      %v1888 = vmul.f32 %v1834, %v1876
      %v1889 = vmul.f32 %v1840, %v1877
      %v1890 = vmul.f32 %v1846, %v1878
      %v1891 = vmul.f32 %v1852, %v1879
      %v1892 = vmul.f32 %v1858, %v1880
      %v1893 = vmul.f32 %v1864, %v1881
      %v1894 = vmul.f32 %v1870, %v1882
      %vm1895 = vcmask 31744
      %v1896 = vsel %vm1895, %v1883, 0.0
      %v1897 = vsel %vm1895, %v1884, 0.0
      %v1898 = vadd.f32 %v1896, %v1897
      %v1899 = vsel %vm1895, %v1885, 0.0
      %v1900 = vadd.f32 %v1898, %v1899
      %v1901 = vsel %vm1895, %v1886, 0.0
      %v1902 = vadd.f32 %v1900, %v1901
      %v1903 = vsel %vm1895, %v1887, 0.0
      %v1904 = vadd.f32 %v1902, %v1903
      %v1905 = vsel %vm1895, %v1888, 0.0
      %v1906 = vadd.f32 %v1904, %v1905
      %v1907 = vsel %vm1895, %v1889, 0.0
      %v1908 = vadd.f32 %v1906, %v1907
      %v1909 = vsel %vm1895, %v1890, 0.0
      %v1910 = vadd.f32 %v1908, %v1909
      %v1911 = vsel %vm1895, %v1891, 0.0
      %v1912 = vadd.f32 %v1910, %v1911
      %v1913 = vsel %vm1895, %v1892, 0.0
      %v1914 = vadd.f32 %v1912, %v1913
      %v1915 = vsel %vm1895, %v1893, 0.0
      %v1916 = vadd.f32 %v1914, %v1915
      %v1917 = vsel %vm1895, %v1894, 0.0
      %v1918 = vadd.f32 %v1916, %v1917
      %v1919 = vrot.slane %v1918, 4
      %v1920 = vadd.f32 %v1918, %v1919
      %v1921 = vrot.slane %v1920, 2
      %v1922 = vadd.f32 %v1920, %v1921
      %v1923 = vrot.slane %v1922, 1
      %v1924 = vadd.f32 %v1922, %v1923
      %v1925 = vadd.f32 %v1924, %v1797
      %v1926 = vmax.f32 %v1925, 0.0
      %v1927 = vperm.slane %v1926, 0
      %v1928 = vlaneseq
      %v1929 = vshrl.u32 %v1928, 7
      %1931 = vset.pattern.permute.xlu0 %v1929
      %1932 = vperm.xlu0 %1931, %v1927
      %v1933 = vpop.permute.xlu0 %1932
      %v1934 = vld [vmem:[%s7] sm:$0xf]
      %v1935 = vmul.f32 %v1933, %v1934
      %vm1936 = vcmask 781312
      %v1937 = vsel %vm1936, %v1935, 0.0
      %v1938 = vrot.slane %v1937, 4
      %v1939 = vadd.f32 %v1937, %v1938
      %v1940 = vrot.slane %v1939, 2
      %v1941 = vadd.f32 %v1939, %v1940
      %v1942 = vrot.slane %v1941, 1
      %v1943 = vadd.f32 %v1941, %v1942
      %v1944 = vadd.f32 %v1943, %v1798
      %v1945 = vxor.u32 %v1944, 2147483648
      %v1946 = vmul.f32 %v1945, 1.442695
      %v1947 = vpow.pop %v1946
      %v1948 = vadd.f32 %v1947, 1.0
      %v1949 = vrcp.pop %v1948
      %v1950 = vmul.f32 %v1948, %v1949
      %v1951 = vsub.f32 1.0, %v1950
      %v1952 = vmul.f32 %v1949, %v1951
      %v1953 = vadd.f32 %v1949, %v1952
      %vm1954 = vweird.f32 %v1948
      %vm1955 = vweird.f32 %v1949
      %vm1956 = vmor %vm1954, %vm1955
      %v1957 = vsel %vm1956, %v1949, %v1953
      %v1958 = vand.u32 2147483647, %v1948
      %vm1959 = vcmp.eq.f32.partialorder %v1958, 8.507059e+37
      %v1960 = vand.u32 %v1948, 2147483648
      %v1961 = vor.u32 1.1754944e-38, %v1960
      %v1962 = vsel %vm1959, %v1961, %v1957
      %v1963 = vmul.f32 1.0, %v1962
      %v1964 = vperm.slane %v1963, 0
      %v1966 = vrot.slane %v1964, 4
      %v1968 = vmul.f32 %v1761, %v1964
      %v1969 = vmul.f32 %v1762, %v1966
      %v1970 = vmul.f32 %v1763, %v1964
      %v1971 = vmul.f32 %v1764, %v1966
      %1976 = vst [vmem:[#allocation1] ss:$2 sm:$0xff] %v1968
      %s1977 = scalar_lea.vmem [#allocation1], 1
      %1978 = vst [vmem:[%s1977] ss:$2 sm:$0xff] %v1969
      %s1979 = scalar_lea.vmem [#allocation1], 16
      %1980 = vst [vmem:[%s1979] ss:$2 sm:$0xff] %v1970
      %s1981 = scalar_lea.vmem [#allocation1], 17
      %1982 = vst [vmem:[%s1981] ss:$2 sm:$0xff] %v1971
      %v1983 = vld.sshfl [vmem:[#allocation1] sm:$0xff pattern:$0x75316420]
      %v1984 = vld.sshfl [vmem:[#allocation1 + $0x10] sm:$0xff pattern:$0x75316420]
      %v1987 = vpack.c.bf16 %v1984, %v1983
      %v1988 = vld [vmem:[%s11] sm:$0xf]
      %v1989 = vld [vmem:[%s11 + $0x4] sm:$0xf]
      %v1990 = vld [vmem:[%s11 + $0x8] sm:$0xf]
      %v1991 = vld [vmem:[%s11 + $0xc] sm:$0xf]
      %v1992 = vld [vmem:[%s11 + $0x10] sm:$0xf]
      %v1993 = vld [vmem:[%s11 + $0x14] sm:$0xf]
      %v1994 = vld [vmem:[%s11 + $0x18] sm:$0xf]
      %v1995 = vld [vmem:[%s11 + $0x1c] sm:$0xf]
      %v1996 = vld [vmem:[%s11 + $0x20] sm:$0xf]
      %v1997 = vld [vmem:[%s11 + $0x24] sm:$0xf]
      %v1998 = vld [vmem:[%s11 + $0x28] sm:$0xf]
      %v1999 = vld [vmem:[%s11 + $0x2c] sm:$0xf]
      %v2012 = vunpack.c.l.b16 %v1988
      %v2013 = vunpack.c.l.b16 %v1989
      %v2014 = vunpack.c.l.b16 %v1990
      %v2015 = vunpack.c.l.b16 %v1991
      %v2016 = vunpack.c.l.b16 %v1992
      %v2017 = vunpack.c.l.b16 %v1993
      %v2018 = vunpack.c.l.b16 %v1994
      %v2019 = vunpack.c.l.b16 %v1995
      %v2020 = vunpack.c.l.b16 %v1996
      %v2021 = vunpack.c.l.b16 %v1997
      %v2022 = vunpack.c.l.b16 %v1998
      %v2023 = vunpack.c.l.b16 %v1999
      %v2024 = vpack.c.b16 %v2013, %v2012
      %v2025 = vpack.c.b16 %v2015, %v2014
      %v2026 = vpack.c.b16 %v2017, %v2016
      %v2027 = vpack.c.b16 %v2019, %v2018
      %v2028 = vpack.c.b16 %v2021, %v2020
      %v2029 = vpack.c.b16 %v2023, %v2022
      %v2037 = vsel %vm761, %v1987, 0
      %2039 = vmatpush.bf16.msra.mxu0 0
      %2040 = vmatpush.bf16.msra.mxu0 0
      %2041 = vmatpush.bf16.msra.mxu0 %v2029
      %2042 = vmatpush.bf16.msra.mxu0 %v2028
      %2043 = vmatpush.bf16.msra.mxu0 %v2027
      %2044 = vmatpush.bf16.msra.mxu0 %v2026
      %2045 = vmatpush.bf16.msra.mxu0 %v2025
      %2046 = vmatpush.bf16.msra.mxu0 %v2024
      %2047 = vmatmul.bf16.gmra.mxu0 %v2037
      %v2048 = vpop.f32.mrf.mxu0
      %v2049 = vadd.f32 0.0, %v2048
      %v2050 = vpop.f32.mrf.mxu0
      %v2051 = vadd.f32 0.0, %v2050
      %2052 = vdwg.mxu0
      %v2053 = vld [vmem:[%s3 + $0xa] sm:$0x1]
      %v2054 = vperm.slane %v2053, 0
      %v2055 = vmul.f32 %v2049, %v2054
      %v2056 = vmul.f32 %v2051, %v2054
      %v2057 = vld [vmem:[%s3 + $0xb] sm:$0x1]
      %v2058 = vperm.slane %v2057, 0
      %v2059 = vadd.f32 %v2055, %v2058
      %v2060 = vadd.f32 %v2056, %v2058
      %v2063 = vrot.slane %v2059, 4
      %v2064 = vrot.slane %v2060, 4
      %v2065 = vperm.slane %v2059, 0
      %v2066 = vperm.slane %v2063, 0
      %v2067 = vperm.slane %v2060, 0
      %v2068 = vperm.slane %v2064, 0
      %v2069 = vsel %vm619, %v2066, %v2065
      %v2070 = vsel %vm622, %v2067, %v2069
      %v2071 = vsel %vm625, %v2068, %v2070
      %v2073 = vperm.slane %v2059, 1
      %v2074 = vperm.slane %v2063, 1
      %v2075 = vperm.slane %v2060, 1
      %v2076 = vperm.slane %v2064, 1
      %v2077 = vsel %vm619, %v2074, %v2073
      %v2078 = vsel %vm622, %v2075, %v2077
      %v2079 = vsel %vm625, %v2076, %v2078
      %2080 = vrot.lane.b32.xlu0 %v2079, 24
      %v2081 = vpop.permute.xlu0 %2080
      %v2083 = vperm.slane %v2059, 2
      %v2084 = vperm.slane %v2063, 2
      %v2085 = vperm.slane %v2060, 2
      %v2086 = vperm.slane %v2064, 2
      %v2087 = vsel %vm619, %v2084, %v2083
      %v2088 = vsel %vm622, %v2085, %v2087
      %v2089 = vsel %vm625, %v2086, %v2088
      %2090 = vrot.lane.b32.xlu0 %v2089, 48
      %v2091 = vpop.permute.xlu0 %2090
      %v2093 = vperm.slane %v2059, 3
      %v2094 = vperm.slane %v2063, 3
      %v2095 = vperm.slane %v2060, 3
      %v2096 = vperm.slane %v2064, 3
      %v2097 = vsel %vm619, %v2094, %v2093
      %v2098 = vsel %vm622, %v2095, %v2097
      %v2099 = vsel %vm625, %v2096, %v2098
      %2100 = vrot.lane.b32.xlu0 %v2099, 72
      %v2101 = vpop.permute.xlu0 %2100
      %vm2103 = vcmask 195584
      %v2104 = vsel %vm2103, %v2071, %v2081
      %v2105 = vsel %vm1417, %v2104, %v2091
      %vm2106 = vcmask 588800
      %v2107 = vsel %vm2106, %v2105, %v2101
      %v2109 = vrot.slane %v2107, 1
      %2110 = vrot.lane.b32.xlu0 %v2109, 96
      %v2111 = vpop.permute.xlu0 %2110
      %v2113 = vrot.slane %v2107, 2
      %2114 = vrot.lane.b32.xlu0 %v2113, 64
      %v2115 = vpop.permute.xlu0 %2114
      %v2117 = vrot.slane %v2107, 3
      %2118 = vrot.lane.b32.xlu0 %v2117, 32
      %v2119 = vpop.permute.xlu0 %2118
      %v2121 = vsel %vm761, %v2107, %v2111
      %v2122 = vsel %vm759, %v2111, %v2115
      %v2123 = vsel %vm757, %v2115, %v2119
      %v2127 = vrot.slane %v2122, 7
      %v2128 = vrot.slane %v2123, 6
      %v2129 = vsel %vm1734, %v2121, %v2127
      %v2130 = vsel %vm1739, %v2129, %v2128
      %v2132 = vlaneseq
      %vm2133 = vcmp.ge.s32.totalorder %v2132, 0
      %vm2134 = vcmp.lt.s32.totalorder %v2132, 384
      %vm2135 = vmand %vm2133, %vm2134
      %2136 = vst.msk [vmem:[%s488] sm:$0x7] %vm2135, %v2130
      %p2137 = scmp.lt.s32.totalorder %s26, 1
      %s2138 = scalar_select %p2137, %s26, 1
      %s2139 = smul.addr %s2138, 2
      %s2140 = smul.addr %s2139, 8
      %s2141 = scalar_lea.vmem %s12, %s2140
      %p2142 = scmp.lt.s32.totalorder %s26, 1
      %s2143 = scalar_select %p2142, %s26, 1
      %s2144 = smul.addr %s2143, 8
      %s2145 = scalar_lea.vmem %s13, %s2144
      %p2146 = scmp.lt.s32.totalorder %s26, 1
      %s2147 = scalar_select %p2146, %s26, 1
      %s2148 = smul.addr %s2147, 3
      %s2149 = scalar_lea.vmem %s14, %s2148
      // Predicated region
      $region69: #{efficientnet_features_forward.1} parent=67 // pred_check
        %p2150 = pneg %p301
      $region70: #{efficientnet_features_forward.1} parent=67 // pred_check_branch
        %2152 = sbr.rel (%p2150) target = $region72
      $region71: #{efficientnet_features_forward.1} parent=67 // pred_region
        _
      $region72: #{efficientnet_features_forward.1} parent=67 // pred_fallthru
        _
      // Predicated region
      $region73: #{efficientnet_features_forward.1} parent=67 // pred_check
        %p2153 = pneg %p327
      $region74: #{efficientnet_features_forward.1} parent=67 // pred_check_branch
        %2155 = sbr.rel (%p2153) target = $region76
      $region75: #{efficientnet_features_forward.1} parent=67 // pred_region
        _
      $region76: #{efficientnet_features_forward.1} parent=67 // pred_fallthru
        _
      // Predicated region
      $region77: #{efficientnet_features_forward.1} parent=67 // pred_check
        %p2156 = pneg %p353
      $region78: #{efficientnet_features_forward.1} parent=67 // pred_check_branch
        %2158 = sbr.rel (%p2156) target = $region80
      $region79: #{efficientnet_features_forward.1} parent=67 // pred_region
        _
      $region80: #{efficientnet_features_forward.1} parent=67 // pred_fallthru
        _
    $region68: #{efficientnet_features_forward.1} parent=5 // pred_fallthru
      _
    %p2159 = scmp.le.s32.totalorder 2, %s21
    // Predicated region
    $region81: #{efficientnet_features_forward.1} parent=5 // pred_check
      %p2160 = pneg %p2159
    $region82: #{efficientnet_features_forward.1} parent=5 // pred_check_branch
      %2162 = sbr.rel (%p2160) target = $region84
    $region83: #{efficientnet_features_forward.1} parent=5 // pred_region
      %s2163 = ssub.s32 %s21, 2
      // Predicated region
      $region85: #{efficientnet_features_forward.1} parent=83 // pred_check
        %p2164 = pneg %p307
      $region86: #{efficientnet_features_forward.1} parent=83 // pred_check_branch
        %2166 = sbr.rel (%p2164) target = $region88
      $region87: #{efficientnet_features_forward.1} parent=83 // pred_region
        %p2167 = scmp.lt.s32.totalorder %s27, 1
        %s2168 = scalar_select %p2167, %s27, 1
        %s2169 = smul.addr %s2168, 2
        %s2170 = smul.addr %s2169, 8
        %s2171 = scalar_lea.vmem %s12, %s2170
      $region88: #{efficientnet_features_forward.1} parent=83 // pred_fallthru
        _
      // Predicated region
      $region89: #{efficientnet_features_forward.1} parent=83 // pred_check
        %p2172 = pneg %p333
      $region90: #{efficientnet_features_forward.1} parent=83 // pred_check_branch
        %2174 = sbr.rel (%p2172) target = $region92
      $region91: #{efficientnet_features_forward.1} parent=83 // pred_region
        %p2175 = scmp.lt.s32.totalorder %s27, 1
        %s2176 = scalar_select %p2175, %s27, 1
        %s2177 = smul.addr %s2176, 8
        %s2178 = scalar_lea.vmem %s13, %s2177
      $region92: #{efficientnet_features_forward.1} parent=83 // pred_fallthru
        _
      // Predicated region
      $region93: #{efficientnet_features_forward.1} parent=83 // pred_check
        %p2179 = pneg %p359
      $region94: #{efficientnet_features_forward.1} parent=83 // pred_check_branch
        %2181 = sbr.rel (%p2179) target = $region96
      $region95: #{efficientnet_features_forward.1} parent=83 // pred_region
        %p2182 = scmp.lt.s32.totalorder %s27, 1
        %s2183 = scalar_select %p2182, %s27, 1
        %s2184 = smul.addr %s2183, 3
        %s2185 = scalar_lea.vmem %s14, %s2184
      $region96: #{efficientnet_features_forward.1} parent=83 // pred_fallthru
        _
    $region84: #{efficientnet_features_forward.1} parent=5 // pred_fallthru
      _
  $region6: #{efficientnet_features_forward.1} parent=0 // loop_footer
    %s25 = sadd.s32 1, %s21
  $region7: #{efficientnet_features_forward.1} parent=0 // loop_footer_branch
    %20 = sbr.rel target = $region3
  $region8: #{efficientnet_features_forward.1} parent=0 // loop_exit
    _

</llo_original>
